<compile_context>
chip_gen: v7x
topology: tpu7x:2x2x1
jax: 0.10.0
libtpu: 0.0.40
codegen_flags: <defaults>
</compile_context>

<pallas_src>
import functools

import jax
import jax.numpy as jnp
from jax.experimental import pallas as pl
from jax.experimental.pallas import tpu as pltpu


def _lstm_kernel(x_ref, wx_ref, wh_ref, b_ref, wfc_ref, bfc_ref,
                 out_ref, gx_ref, h_ref, c_ref, *, steps_per_chunk, unroll):
    """One time-chunk of the LSTM recurrence (+ fused head on the last chunk).

    x_ref   : (Tb*B, D)  this chunk's time-major input rows (row = t*B + b)
    wx_ref  : (D, 4H)    input->gates weights (pre-transposed)
    wh_ref  : (H, 4H)    hidden->gates weights (pre-transposed)
    b_ref   : (1, 4H)    b_ih + b_hh (float32)
    wfc_ref : (H, CP)    fc weights, zero-padded to lane-dense CP (>=128)
    bfc_ref : (1, CP)    fc bias, zero-padded (float32)
    out_ref : (B, CP)    padded logits (written on the last chunk only)
    gx_ref  : (Tb*B, 4H) VMEM scratch: this chunk's input projection (f32)
    h_ref   : (B, H)     VMEM scratch: hidden state (persists across chunks)
    c_ref   : (B, H)     VMEM scratch: cell state   (persists across chunks)
    """
    B, H = h_ref.shape
    cdt = wh_ref.dtype  # MXU operand dtype (bf16 by default, f32 optional)
    chunk = pl.program_id(0)
    last_chunk = pl.num_programs(0) - 1

    # ---- Phase 1: input projection for this chunk as one big MXU matmul ----
    gx_ref[...] = (
        jnp.dot(x_ref[...], wx_ref[...], preferred_element_type=jnp.float32)
        + b_ref[...]
    )

    # ---- Phase 2: serial recurrence, h/c carried in registers ----
    @pl.when(chunk == 0)
    def _():
        h_ref[...] = jnp.zeros_like(h_ref)   # h_0 = 0 (matches torch.zeros)
        c_ref[...] = jnp.zeros_like(c_ref)   # c_0 = 0

    def step(t, carry):
        h, c = carry                          # (B, H) f32 values in vregs
        row = pl.multiple_of(t * B, B)
        gates = gx_ref[pl.ds(row, B), :] + jnp.dot(
            h.astype(cdt), wh_ref[...],
            preferred_element_type=jnp.float32)           # (B, 4H) f32
        # PyTorch gate order: i, f, g, o   (H multiple of 128 -> lane aligned)
        i_g = jax.nn.sigmoid(gates[:, 0 * H:1 * H])
        f_g = jax.nn.sigmoid(gates[:, 1 * H:2 * H])
        g_g = jnp.tanh(gates[:, 2 * H:3 * H])
        o_g = jax.nn.sigmoid(gates[:, 3 * H:4 * H])
        c_new = f_g * c + i_g * g_g
        h_new = o_g * jnp.tanh(c_new)
        return h_new, c_new

    h_fin, c_fin = jax.lax.fori_loop(
        0, steps_per_chunk, step, (h_ref[...], c_ref[...]), unroll=unroll)

    # Persist state for the next chunk (single store per chunk, off the
    # per-step critical path).
    h_ref[...] = h_fin
    c_ref[...] = c_fin

    # ---- Phase 3: fused classifier head on the final hidden state ----
    @pl.when(chunk == last_chunk)
    def _():
        out_ref[...] = (
            jnp.dot(h_fin.astype(cdt), wfc_ref[...],
                    preferred_element_type=jnp.float32)
            + bfc_ref[...]
        ).astype(out_ref.dtype)


def _pick_time_chunk(seq_len, max_chunk=64):
    """Largest divisor of seq_len that is <= max_chunk (keeps gx scratch and
    the unrolled loop bounded; max_chunk=64 stays well inside v5e's 16 MiB
    scoped-VMEM default at these feature sizes)."""
    tb = 1
    for d in range(1, min(seq_len, max_chunk) + 1):
        if seq_len % d == 0:
            tb = d
    return tb


@functools.partial(jax.jit, static_argnames=("use_bf16_weights",))
def lstm_classifier_forward(x, w_ih, w_hh, b_ih, b_hh, w_fc, b_fc,
                            *, use_bf16_weights=True):
    """Forward pass of LSTMClassifier.

    x    : (B, T, D) float32, batch-first (same as the PyTorch module)
    w_ih : (4H, D), w_hh : (4H, H), b_ih/b_hh : (4H,)   -- PyTorch LSTM shapes
    w_fc : (C, H),  b_fc : (C,)                          -- PyTorch Linear shapes
    returns logits (B, C) float32

    use_bf16_weights=True (default) casts x / w_ih / w_hh / w_fc to bf16 for
    the MXU on every TPU generation (accumulation stays f32); set False for a
    bit-accurate f32 reference path.
    """
    B, T, D = x.shape
    H = w_hh.shape[1]
    C = w_fc.shape[0]
    CP = ((C + 127) // 128) * 128  # lane-dense padded head width (>= 128)

    # Alignment the kernel's per-step slicing relies on.
    assert B % 8 == 0, f"batch {B} must be a multiple of 8 (f32 sublane)"
    assert H % 128 == 0, f"hidden_dim {H} must be a multiple of 128 (lane)"

    Tb = _pick_time_chunk(T)
    num_chunks = T // Tb
    # Small chunks: fully unroll (LLO visibility); larger: partial unroll to
    # bound code size / vreg live ranges.
    unroll = True if Tb <= 16 else 4

    # Layout glue in plain JAX: time-major + flatten, weight transposes, pads.
    x_tm = jnp.transpose(x, (1, 0, 2)).reshape(T * B, D)       # (T*B, D)
    wx = jnp.transpose(w_ih)                                   # (D, 4H)
    wh = jnp.transpose(w_hh)                                   # (H, 4H)
    b = (b_ih + b_hh).reshape(1, 4 * H).astype(jnp.float32)    # (1, 4H)
    wfc = jnp.zeros((H, CP), jnp.float32).at[:, :C].set(jnp.transpose(w_fc))
    bfc = jnp.zeros((1, CP), jnp.float32).at[:, :C].set(b_fc)

    if use_bf16_weights:
        # Native MXU operand dtype on all generations; accumulation stays f32.
        x_tm = x_tm.astype(jnp.bfloat16)
        wx = wx.astype(jnp.bfloat16)
        wh = wh.astype(jnp.bfloat16)
        wfc = wfc.astype(jnp.bfloat16)

    kernel = functools.partial(_lstm_kernel, steps_per_chunk=Tb, unroll=unroll)

    out_padded = pl.pallas_call(
        kernel,
        out_shape=jax.ShapeDtypeStruct((B, CP), jnp.float32),
        grid=(num_chunks,),
        in_specs=[
            pl.BlockSpec((Tb * B, D), lambda i: (i, 0)),   # x (streamed chunk)
            pl.BlockSpec((D, 4 * H), lambda i: (0, 0)),    # wx
            pl.BlockSpec((H, 4 * H), lambda i: (0, 0)),    # wh
            pl.BlockSpec((1, 4 * H), lambda i: (0, 0)),    # bias
            pl.BlockSpec((H, CP), lambda i: (0, 0)),       # fc weight (padded)
            pl.BlockSpec((1, CP), lambda i: (0, 0)),       # fc bias (padded)
        ],
        out_specs=pl.BlockSpec((B, CP), lambda i: (0, 0)),
        scratch_shapes=[
            pltpu.VMEM((Tb * B, 4 * H), jnp.float32),      # gates_x (per chunk)
            pltpu.VMEM((B, H), jnp.float32),               # h state (persistent)
            pltpu.VMEM((B, H), jnp.float32),               # c state (persistent)
        ],
        compiler_params=pltpu.CompilerParams(
            # Recurrence is serial across time chunks.
            dimension_semantics=("arbitrary",),
        ),
    )(x_tm, wx, wh, b, wfc, bfc)

    # TODO(synk): for large B on v7x, add a leading "parallel" batch grid axis
    #             so both TensorCores are used (recurrence is batch-independent).
    return out_padded[:, :C]


def _reference_forward(x, w_ih, w_hh, b_ih, b_hh, w_fc, b_fc):
    """Pure-JAX reference matching torch.nn.LSTM(batch_first=True) + Linear."""
    B, T, D = x.shape
    H = w_hh.shape[1]
    h = jnp.zeros((B, H), jnp.float32)
    c = jnp.zeros((B, H), jnp.float32)
    for t in range(T):
        gates = x[:, t, :] @ w_ih.T + b_ih + h @ w_hh.T + b_hh
        i = jax.nn.sigmoid(gates[:, 0 * H:1 * H])
        f = jax.nn.sigmoid(gates[:, 1 * H:2 * H])
        g = jnp.tanh(gates[:, 2 * H:3 * H])
        o = jax.nn.sigmoid(gates[:, 3 * H:4 * H])
        c = f * c + i * g
        h = o * jnp.tanh(c)
    return h @ w_fc.T + b_fc


if __name__ == "__main__":
    # Small shapes consistent with the module: (B, T, D) input, H=hidden_dim=256.
    B, T, D = 8, 8, 32
    H, C = 256, 10

    key = jax.random.PRNGKey(0)
    ks = jax.random.split(key, 7)
    scale = 1.0 / jnp.sqrt(H)   # PyTorch default LSTM/Linear init range

    x = jax.random.normal(ks[0], (B, T, D), jnp.float32)
    w_ih = jax.random.uniform(ks[1], (4 * H, D), jnp.float32, -scale, scale)
    w_hh = jax.random.uniform(ks[2], (4 * H, H), jnp.float32, -scale, scale)
    b_ih = jax.random.uniform(ks[3], (4 * H,), jnp.float32, -scale, scale)
    b_hh = jax.random.uniform(ks[4], (4 * H,), jnp.float32, -scale, scale)
    w_fc = jax.random.uniform(ks[5], (C, H), jnp.float32, -scale, scale)
    b_fc = jax.random.uniform(ks[6], (C,), jnp.float32, -scale, scale)

    ref = _reference_forward(x, w_ih, w_hh, b_ih, b_hh, w_fc, b_fc)

    # f32 path (exact-precision check).
    out_f32 = lstm_classifier_forward(x, w_ih, w_hh, b_ih, b_hh, w_fc, b_fc,
                                      use_bf16_weights=False)
    out_f32 = jax.block_until_ready(out_f32)
    assert out_f32.shape == (B, C), out_f32.shape
    assert jnp.allclose(out_f32, ref, atol=2e-3, rtol=2e-3), (
        f"f32 max err {jnp.max(jnp.abs(out_f32 - ref))}")

    # Default bf16-weight fast path (MXU-push win on all generations).
    out = lstm_classifier_forward(x, w_ih, w_hh, b_ih, b_hh, w_fc, b_fc)
    out = jax.block_until_ready(out)
    assert out.shape == (B, C), out.shape
    assert jnp.max(jnp.abs(out - ref)) < 0.1, (
        f"bf16 max err {jnp.max(jnp.abs(out - ref))}")

    print("KERNEL_OK")
</pallas_src>

<mosaic_0001>
module attributes {stable_mosaic.version = 11 : i64} {
  func.func @_lstm_kernel(%arg0: i32, %arg1: memref<64x32xf32, #tpu.memory_space<vmem>>, %arg2: memref<32x1024xf32, #tpu.memory_space<vmem>>, %arg3: memref<256x1024xf32, #tpu.memory_space<vmem>>, %arg4: memref<1x1024xf32, #tpu.memory_space<vmem>>, %arg5: memref<256x128xf32, #tpu.memory_space<vmem>>, %arg6: memref<1x128xf32, #tpu.memory_space<vmem>>, %arg7: memref<8x128xf32, #tpu.memory_space<vmem>>, %arg8: memref<64x1024xf32, #tpu.memory_space<vmem>>, %arg9: memref<8x256xf32, #tpu.memory_space<vmem>>, %arg10: memref<8x256xf32, #tpu.memory_space<vmem>>) attributes {dimension_semantics = [#tpu.dimension_semantics<arbitrary>], iteration_bounds = array<i64: 1>, scalar_prefetch = 0 : i64, scratch_operands = 3 : i64, tpu.core_type = #tpu.core_type<tc>, window_params = [{transform_indices = @transform_0, window_bounds = array<i64: 64, 32>}, {pipeline_mode = #tpu.pipeline_mode<synchronous>, transform_indices = @transform_1, window_bounds = array<i64: 32, 1024>}, {pipeline_mode = #tpu.pipeline_mode<synchronous>, transform_indices = @transform_2, window_bounds = array<i64: 256, 1024>}, {pipeline_mode = #tpu.pipeline_mode<synchronous>, transform_indices = @transform_3, window_bounds = array<i64: 1, 1024>}, {pipeline_mode = #tpu.pipeline_mode<synchronous>, transform_indices = @transform_4, window_bounds = array<i64: 256, 128>}, {pipeline_mode = #tpu.pipeline_mode<synchronous>, transform_indices = @transform_5, window_bounds = array<i64: 1, 128>}, {pipeline_mode = #tpu.pipeline_mode<synchronous>, transform_indices = @transform_6, window_bounds = array<i64: 8, 128>}]} {
    %c0 = arith.constant 0 : index
    %c0_0 = arith.constant 0 : index
    %0 = vector.load %arg1[%c0, %c0_0] : memref<64x32xf32, #tpu.memory_space<vmem>>, vector<64x32xf32>
    %c0_1 = arith.constant 0 : index
    %c0_2 = arith.constant 0 : index
    %1 = vector.load %arg2[%c0_1, %c0_2] : memref<32x1024xf32, #tpu.memory_space<vmem>>, vector<32x1024xf32>
    %cst = arith.constant dense<0.000000e+00> : vector<64x1024xf32>
    %2 = tpu.matmul %0, %1, %cst {dimension_numbers = #tpu.dot_dimension_numbers<[1], [0], [0], [1], [0, 0, 1, 1], [], []>} : vector<64x32xf32>, vector<32x1024xf32>, vector<64x1024xf32> -> vector<64x1024xf32>
    %c0_3 = arith.constant 0 : index
    %c0_4 = arith.constant 0 : index
    %3 = vector.load %arg4[%c0_3, %c0_4] : memref<1x1024xf32, #tpu.memory_space<vmem>>, vector<1x1024xf32>
    %4 = vector.broadcast %3 : vector<1x1024xf32> to vector<64x1024xf32>
    %5 = arith.addf %2, %4 : vector<64x1024xf32>
    %c0_5 = arith.constant 0 : index
    %c0_6 = arith.constant 0 : index
    %6 = vector.load %arg8[%c0_5, %c0_6] : memref<64x1024xf32, #tpu.memory_space<vmem>>, vector<64x1024xf32>
    tpu.vector_store %arg8[%c0_5, %c0_6], %5 {strides = array<i32>} : memref<64x1024xf32, #tpu.memory_space<vmem>>, vector<64x1024xf32>,
    %c0_i32 = arith.constant 0 : i32
    %7 = arith.cmpi eq, %arg0, %c0_i32 : i32
    %8 = arith.extui %7 : i1 to i32
    %c0_i32_7 = arith.constant 0 : i32
    %9 = arith.cmpi ne, %8, %c0_i32_7 : i32
    scf.if %9 {
      %cst_83 = arith.constant 0.000000e+00 : f32
      %273 = vector.broadcast %cst_83 : f32 to vector<8x256xf32>
      %c0_84 = arith.constant 0 : index
      %c0_85 = arith.constant 0 : index
      %274 = vector.load %arg9[%c0_84, %c0_85] : memref<8x256xf32, #tpu.memory_space<vmem>>, vector<8x256xf32>
      tpu.vector_store %arg9[%c0_84, %c0_85], %273 {strides = array<i32>} : memref<8x256xf32, #tpu.memory_space<vmem>>, vector<8x256xf32>,
      %cst_86 = arith.constant 0.000000e+00 : f32
      %275 = vector.broadcast %cst_86 : f32 to vector<8x256xf32>
      %c0_87 = arith.constant 0 : index
      %c0_88 = arith.constant 0 : index
      %276 = vector.load %arg10[%c0_87, %c0_88] : memref<8x256xf32, #tpu.memory_space<vmem>>, vector<8x256xf32>
      tpu.vector_store %arg10[%c0_87, %c0_88], %275 {strides = array<i32>} : memref<8x256xf32, #tpu.memory_space<vmem>>, vector<8x256xf32>,
    } else {
    }
    %c0_8 = arith.constant 0 : index
    %c0_9 = arith.constant 0 : index
    %10 = vector.load %arg9[%c0_8, %c0_9] : memref<8x256xf32, #tpu.memory_space<vmem>>, vector<8x256xf32>
    %c0_10 = arith.constant 0 : index
    %c0_11 = arith.constant 0 : index
    %11 = vector.load %arg10[%c0_10, %c0_11] : memref<8x256xf32, #tpu.memory_space<vmem>>, vector<8x256xf32>
    %c0_i32_12 = arith.constant 0 : i32
    %c8_i32 = arith.constant 8 : i32
    %12 = arith.muli %c0_i32_12, %c8_i32 : i32
    %13 = tpu.assume_multiple %12, 8 : i32
    %14 = arith.index_cast %13 : i32 to index
    %c0_13 = arith.constant 0 : index
    %15 = vector.load %arg8[%14, %c0_13] : memref<64x1024xf32, #tpu.memory_space<vmem>>, vector<8x1024xf32>
    %c0_14 = arith.constant 0 : index
    %c0_15 = arith.constant 0 : index
    %16 = vector.load %arg3[%c0_14, %c0_15] : memref<256x1024xf32, #tpu.memory_space<vmem>>, vector<256x1024xf32>
    %cst_16 = arith.constant dense<0.000000e+00> : vector<8x1024xf32>
    %17 = tpu.matmul %10, %16, %cst_16 {dimension_numbers = #tpu.dot_dimension_numbers<[1], [0], [0], [1], [0, 0, 1, 1], [], []>} : vector<8x256xf32>, vector<256x1024xf32>, vector<8x1024xf32> -> vector<8x1024xf32>
    %18 = arith.addf %15, %17 : vector<8x1024xf32>
    %19 = vector.extract_strided_slice %18 {offsets = [0, 0], sizes = [8, 256], strides = [1, 1]} : vector<8x1024xf32> to vector<8x256xf32>
    %20 = arith.negf %19 : vector<8x256xf32>
    %21 = math.exp %20 : vector<8x256xf32>
    %cst_17 = arith.constant 1.000000e+00 : f32
    %22 = vector.broadcast %cst_17 : f32 to vector<8x256xf32>
    %23 = arith.addf %22, %21 : vector<8x256xf32>
    %24 = arith.divf %22, %23 : vector<8x256xf32>
    %25 = vector.extract_strided_slice %18 {offsets = [0, 256], sizes = [8, 256], strides = [1, 1]} : vector<8x1024xf32> to vector<8x256xf32>
    %26 = arith.negf %25 : vector<8x256xf32>
    %27 = math.exp %26 : vector<8x256xf32>
    %cst_18 = arith.constant 1.000000e+00 : f32
    %28 = vector.broadcast %cst_18 : f32 to vector<8x256xf32>
    %29 = arith.addf %28, %27 : vector<8x256xf32>
    %30 = arith.divf %28, %29 : vector<8x256xf32>
    %31 = vector.extract_strided_slice %18 {offsets = [0, 512], sizes = [8, 256], strides = [1, 1]} : vector<8x1024xf32> to vector<8x256xf32>
    %32 = math.tanh %31 : vector<8x256xf32>
    %33 = vector.extract_strided_slice %18 {offsets = [0, 768], sizes = [8, 256], strides = [1, 1]} : vector<8x1024xf32> to vector<8x256xf32>
    %34 = arith.negf %33 : vector<8x256xf32>
    %35 = math.exp %34 : vector<8x256xf32>
    %cst_19 = arith.constant 1.000000e+00 : f32
    %36 = vector.broadcast %cst_19 : f32 to vector<8x256xf32>
    %37 = arith.addf %36, %35 : vector<8x256xf32>
    %38 = arith.divf %36, %37 : vector<8x256xf32>
    %39 = arith.mulf %30, %11 : vector<8x256xf32>
    %40 = arith.mulf %24, %32 : vector<8x256xf32>
    %41 = arith.addf %39, %40 : vector<8x256xf32>
    %42 = math.tanh %41 : vector<8x256xf32>
    %43 = arith.mulf %38, %42 : vector<8x256xf32>
    %c1_i32 = arith.constant 1 : i32
    %c8_i32_20 = arith.constant 8 : i32
    %44 = arith.muli %c1_i32, %c8_i32_20 : i32
    %45 = tpu.assume_multiple %44, 8 : i32
    %46 = arith.index_cast %45 : i32 to index
    %c0_21 = arith.constant 0 : index
    %47 = vector.load %arg8[%46, %c0_21] : memref<64x1024xf32, #tpu.memory_space<vmem>>, vector<8x1024xf32>
    %c0_22 = arith.constant 0 : index
    %c0_23 = arith.constant 0 : index
    %48 = vector.load %arg3[%c0_22, %c0_23] : memref<256x1024xf32, #tpu.memory_space<vmem>>, vector<256x1024xf32>
    %cst_24 = arith.constant dense<0.000000e+00> : vector<8x1024xf32>
    %49 = tpu.matmul %43, %48, %cst_24 {dimension_numbers = #tpu.dot_dimension_numbers<[1], [0], [0], [1], [0, 0, 1, 1], [], []>} : vector<8x256xf32>, vector<256x1024xf32>, vector<8x1024xf32> -> vector<8x1024xf32>
    %50 = arith.addf %47, %49 : vector<8x1024xf32>
    %51 = vector.extract_strided_slice %50 {offsets = [0, 0], sizes = [8, 256], strides = [1, 1]} : vector<8x1024xf32> to vector<8x256xf32>
    %52 = arith.negf %51 : vector<8x256xf32>
    %53 = math.exp %52 : vector<8x256xf32>
    %cst_25 = arith.constant 1.000000e+00 : f32
    %54 = vector.broadcast %cst_25 : f32 to vector<8x256xf32>
    %55 = arith.addf %54, %53 : vector<8x256xf32>
    %56 = arith.divf %54, %55 : vector<8x256xf32>
    %57 = vector.extract_strided_slice %50 {offsets = [0, 256], sizes = [8, 256], strides = [1, 1]} : vector<8x1024xf32> to vector<8x256xf32>
    %58 = arith.negf %57 : vector<8x256xf32>
    %59 = math.exp %58 : vector<8x256xf32>
    %cst_26 = arith.constant 1.000000e+00 : f32
    %60 = vector.broadcast %cst_26 : f32 to vector<8x256xf32>
    %61 = arith.addf %60, %59 : vector<8x256xf32>
    %62 = arith.divf %60, %61 : vector<8x256xf32>
    %63 = vector.extract_strided_slice %50 {offsets = [0, 512], sizes = [8, 256], strides = [1, 1]} : vector<8x1024xf32> to vector<8x256xf32>
    %64 = math.tanh %63 : vector<8x256xf32>
    %65 = vector.extract_strided_slice %50 {offsets = [0, 768], sizes = [8, 256], strides = [1, 1]} : vector<8x1024xf32> to vector<8x256xf32>
    %66 = arith.negf %65 : vector<8x256xf32>
    %67 = math.exp %66 : vector<8x256xf32>
    %cst_27 = arith.constant 1.000000e+00 : f32
    %68 = vector.broadcast %cst_27 : f32 to vector<8x256xf32>
    %69 = arith.addf %68, %67 : vector<8x256xf32>
    %70 = arith.divf %68, %69 : vector<8x256xf32>
    %71 = arith.mulf %62, %41 : vector<8x256xf32>
    %72 = arith.mulf %56, %64 : vector<8x256xf32>
    %73 = arith.addf %71, %72 : vector<8x256xf32>
    %74 = math.tanh %73 : vector<8x256xf32>
    %75 = arith.mulf %70, %74 : vector<8x256xf32>
    %c2_i32 = arith.constant 2 : i32
    %c8_i32_28 = arith.constant 8 : i32
    %76 = arith.muli %c2_i32, %c8_i32_28 : i32
    %77 = tpu.assume_multiple %76, 8 : i32
    %78 = arith.index_cast %77 : i32 to index
    %c0_29 = arith.constant 0 : index
    %79 = vector.load %arg8[%78, %c0_29] : memref<64x1024xf32, #tpu.memory_space<vmem>>, vector<8x1024xf32>
    %c0_30 = arith.constant 0 : index
    %c0_31 = arith.constant 0 : index
    %80 = vector.load %arg3[%c0_30, %c0_31] : memref<256x1024xf32, #tpu.memory_space<vmem>>, vector<256x1024xf32>
    %cst_32 = arith.constant dense<0.000000e+00> : vector<8x1024xf32>
    %81 = tpu.matmul %75, %80, %cst_32 {dimension_numbers = #tpu.dot_dimension_numbers<[1], [0], [0], [1], [0, 0, 1, 1], [], []>} : vector<8x256xf32>, vector<256x1024xf32>, vector<8x1024xf32> -> vector<8x1024xf32>
    %82 = arith.addf %79, %81 : vector<8x1024xf32>
    %83 = vector.extract_strided_slice %82 {offsets = [0, 0], sizes = [8, 256], strides = [1, 1]} : vector<8x1024xf32> to vector<8x256xf32>
    %84 = arith.negf %83 : vector<8x256xf32>
    %85 = math.exp %84 : vector<8x256xf32>
    %cst_33 = arith.constant 1.000000e+00 : f32
    %86 = vector.broadcast %cst_33 : f32 to vector<8x256xf32>
    %87 = arith.addf %86, %85 : vector<8x256xf32>
    %88 = arith.divf %86, %87 : vector<8x256xf32>
    %89 = vector.extract_strided_slice %82 {offsets = [0, 256], sizes = [8, 256], strides = [1, 1]} : vector<8x1024xf32> to vector<8x256xf32>
    %90 = arith.negf %89 : vector<8x256xf32>
    %91 = math.exp %90 : vector<8x256xf32>
    %cst_34 = arith.constant 1.000000e+00 : f32
    %92 = vector.broadcast %cst_34 : f32 to vector<8x256xf32>
    %93 = arith.addf %92, %91 : vector<8x256xf32>
    %94 = arith.divf %92, %93 : vector<8x256xf32>
    %95 = vector.extract_strided_slice %82 {offsets = [0, 512], sizes = [8, 256], strides = [1, 1]} : vector<8x1024xf32> to vector<8x256xf32>
    %96 = math.tanh %95 : vector<8x256xf32>
    %97 = vector.extract_strided_slice %82 {offsets = [0, 768], sizes = [8, 256], strides = [1, 1]} : vector<8x1024xf32> to vector<8x256xf32>
    %98 = arith.negf %97 : vector<8x256xf32>
    %99 = math.exp %98 : vector<8x256xf32>
    %cst_35 = arith.constant 1.000000e+00 : f32
    %100 = vector.broadcast %cst_35 : f32 to vector<8x256xf32>
    %101 = arith.addf %100, %99 : vector<8x256xf32>
    %102 = arith.divf %100, %101 : vector<8x256xf32>
    %103 = arith.mulf %94, %73 : vector<8x256xf32>
    %104 = arith.mulf %88, %96 : vector<8x256xf32>
    %105 = arith.addf %103, %104 : vector<8x256xf32>
    %106 = math.tanh %105 : vector<8x256xf32>
    %107 = arith.mulf %102, %106 : vector<8x256xf32>
    %c3_i32 = arith.constant 3 : i32
    %c8_i32_36 = arith.constant 8 : i32
    %108 = arith.muli %c3_i32, %c8_i32_36 : i32
    %109 = tpu.assume_multiple %108, 8 : i32
    %110 = arith.index_cast %109 : i32 to index
    %c0_37 = arith.constant 0 : index
    %111 = vector.load %arg8[%110, %c0_37] : memref<64x1024xf32, #tpu.memory_space<vmem>>, vector<8x1024xf32>
    %c0_38 = arith.constant 0 : index
    %c0_39 = arith.constant 0 : index
    %112 = vector.load %arg3[%c0_38, %c0_39] : memref<256x1024xf32, #tpu.memory_space<vmem>>, vector<256x1024xf32>
    %cst_40 = arith.constant dense<0.000000e+00> : vector<8x1024xf32>
    %113 = tpu.matmul %107, %112, %cst_40 {dimension_numbers = #tpu.dot_dimension_numbers<[1], [0], [0], [1], [0, 0, 1, 1], [], []>} : vector<8x256xf32>, vector<256x1024xf32>, vector<8x1024xf32> -> vector<8x1024xf32>
    %114 = arith.addf %111, %113 : vector<8x1024xf32>
    %115 = vector.extract_strided_slice %114 {offsets = [0, 0], sizes = [8, 256], strides = [1, 1]} : vector<8x1024xf32> to vector<8x256xf32>
    %116 = arith.negf %115 : vector<8x256xf32>
    %117 = math.exp %116 : vector<8x256xf32>
    %cst_41 = arith.constant 1.000000e+00 : f32
    %118 = vector.broadcast %cst_41 : f32 to vector<8x256xf32>
    %119 = arith.addf %118, %117 : vector<8x256xf32>
    %120 = arith.divf %118, %119 : vector<8x256xf32>
    %121 = vector.extract_strided_slice %114 {offsets = [0, 256], sizes = [8, 256], strides = [1, 1]} : vector<8x1024xf32> to vector<8x256xf32>
    %122 = arith.negf %121 : vector<8x256xf32>
    %123 = math.exp %122 : vector<8x256xf32>
    %cst_42 = arith.constant 1.000000e+00 : f32
    %124 = vector.broadcast %cst_42 : f32 to vector<8x256xf32>
    %125 = arith.addf %124, %123 : vector<8x256xf32>
    %126 = arith.divf %124, %125 : vector<8x256xf32>
    %127 = vector.extract_strided_slice %114 {offsets = [0, 512], sizes = [8, 256], strides = [1, 1]} : vector<8x1024xf32> to vector<8x256xf32>
    %128 = math.tanh %127 : vector<8x256xf32>
    %129 = vector.extract_strided_slice %114 {offsets = [0, 768], sizes = [8, 256], strides = [1, 1]} : vector<8x1024xf32> to vector<8x256xf32>
    %130 = arith.negf %129 : vector<8x256xf32>
    %131 = math.exp %130 : vector<8x256xf32>
    %cst_43 = arith.constant 1.000000e+00 : f32
    %132 = vector.broadcast %cst_43 : f32 to vector<8x256xf32>
    %133 = arith.addf %132, %131 : vector<8x256xf32>
    %134 = arith.divf %132, %133 : vector<8x256xf32>
    %135 = arith.mulf %126, %105 : vector<8x256xf32>
    %136 = arith.mulf %120, %128 : vector<8x256xf32>
    %137 = arith.addf %135, %136 : vector<8x256xf32>
    %138 = math.tanh %137 : vector<8x256xf32>
    %139 = arith.mulf %134, %138 : vector<8x256xf32>
    %c4_i32 = arith.constant 4 : i32
    %c8_i32_44 = arith.constant 8 : i32
    %140 = arith.muli %c4_i32, %c8_i32_44 : i32
    %141 = tpu.assume_multiple %140, 8 : i32
    %142 = arith.index_cast %141 : i32 to index
    %c0_45 = arith.constant 0 : index
    %143 = vector.load %arg8[%142, %c0_45] : memref<64x1024xf32, #tpu.memory_space<vmem>>, vector<8x1024xf32>
    %c0_46 = arith.constant 0 : index
    %c0_47 = arith.constant 0 : index
    %144 = vector.load %arg3[%c0_46, %c0_47] : memref<256x1024xf32, #tpu.memory_space<vmem>>, vector<256x1024xf32>
    %cst_48 = arith.constant dense<0.000000e+00> : vector<8x1024xf32>
    %145 = tpu.matmul %139, %144, %cst_48 {dimension_numbers = #tpu.dot_dimension_numbers<[1], [0], [0], [1], [0, 0, 1, 1], [], []>} : vector<8x256xf32>, vector<256x1024xf32>, vector<8x1024xf32> -> vector<8x1024xf32>
    %146 = arith.addf %143, %145 : vector<8x1024xf32>
    %147 = vector.extract_strided_slice %146 {offsets = [0, 0], sizes = [8, 256], strides = [1, 1]} : vector<8x1024xf32> to vector<8x256xf32>
    %148 = arith.negf %147 : vector<8x256xf32>
    %149 = math.exp %148 : vector<8x256xf32>
    %cst_49 = arith.constant 1.000000e+00 : f32
    %150 = vector.broadcast %cst_49 : f32 to vector<8x256xf32>
    %151 = arith.addf %150, %149 : vector<8x256xf32>
    %152 = arith.divf %150, %151 : vector<8x256xf32>
    %153 = vector.extract_strided_slice %146 {offsets = [0, 256], sizes = [8, 256], strides = [1, 1]} : vector<8x1024xf32> to vector<8x256xf32>
    %154 = arith.negf %153 : vector<8x256xf32>
    %155 = math.exp %154 : vector<8x256xf32>
    %cst_50 = arith.constant 1.000000e+00 : f32
    %156 = vector.broadcast %cst_50 : f32 to vector<8x256xf32>
    %157 = arith.addf %156, %155 : vector<8x256xf32>
    %158 = arith.divf %156, %157 : vector<8x256xf32>
    %159 = vector.extract_strided_slice %146 {offsets = [0, 512], sizes = [8, 256], strides = [1, 1]} : vector<8x1024xf32> to vector<8x256xf32>
    %160 = math.tanh %159 : vector<8x256xf32>
    %161 = vector.extract_strided_slice %146 {offsets = [0, 768], sizes = [8, 256], strides = [1, 1]} : vector<8x1024xf32> to vector<8x256xf32>
    %162 = arith.negf %161 : vector<8x256xf32>
    %163 = math.exp %162 : vector<8x256xf32>
    %cst_51 = arith.constant 1.000000e+00 : f32
    %164 = vector.broadcast %cst_51 : f32 to vector<8x256xf32>
    %165 = arith.addf %164, %163 : vector<8x256xf32>
    %166 = arith.divf %164, %165 : vector<8x256xf32>
    %167 = arith.mulf %158, %137 : vector<8x256xf32>
    %168 = arith.mulf %152, %160 : vector<8x256xf32>
    %169 = arith.addf %167, %168 : vector<8x256xf32>
    %170 = math.tanh %169 : vector<8x256xf32>
    %171 = arith.mulf %166, %170 : vector<8x256xf32>
    %c5_i32 = arith.constant 5 : i32
    %c8_i32_52 = arith.constant 8 : i32
    %172 = arith.muli %c5_i32, %c8_i32_52 : i32
    %173 = tpu.assume_multiple %172, 8 : i32
    %174 = arith.index_cast %173 : i32 to index
    %c0_53 = arith.constant 0 : index
    %175 = vector.load %arg8[%174, %c0_53] : memref<64x1024xf32, #tpu.memory_space<vmem>>, vector<8x1024xf32>
    %c0_54 = arith.constant 0 : index
    %c0_55 = arith.constant 0 : index
    %176 = vector.load %arg3[%c0_54, %c0_55] : memref<256x1024xf32, #tpu.memory_space<vmem>>, vector<256x1024xf32>
    %cst_56 = arith.constant dense<0.000000e+00> : vector<8x1024xf32>
    %177 = tpu.matmul %171, %176, %cst_56 {dimension_numbers = #tpu.dot_dimension_numbers<[1], [0], [0], [1], [0, 0, 1, 1], [], []>} : vector<8x256xf32>, vector<256x1024xf32>, vector<8x1024xf32> -> vector<8x1024xf32>
    %178 = arith.addf %175, %177 : vector<8x1024xf32>
    %179 = vector.extract_strided_slice %178 {offsets = [0, 0], sizes = [8, 256], strides = [1, 1]} : vector<8x1024xf32> to vector<8x256xf32>
    %180 = arith.negf %179 : vector<8x256xf32>
    %181 = math.exp %180 : vector<8x256xf32>
    %cst_57 = arith.constant 1.000000e+00 : f32
    %182 = vector.broadcast %cst_57 : f32 to vector<8x256xf32>
    %183 = arith.addf %182, %181 : vector<8x256xf32>
    %184 = arith.divf %182, %183 : vector<8x256xf32>
    %185 = vector.extract_strided_slice %178 {offsets = [0, 256], sizes = [8, 256], strides = [1, 1]} : vector<8x1024xf32> to vector<8x256xf32>
    %186 = arith.negf %185 : vector<8x256xf32>
    %187 = math.exp %186 : vector<8x256xf32>
    %cst_58 = arith.constant 1.000000e+00 : f32
    %188 = vector.broadcast %cst_58 : f32 to vector<8x256xf32>
    %189 = arith.addf %188, %187 : vector<8x256xf32>
    %190 = arith.divf %188, %189 : vector<8x256xf32>
    %191 = vector.extract_strided_slice %178 {offsets = [0, 512], sizes = [8, 256], strides = [1, 1]} : vector<8x1024xf32> to vector<8x256xf32>
    %192 = math.tanh %191 : vector<8x256xf32>
    %193 = vector.extract_strided_slice %178 {offsets = [0, 768], sizes = [8, 256], strides = [1, 1]} : vector<8x1024xf32> to vector<8x256xf32>
    %194 = arith.negf %193 : vector<8x256xf32>
    %195 = math.exp %194 : vector<8x256xf32>
    %cst_59 = arith.constant 1.000000e+00 : f32
    %196 = vector.broadcast %cst_59 : f32 to vector<8x256xf32>
    %197 = arith.addf %196, %195 : vector<8x256xf32>
    %198 = arith.divf %196, %197 : vector<8x256xf32>
    %199 = arith.mulf %190, %169 : vector<8x256xf32>
    %200 = arith.mulf %184, %192 : vector<8x256xf32>
    %201 = arith.addf %199, %200 : vector<8x256xf32>
    %202 = math.tanh %201 : vector<8x256xf32>
    %203 = arith.mulf %198, %202 : vector<8x256xf32>
    %c6_i32 = arith.constant 6 : i32
    %c8_i32_60 = arith.constant 8 : i32
    %204 = arith.muli %c6_i32, %c8_i32_60 : i32
    %205 = tpu.assume_multiple %204, 8 : i32
    %206 = arith.index_cast %205 : i32 to index
    %c0_61 = arith.constant 0 : index
    %207 = vector.load %arg8[%206, %c0_61] : memref<64x1024xf32, #tpu.memory_space<vmem>>, vector<8x1024xf32>
    %c0_62 = arith.constant 0 : index
    %c0_63 = arith.constant 0 : index
    %208 = vector.load %arg3[%c0_62, %c0_63] : memref<256x1024xf32, #tpu.memory_space<vmem>>, vector<256x1024xf32>
    %cst_64 = arith.constant dense<0.000000e+00> : vector<8x1024xf32>
    %209 = tpu.matmul %203, %208, %cst_64 {dimension_numbers = #tpu.dot_dimension_numbers<[1], [0], [0], [1], [0, 0, 1, 1], [], []>} : vector<8x256xf32>, vector<256x1024xf32>, vector<8x1024xf32> -> vector<8x1024xf32>
    %210 = arith.addf %207, %209 : vector<8x1024xf32>
    %211 = vector.extract_strided_slice %210 {offsets = [0, 0], sizes = [8, 256], strides = [1, 1]} : vector<8x1024xf32> to vector<8x256xf32>
    %212 = arith.negf %211 : vector<8x256xf32>
    %213 = math.exp %212 : vector<8x256xf32>
    %cst_65 = arith.constant 1.000000e+00 : f32
    %214 = vector.broadcast %cst_65 : f32 to vector<8x256xf32>
    %215 = arith.addf %214, %213 : vector<8x256xf32>
    %216 = arith.divf %214, %215 : vector<8x256xf32>
    %217 = vector.extract_strided_slice %210 {offsets = [0, 256], sizes = [8, 256], strides = [1, 1]} : vector<8x1024xf32> to vector<8x256xf32>
    %218 = arith.negf %217 : vector<8x256xf32>
    %219 = math.exp %218 : vector<8x256xf32>
    %cst_66 = arith.constant 1.000000e+00 : f32
    %220 = vector.broadcast %cst_66 : f32 to vector<8x256xf32>
    %221 = arith.addf %220, %219 : vector<8x256xf32>
    %222 = arith.divf %220, %221 : vector<8x256xf32>
    %223 = vector.extract_strided_slice %210 {offsets = [0, 512], sizes = [8, 256], strides = [1, 1]} : vector<8x1024xf32> to vector<8x256xf32>
    %224 = math.tanh %223 : vector<8x256xf32>
    %225 = vector.extract_strided_slice %210 {offsets = [0, 768], sizes = [8, 256], strides = [1, 1]} : vector<8x1024xf32> to vector<8x256xf32>
    %226 = arith.negf %225 : vector<8x256xf32>
    %227 = math.exp %226 : vector<8x256xf32>
    %cst_67 = arith.constant 1.000000e+00 : f32
    %228 = vector.broadcast %cst_67 : f32 to vector<8x256xf32>
    %229 = arith.addf %228, %227 : vector<8x256xf32>
    %230 = arith.divf %228, %229 : vector<8x256xf32>
    %231 = arith.mulf %222, %201 : vector<8x256xf32>
    %232 = arith.mulf %216, %224 : vector<8x256xf32>
    %233 = arith.addf %231, %232 : vector<8x256xf32>
    %234 = math.tanh %233 : vector<8x256xf32>
    %235 = arith.mulf %230, %234 : vector<8x256xf32>
    %c7_i32 = arith.constant 7 : i32
    %c8_i32_68 = arith.constant 8 : i32
    %236 = arith.muli %c7_i32, %c8_i32_68 : i32
    %237 = tpu.assume_multiple %236, 8 : i32
    %238 = arith.index_cast %237 : i32 to index
    %c0_69 = arith.constant 0 : index
    %239 = vector.load %arg8[%238, %c0_69] : memref<64x1024xf32, #tpu.memory_space<vmem>>, vector<8x1024xf32>
    %c0_70 = arith.constant 0 : index
    %c0_71 = arith.constant 0 : index
    %240 = vector.load %arg3[%c0_70, %c0_71] : memref<256x1024xf32, #tpu.memory_space<vmem>>, vector<256x1024xf32>
    %cst_72 = arith.constant dense<0.000000e+00> : vector<8x1024xf32>
    %241 = tpu.matmul %235, %240, %cst_72 {dimension_numbers = #tpu.dot_dimension_numbers<[1], [0], [0], [1], [0, 0, 1, 1], [], []>} : vector<8x256xf32>, vector<256x1024xf32>, vector<8x1024xf32> -> vector<8x1024xf32>
    %242 = arith.addf %239, %241 : vector<8x1024xf32>
    %243 = vector.extract_strided_slice %242 {offsets = [0, 0], sizes = [8, 256], strides = [1, 1]} : vector<8x1024xf32> to vector<8x256xf32>
    %244 = arith.negf %243 : vector<8x256xf32>
    %245 = math.exp %244 : vector<8x256xf32>
    %cst_73 = arith.constant 1.000000e+00 : f32
    %246 = vector.broadcast %cst_73 : f32 to vector<8x256xf32>
    %247 = arith.addf %246, %245 : vector<8x256xf32>
    %248 = arith.divf %246, %247 : vector<8x256xf32>
    %249 = vector.extract_strided_slice %242 {offsets = [0, 256], sizes = [8, 256], strides = [1, 1]} : vector<8x1024xf32> to vector<8x256xf32>
    %250 = arith.negf %249 : vector<8x256xf32>
    %251 = math.exp %250 : vector<8x256xf32>
    %cst_74 = arith.constant 1.000000e+00 : f32
    %252 = vector.broadcast %cst_74 : f32 to vector<8x256xf32>
    %253 = arith.addf %252, %251 : vector<8x256xf32>
    %254 = arith.divf %252, %253 : vector<8x256xf32>
    %255 = vector.extract_strided_slice %242 {offsets = [0, 512], sizes = [8, 256], strides = [1, 1]} : vector<8x1024xf32> to vector<8x256xf32>
    %256 = math.tanh %255 : vector<8x256xf32>
    %257 = vector.extract_strided_slice %242 {offsets = [0, 768], sizes = [8, 256], strides = [1, 1]} : vector<8x1024xf32> to vector<8x256xf32>
    %258 = arith.negf %257 : vector<8x256xf32>
    %259 = math.exp %258 : vector<8x256xf32>
    %cst_75 = arith.constant 1.000000e+00 : f32
    %260 = vector.broadcast %cst_75 : f32 to vector<8x256xf32>
    %261 = arith.addf %260, %259 : vector<8x256xf32>
    %262 = arith.divf %260, %261 : vector<8x256xf32>
    %263 = arith.mulf %254, %233 : vector<8x256xf32>
    %264 = arith.mulf %248, %256 : vector<8x256xf32>
    %265 = arith.addf %263, %264 : vector<8x256xf32>
    %266 = math.tanh %265 : vector<8x256xf32>
    %267 = arith.mulf %262, %266 : vector<8x256xf32>
    %c8_i32_76 = arith.constant 8 : i32
    %c0_77 = arith.constant 0 : index
    %c0_78 = arith.constant 0 : index
    %268 = vector.load %arg9[%c0_77, %c0_78] : memref<8x256xf32, #tpu.memory_space<vmem>>, vector<8x256xf32>
    tpu.vector_store %arg9[%c0_77, %c0_78], %267 {strides = array<i32>} : memref<8x256xf32, #tpu.memory_space<vmem>>, vector<8x256xf32>,
    %c0_79 = arith.constant 0 : index
    %c0_80 = arith.constant 0 : index
    %269 = vector.load %arg10[%c0_79, %c0_80] : memref<8x256xf32, #tpu.memory_space<vmem>>, vector<8x256xf32>
    tpu.vector_store %arg10[%c0_79, %c0_80], %265 {strides = array<i32>} : memref<8x256xf32, #tpu.memory_space<vmem>>, vector<8x256xf32>,
    %c0_i32_81 = arith.constant 0 : i32
    %270 = arith.cmpi eq, %arg0, %c0_i32_81 : i32
    %271 = arith.extui %270 : i1 to i32
    %c0_i32_82 = arith.constant 0 : i32
    %272 = arith.cmpi ne, %271, %c0_i32_82 : i32
    scf.if %272 {
      %c0_83 = arith.constant 0 : index
      %c0_84 = arith.constant 0 : index
      %273 = vector.load %arg5[%c0_83, %c0_84] : memref<256x128xf32, #tpu.memory_space<vmem>>, vector<256x128xf32>
      %cst_85 = arith.constant dense<0.000000e+00> : vector<8x128xf32>
      %274 = tpu.matmul %267, %273, %cst_85 {dimension_numbers = #tpu.dot_dimension_numbers<[1], [0], [0], [1], [0, 0, 1, 1], [], []>} : vector<8x256xf32>, vector<256x128xf32>, vector<8x128xf32> -> vector<8x128xf32>
      %c0_86 = arith.constant 0 : index
      %c0_87 = arith.constant 0 : index
      %275 = vector.load %arg6[%c0_86, %c0_87] : memref<1x128xf32, #tpu.memory_space<vmem>>, vector<1x128xf32>
      %276 = vector.broadcast %275 : vector<1x128xf32> to vector<8x128xf32>
      %277 = arith.addf %274, %276 : vector<8x128xf32>
      %c0_88 = arith.constant 0 : index
      %c0_89 = arith.constant 0 : index
      %278 = vector.load %arg7[%c0_88, %c0_89] : memref<8x128xf32, #tpu.memory_space<vmem>>, vector<8x128xf32>
      tpu.vector_store %arg7[%c0_88, %c0_89], %277 {strides = array<i32>} : memref<8x128xf32, #tpu.memory_space<vmem>>, vector<8x128xf32>,
    } else {
    }
    return
  }
  func.func @transform_0(%arg0: i32) -> (i32, i32) {
    %c0_i32 = arith.constant 0 : i32
    %c0_i32_0 = arith.constant 0 : i32
    return %arg0, %c0_i32 : i32, i32
  }
  func.func @transform_1(%arg0: i32) -> (i32, i32) {
    %c0_i32 = arith.constant 0 : i32
    %c0_i32_0 = arith.constant 0 : i32
    %c0_i32_1 = arith.constant 0 : i32
    return %c0_i32, %c0_i32_0 : i32, i32
  }
  func.func @transform_2(%arg0: i32) -> (i32, i32) {
    %c0_i32 = arith.constant 0 : i32
    %c0_i32_0 = arith.constant 0 : i32
    %c0_i32_1 = arith.constant 0 : i32
    return %c0_i32, %c0_i32_0 : i32, i32
  }
  func.func @transform_3(%arg0: i32) -> (i32, i32) {
    %c0_i32 = arith.constant 0 : i32
    %c0_i32_0 = arith.constant 0 : i32
    %c0_i32_1 = arith.constant 0 : i32
    return %c0_i32, %c0_i32_0 : i32, i32
  }
  func.func @transform_4(%arg0: i32) -> (i32, i32) {
    %c0_i32 = arith.constant 0 : i32
    %c0_i32_0 = arith.constant 0 : i32
    %c0_i32_1 = arith.constant 0 : i32
    return %c0_i32, %c0_i32_0 : i32, i32
  }
  func.func @transform_5(%arg0: i32) -> (i32, i32) {
    %c0_i32 = arith.constant 0 : i32
    %c0_i32_0 = arith.constant 0 : i32
    %c0_i32_1 = arith.constant 0 : i32
    return %c0_i32, %c0_i32_0 : i32, i32
  }
  func.func @transform_6(%arg0: i32) -> (i32, i32) {
    %c0_i32 = arith.constant 0 : i32
    %c0_i32_0 = arith.constant 0 : i32
    %c0_i32_1 = arith.constant 0 : i32
    return %c0_i32, %c0_i32_0 : i32, i32
  }
}

</mosaic_0001>

<llo_original>
// kernel: lstm_classifier_forward.1
$region0: #{lstm_classifier_forward.1}
  #allocation0 [shape = 'u32[]', space=smem, size = 0x4, offset = 0x4, fixed_abs, tag = 'smem constant byte address 0x4 - core index']
  #allocation1 [shape = 'u32[144,128]{1,0:T(1,128)}', space=vmem, size = 0x12000, scoped, tag = 'internal scratch']
  #allocation2 [shape = 'f32[64,1024]{1,0:T(8,128)}', space=vmem, size = 0x40000, scoped, tag = 'scratch operand']
  #allocation3 [shape = 'f32[8,256]{1,0:T(8,128)}', space=vmem, size = 0x2000, scoped, tag = 'scratch operand']
  #allocation4 [shape = 'f32[8,256]{1,0:T(8,128)}', space=vmem, size = 0x2000, scoped, tag = 'scratch operand']
  %s0 = inlined_call_operand.vmem [shape: f32[64,32], index: 0, kind: input, shape index: {}]
  %s1 = inlined_call_operand.vmem [shape: f32[32,1024], index: 1, kind: input, shape index: {}]
  %s2 = inlined_call_operand.vmem [shape: f32[256,1024], index: 2, kind: input, shape index: {}]
  %s3 = inlined_call_operand.vmem [shape: f32[1,1024], index: 3, kind: input, shape index: {}]
  %s4 = inlined_call_operand.vmem [shape: f32[256,128], index: 4, kind: input, shape index: {}]
  %s5 = inlined_call_operand.vmem [shape: f32[1,128], index: 5, kind: input, shape index: {}]
  %s6 = inlined_call_operand.hbm [shape: f32[8,128], index: 6, kind: output, shape index: {}]
  %s7 = sld [smem:[#allocation0]]
  $region42: #{lstm_classifier_forward.1} parent=0
    _
  %s9 = ssub.s32 1, %s7
  %s10 = scalar_select 0, %s9, %s7
  $region1: #{lstm_classifier_forward.1} parent=0
    #allocation5 [shape = 'u8[4096]{0}', space=vmem, size = 0x1000, scoped, tag = 'output window, operand 0, single buffered']
    #allocation6 [shape = 's32[1]{0}', space=sflag, size = 0x4, scoped, tag = 'scoped memory for lstm_classifier_forward.1']
    %11 = vsyncpa [#allocation6], 0
    // Predicated region
    $region2: #{lstm_classifier_forward.1} parent=1 // pred_check
      _
    $region3: #{lstm_classifier_forward.1} parent=1 // pred_check_branch
      %13 = sbr.rel (0) target = $region5
    $region4: #{lstm_classifier_forward.1} parent=1 // pred_region
      _
    $region5: #{lstm_classifier_forward.1} parent=1 // pred_fallthru
      _
    // Predicated region
    $region6: #{lstm_classifier_forward.1} parent=1 // pred_check
      _
    $region7: #{lstm_classifier_forward.1} parent=1 // pred_check_branch
      %15 = sbr.rel (0) target = $region9
    $region8: #{lstm_classifier_forward.1} parent=1 // pred_region
      _
    $region9: #{lstm_classifier_forward.1} parent=1 // pred_fallthru
      _
    // Predicated region
    $region10: #{lstm_classifier_forward.1} parent=1 // pred_check
      _
    $region11: #{lstm_classifier_forward.1} parent=1 // pred_check_branch
      %17 = sbr.rel (0) target = $region13
    $region12: #{lstm_classifier_forward.1} parent=1 // pred_region
      _
    $region13: #{lstm_classifier_forward.1} parent=1 // pred_fallthru
      _
    // Predicated region
    $region14: #{lstm_classifier_forward.1} parent=1 // pred_check
      _
    $region15: #{lstm_classifier_forward.1} parent=1 // pred_check_branch
      %19 = sbr.rel (0) target = $region17
    $region16: #{lstm_classifier_forward.1} parent=1 // pred_region
      _
    $region17: #{lstm_classifier_forward.1} parent=1 // pred_fallthru
      _
    // Predicated region
    $region18: #{lstm_classifier_forward.1} parent=1 // pred_check
      _
    $region19: #{lstm_classifier_forward.1} parent=1 // pred_check_branch
      %21 = sbr.rel (0) target = $region21
    $region20: #{lstm_classifier_forward.1} parent=1 // pred_region
      _
    $region21: #{lstm_classifier_forward.1} parent=1 // pred_fallthru
      _
    // Predicated region
    $region22: #{lstm_classifier_forward.1} parent=1 // pred_check
      _
    $region23: #{lstm_classifier_forward.1} parent=1 // pred_check_branch
      %23 = sbr.rel (0) target = $region25
    $region24: #{lstm_classifier_forward.1} parent=1 // pred_region
      _
    $region25: #{lstm_classifier_forward.1} parent=1 // pred_fallthru
      _
    %v24 = vld [vmem:[%s0] sm:$0xff]
    %v25 = vld [vmem:[%s0 + $0x8] sm:$0xff]
    %v26 = vld [vmem:[%s0 + $0x10] sm:$0xff]
    %v27 = vld [vmem:[%s0 + $0x18] sm:$0xff]
    %v28 = vld [vmem:[%s0 + $0x20] sm:$0xff]
    %v29 = vld [vmem:[%s0 + $0x28] sm:$0xff]
    %v30 = vld [vmem:[%s0 + $0x30] sm:$0xff]
    %v31 = vld [vmem:[%s0 + $0x38] sm:$0xff]
    %v32 = vld [vmem:[%s1] sm:$0xff]
    %v33 = vld [vmem:[%s1 + $0x8] sm:$0xff]
    %v34 = vld [vmem:[%s1 + $0x10] sm:$0xff]
    %v35 = vld [vmem:[%s1 + $0x18] sm:$0xff]
    %v36 = vld [vmem:[%s1 + $0x20] sm:$0xff]
    %v37 = vld [vmem:[%s1 + $0x28] sm:$0xff]
    %v38 = vld [vmem:[%s1 + $0x30] sm:$0xff]
    %v39 = vld [vmem:[%s1 + $0x38] sm:$0xff]
    %v40 = vld [vmem:[%s1 + $0x40] sm:$0xff]
    %v41 = vld [vmem:[%s1 + $0x48] sm:$0xff]
    %v42 = vld [vmem:[%s1 + $0x50] sm:$0xff]
    %v43 = vld [vmem:[%s1 + $0x58] sm:$0xff]
    %v44 = vld [vmem:[%s1 + $0x60] sm:$0xff]
    %v45 = vld [vmem:[%s1 + $0x68] sm:$0xff]
    %v46 = vld [vmem:[%s1 + $0x70] sm:$0xff]
    %v47 = vld [vmem:[%s1 + $0x78] sm:$0xff]
    %v48 = vld [vmem:[%s1 + $0x80] sm:$0xff]
    %v49 = vld [vmem:[%s1 + $0x88] sm:$0xff]
    %v50 = vld [vmem:[%s1 + $0x90] sm:$0xff]
    %v51 = vld [vmem:[%s1 + $0x98] sm:$0xff]
    %v52 = vld [vmem:[%s1 + $0xa0] sm:$0xff]
    %v53 = vld [vmem:[%s1 + $0xa8] sm:$0xff]
    %v54 = vld [vmem:[%s1 + $0xb0] sm:$0xff]
    %v55 = vld [vmem:[%s1 + $0xb8] sm:$0xff]
    %v56 = vld [vmem:[%s1 + $0xc0] sm:$0xff]
    %v57 = vld [vmem:[%s1 + $0xc8] sm:$0xff]
    %v58 = vld [vmem:[%s1 + $0xd0] sm:$0xff]
    %v59 = vld [vmem:[%s1 + $0xd8] sm:$0xff]
    %v60 = vld [vmem:[%s1 + $0xe0] sm:$0xff]
    %v61 = vld [vmem:[%s1 + $0xe8] sm:$0xff]
    %v62 = vld [vmem:[%s1 + $0xf0] sm:$0xff]
    %v63 = vld [vmem:[%s1 + $0xf8] sm:$0xff]
    %v64 = vld [vmem:[%s3] sm:$0xff]
    %v66 = vlaneseq
    %v67 = vshrl.u32 %v66, 7
    %v68 = vsub.s32 0, %v67
    %v69 = vrot.slane %v64, %v68
    %v70 = vlaneseq
    %v71 = vshrl.u32 %v70, 7
    %v72 = vsub.s32 1, %v71
    %v73 = vrot.slane %v64, %v72
    %v74 = vlaneseq
    %v75 = vshrl.u32 %v74, 7
    %v76 = vsub.s32 2, %v75
    %v77 = vrot.slane %v64, %v76
    %v78 = vlaneseq
    %v79 = vshrl.u32 %v78, 7
    %v80 = vsub.s32 3, %v79
    %v81 = vrot.slane %v64, %v80
    %v82 = vlaneseq
    %v83 = vshrl.u32 %v82, 7
    %v84 = vsub.s32 4, %v83
    %v85 = vrot.slane %v64, %v84
    %v86 = vlaneseq
    %v87 = vshrl.u32 %v86, 7
    %v88 = vsub.s32 5, %v87
    %v89 = vrot.slane %v64, %v88
    %v90 = vlaneseq
    %v91 = vshrl.u32 %v90, 7
    %v92 = vsub.s32 6, %v91
    %v93 = vrot.slane %v64, %v92
    %v94 = vlaneseq
    %v95 = vshrl.u32 %v94, 7
    %v96 = vsub.s32 7, %v95
    %v97 = vrot.slane %v64, %v96
    %vm106 = vcmask 261120
    %v108 = vsel %vm106, %v24, 0
    %v111 = vsel %vm106, %v25, 0
    %v114 = vsel %vm106, %v26, 0
    %v117 = vsel %vm106, %v27, 0
    %v120 = vsel %vm106, %v28, 0
    %v123 = vsel %vm106, %v29, 0
    %v126 = vsel %vm106, %v30, 0
    %v129 = vsel %vm106, %v31, 0
    %131 = vmatprep.subr.mxu0 %v33
    %132 = vmatpush1.msra.mxu0 %v32
    %133 = vmatprep.subr.mxu0 %v41
    %134 = vmatpush1.msra.mxu0 %v40
    %135 = vmatprep.subr.mxu0 %v49
    %136 = vmatpush1.msra.mxu0 %v48
    %137 = vmatprep.subr.mxu0 %v57
    %138 = vmatpush1.msra.mxu0 %v56
    %139 = vmatprep.subr.mxu0 0.0
    %140 = vmatpush1.msra.mxu0 0.0
    %141 = vmatprep.subr.mxu0 0.0
    %142 = vmatpush1.msra.mxu0 0.0
    %143 = vmatprep.subr.mxu0 0.0
    %144 = vmatpush1.msra.mxu0 0.0
    %145 = vmatprep.subr.mxu0 0.0
    %146 = vmatpush1.msra.mxu0 0.0
    %147 = vmatprep.subr.mxu0 0.0
    %148 = vmatpush1.msra.mxu0 0.0
    %149 = vmatprep.subr.mxu0 0.0
    %150 = vmatpush1.msra.mxu0 0.0
    %151 = vmatprep.subr.mxu0 0.0
    %152 = vmatpush1.msra.mxu0 0.0
    %153 = vmatprep.subr.mxu0 0.0
    %154 = vmatpush1.msra.mxu0 0.0
    %155 = vmatprep.subr.mxu0 0.0
    %156 = vmatpush1.msra.mxu0 0.0
    %157 = vmatprep.subr.mxu0 0.0
    %158 = vmatpush1.msra.mxu0 0.0
    %159 = vmatprep.subr.mxu0 0.0
    %160 = vmatpush1.msra.mxu0 0.0
    %161 = vmatprep.subr.mxu0 0.0
    %162 = vmatpush1.msra.mxu0 0.0
    %163 = vmatprep.subr.mxu0 0.0
    %164 = vmatpush1.msra.mxu0 0.0
    %165 = vmatprep.subr.mxu0 0.0
    %166 = vmatpush1.msra.mxu0 0.0
    %167 = vmatprep.subr.mxu0 0.0
    %168 = vmatpush1.msra.mxu0 0.0
    %169 = vmatprep.subr.mxu0 0.0
    %170 = vmatpush1.msra.mxu0 0.0
    %171 = vmatprep.subr.mxu0 0.0
    %172 = vmatpush1.msra.mxu0 0.0
    %173 = vmatprep.subr.mxu0 0.0
    %174 = vmatpush1.msra.mxu0 0.0
    %175 = vmatprep.subr.mxu0 0.0
    %176 = vmatpush1.msra.mxu0 0.0
    %177 = vmatprep.subr.mxu0 0.0
    %178 = vmatpush1.msra.mxu0 0.0
    %179 = vmatprep.subr.mxu0 0.0
    %180 = vmatpush1.msra.mxu0 0.0
    %181 = vmatprep.subr.mxu0 0.0
    %182 = vmatpush1.msra.mxu0 0.0
    %183 = vmatprep.subr.mxu0 0.0
    %184 = vmatpush1.msra.mxu0 0.0
    %185 = vmatprep.subr.mxu0 0.0
    %186 = vmatpush1.msra.mxu0 0.0
    %187 = vmatprep.subr.mxu0 0.0
    %188 = vmatpush1.msra.mxu0 0.0
    %189 = vmatprep.subr.mxu0 0.0
    %190 = vmatpush1.msra.mxu0 0.0
    %191 = vmatprep.subr.mxu0 0.0
    %192 = vmatpush1.msra.mxu0 0.0
    %193 = vmatprep.subr.mxu0 0.0
    %194 = vmatpush1.msra.mxu0 0.0
    %195 = vmatprep.mubr.f32.mxu0 0.0
    %196 = vmatmul.mubr.f32.gmra.mrb[0].mxu0 %v108
    %v197 = vpop.f32.mrb[0].mxu0
    %v198 = vadd.f32 %v69, %v197
    %v199 = vpop.f32.mrb[0].mxu0
    %v200 = vadd.f32 %v73, %v199
    %201 = vmatprep.mubr.f32.mxu0 0.0
    %202 = vmatmul.mubr.f32.gmra.mrb[0].mxu0 %v111
    %v203 = vpop.f32.mrb[0].mxu0
    %v204 = vadd.f32 %v69, %v203
    %v205 = vpop.f32.mrb[0].mxu0
    %v206 = vadd.f32 %v73, %v205
    %207 = vmatprep.mubr.f32.mxu0 0.0
    %208 = vmatmul.mubr.f32.gmra.mrb[0].mxu0 %v114
    %v209 = vpop.f32.mrb[0].mxu0
    %v210 = vadd.f32 %v69, %v209
    %v211 = vpop.f32.mrb[0].mxu0
    %v212 = vadd.f32 %v73, %v211
    %213 = vmatprep.mubr.f32.mxu0 0.0
    %214 = vmatmul.mubr.f32.gmra.mrb[0].mxu0 %v117
    %v215 = vpop.f32.mrb[0].mxu0
    %v216 = vadd.f32 %v69, %v215
    %v217 = vpop.f32.mrb[0].mxu0
    %v218 = vadd.f32 %v73, %v217
    %219 = vmatprep.mubr.f32.mxu0 0.0
    %220 = vmatmul.mubr.f32.gmra.mrb[0].mxu0 %v120
    %v221 = vpop.f32.mrb[0].mxu0
    %v222 = vadd.f32 %v69, %v221
    %v223 = vpop.f32.mrb[0].mxu0
    %v224 = vadd.f32 %v73, %v223
    %225 = vmatprep.mubr.f32.mxu0 0.0
    %226 = vmatmul.mubr.f32.gmra.mrb[0].mxu0 %v123
    %v227 = vpop.f32.mrb[0].mxu0
    %v228 = vadd.f32 %v69, %v227
    %v229 = vpop.f32.mrb[0].mxu0
    %v230 = vadd.f32 %v73, %v229
    %231 = vmatprep.mubr.f32.mxu0 0.0
    %232 = vmatmul.mubr.f32.gmra.mrb[0].mxu0 %v126
    %v233 = vpop.f32.mrb[0].mxu0
    %v234 = vadd.f32 %v69, %v233
    %v235 = vpop.f32.mrb[0].mxu0
    %v236 = vadd.f32 %v73, %v235
    %237 = vmatprep.mubr.f32.mxu0 0.0
    %238 = vmatmul.mubr.f32.gmra.mrb[0].mxu0 %v129
    %v239 = vpop.f32.mrb[0].mxu0
    %v240 = vadd.f32 %v69, %v239
    %v241 = vpop.f32.mrb[0].mxu0
    %v242 = vadd.f32 %v73, %v241
    %243 = vdwg.mxu0
    %244 = vmatprep.subr.mxu0 %v35
    %245 = vmatpush1.msra.mxu0 %v34
    %246 = vmatprep.subr.mxu0 %v43
    %247 = vmatpush1.msra.mxu0 %v42
    %248 = vmatprep.subr.mxu0 %v51
    %249 = vmatpush1.msra.mxu0 %v50
    %250 = vmatprep.subr.mxu0 %v59
    %251 = vmatpush1.msra.mxu0 %v58
    %252 = vmatprep.subr.mxu0 0.0
    %253 = vmatpush1.msra.mxu0 0.0
    %254 = vmatprep.subr.mxu0 0.0
    %255 = vmatpush1.msra.mxu0 0.0
    %256 = vmatprep.subr.mxu0 0.0
    %257 = vmatpush1.msra.mxu0 0.0
    %258 = vmatprep.subr.mxu0 0.0
    %259 = vmatpush1.msra.mxu0 0.0
    %260 = vmatprep.subr.mxu0 0.0
    %261 = vmatpush1.msra.mxu0 0.0
    %262 = vmatprep.subr.mxu0 0.0
    %263 = vmatpush1.msra.mxu0 0.0
    %264 = vmatprep.subr.mxu0 0.0
    %265 = vmatpush1.msra.mxu0 0.0
    %266 = vmatprep.subr.mxu0 0.0
    %267 = vmatpush1.msra.mxu0 0.0
    %268 = vmatprep.subr.mxu0 0.0
    %269 = vmatpush1.msra.mxu0 0.0
    %270 = vmatprep.subr.mxu0 0.0
    %271 = vmatpush1.msra.mxu0 0.0
    %272 = vmatprep.subr.mxu0 0.0
    %273 = vmatpush1.msra.mxu0 0.0
    %274 = vmatprep.subr.mxu0 0.0
    %275 = vmatpush1.msra.mxu0 0.0
    %276 = vmatprep.subr.mxu0 0.0
    %277 = vmatpush1.msra.mxu0 0.0
    %278 = vmatprep.subr.mxu0 0.0
    %279 = vmatpush1.msra.mxu0 0.0
    %280 = vmatprep.subr.mxu0 0.0
    %281 = vmatpush1.msra.mxu0 0.0
    %282 = vmatprep.subr.mxu0 0.0
    %283 = vmatpush1.msra.mxu0 0.0
    %284 = vmatprep.subr.mxu0 0.0
    %285 = vmatpush1.msra.mxu0 0.0
    %286 = vmatprep.subr.mxu0 0.0
    %287 = vmatpush1.msra.mxu0 0.0
    %288 = vmatprep.subr.mxu0 0.0
    %289 = vmatpush1.msra.mxu0 0.0
    %290 = vmatprep.subr.mxu0 0.0
    %291 = vmatpush1.msra.mxu0 0.0
    %292 = vmatprep.subr.mxu0 0.0
    %293 = vmatpush1.msra.mxu0 0.0
    %294 = vmatprep.subr.mxu0 0.0
    %295 = vmatpush1.msra.mxu0 0.0
    %296 = vmatprep.subr.mxu0 0.0
    %297 = vmatpush1.msra.mxu0 0.0
    %298 = vmatprep.subr.mxu0 0.0
    %299 = vmatpush1.msra.mxu0 0.0
    %300 = vmatprep.subr.mxu0 0.0
    %301 = vmatpush1.msra.mxu0 0.0
    %302 = vmatprep.subr.mxu0 0.0
    %303 = vmatpush1.msra.mxu0 0.0
    %304 = vmatprep.subr.mxu0 0.0
    %305 = vmatpush1.msra.mxu0 0.0
    %306 = vmatprep.subr.mxu0 0.0
    %307 = vmatpush1.msra.mxu0 0.0
    %308 = vmatprep.mubr.f32.mxu0 0.0
    %309 = vmatmul.mubr.f32.gmra.mrb[0].mxu0 %v108
    %v310 = vpop.f32.mrb[0].mxu0
    %v311 = vadd.f32 %v77, %v310
    %v312 = vpop.f32.mrb[0].mxu0
    %v313 = vadd.f32 %v81, %v312
    %314 = vmatprep.mubr.f32.mxu0 0.0
    %315 = vmatmul.mubr.f32.gmra.mrb[0].mxu0 %v111
    %v316 = vpop.f32.mrb[0].mxu0
    %v317 = vadd.f32 %v77, %v316
    %v318 = vpop.f32.mrb[0].mxu0
    %v319 = vadd.f32 %v81, %v318
    %320 = vmatprep.mubr.f32.mxu0 0.0
    %321 = vmatmul.mubr.f32.gmra.mrb[0].mxu0 %v114
    %v322 = vpop.f32.mrb[0].mxu0
    %v323 = vadd.f32 %v77, %v322
    %v324 = vpop.f32.mrb[0].mxu0
    %v325 = vadd.f32 %v81, %v324
    %326 = vmatprep.mubr.f32.mxu0 0.0
    %327 = vmatmul.mubr.f32.gmra.mrb[0].mxu0 %v117
    %v328 = vpop.f32.mrb[0].mxu0
    %v329 = vadd.f32 %v77, %v328
    %v330 = vpop.f32.mrb[0].mxu0
    %v331 = vadd.f32 %v81, %v330
    %332 = vmatprep.mubr.f32.mxu0 0.0
    %333 = vmatmul.mubr.f32.gmra.mrb[0].mxu0 %v120
    %v334 = vpop.f32.mrb[0].mxu0
    %v335 = vadd.f32 %v77, %v334
    %v336 = vpop.f32.mrb[0].mxu0
    %v337 = vadd.f32 %v81, %v336
    %338 = vmatprep.mubr.f32.mxu0 0.0
    %339 = vmatmul.mubr.f32.gmra.mrb[0].mxu0 %v123
    %v340 = vpop.f32.mrb[0].mxu0
    %v341 = vadd.f32 %v77, %v340
    %v342 = vpop.f32.mrb[0].mxu0
    %v343 = vadd.f32 %v81, %v342
    %344 = vmatprep.mubr.f32.mxu0 0.0
    %345 = vmatmul.mubr.f32.gmra.mrb[0].mxu0 %v126
    %v346 = vpop.f32.mrb[0].mxu0
    %v347 = vadd.f32 %v77, %v346
    %v348 = vpop.f32.mrb[0].mxu0
    %v349 = vadd.f32 %v81, %v348
    %350 = vmatprep.mubr.f32.mxu0 0.0
    %351 = vmatmul.mubr.f32.gmra.mrb[0].mxu0 %v129
    %v352 = vpop.f32.mrb[0].mxu0
    %v353 = vadd.f32 %v77, %v352
    %v354 = vpop.f32.mrb[0].mxu0
    %v355 = vadd.f32 %v81, %v354
    %356 = vdwg.mxu0
    %357 = vmatprep.subr.mxu0 %v37
    %358 = vmatpush1.msra.mxu0 %v36
    %359 = vmatprep.subr.mxu0 %v45
    %360 = vmatpush1.msra.mxu0 %v44
    %361 = vmatprep.subr.mxu0 %v53
    %362 = vmatpush1.msra.mxu0 %v52
    %363 = vmatprep.subr.mxu0 %v61
    %364 = vmatpush1.msra.mxu0 %v60
    %365 = vmatprep.subr.mxu0 0.0
    %366 = vmatpush1.msra.mxu0 0.0
    %367 = vmatprep.subr.mxu0 0.0
    %368 = vmatpush1.msra.mxu0 0.0
    %369 = vmatprep.subr.mxu0 0.0
    %370 = vmatpush1.msra.mxu0 0.0
    %371 = vmatprep.subr.mxu0 0.0
    %372 = vmatpush1.msra.mxu0 0.0
    %373 = vmatprep.subr.mxu0 0.0
    %374 = vmatpush1.msra.mxu0 0.0
    %375 = vmatprep.subr.mxu0 0.0
    %376 = vmatpush1.msra.mxu0 0.0
    %377 = vmatprep.subr.mxu0 0.0
    %378 = vmatpush1.msra.mxu0 0.0
    %379 = vmatprep.subr.mxu0 0.0
    %380 = vmatpush1.msra.mxu0 0.0
    %381 = vmatprep.subr.mxu0 0.0
    %382 = vmatpush1.msra.mxu0 0.0
    %383 = vmatprep.subr.mxu0 0.0
    %384 = vmatpush1.msra.mxu0 0.0
    %385 = vmatprep.subr.mxu0 0.0
    %386 = vmatpush1.msra.mxu0 0.0
    %387 = vmatprep.subr.mxu0 0.0
    %388 = vmatpush1.msra.mxu0 0.0
    %389 = vmatprep.subr.mxu0 0.0
    %390 = vmatpush1.msra.mxu0 0.0
    %391 = vmatprep.subr.mxu0 0.0
    %392 = vmatpush1.msra.mxu0 0.0
    %393 = vmatprep.subr.mxu0 0.0
    %394 = vmatpush1.msra.mxu0 0.0
    %395 = vmatprep.subr.mxu0 0.0
    %396 = vmatpush1.msra.mxu0 0.0
    %397 = vmatprep.subr.mxu0 0.0
    %398 = vmatpush1.msra.mxu0 0.0
    %399 = vmatprep.subr.mxu0 0.0
    %400 = vmatpush1.msra.mxu0 0.0
    %401 = vmatprep.subr.mxu0 0.0
    %402 = vmatpush1.msra.mxu0 0.0
    %403 = vmatprep.subr.mxu0 0.0
    %404 = vmatpush1.msra.mxu0 0.0
    %405 = vmatprep.subr.mxu0 0.0
    %406 = vmatpush1.msra.mxu0 0.0
    %407 = vmatprep.subr.mxu0 0.0
    %408 = vmatpush1.msra.mxu0 0.0
    %409 = vmatprep.subr.mxu0 0.0
    %410 = vmatpush1.msra.mxu0 0.0
    %411 = vmatprep.subr.mxu0 0.0
    %412 = vmatpush1.msra.mxu0 0.0
    %413 = vmatprep.subr.mxu0 0.0
    %414 = vmatpush1.msra.mxu0 0.0
    %415 = vmatprep.subr.mxu0 0.0
    %416 = vmatpush1.msra.mxu0 0.0
    %417 = vmatprep.subr.mxu0 0.0
    %418 = vmatpush1.msra.mxu0 0.0
    %419 = vmatprep.subr.mxu0 0.0
    %420 = vmatpush1.msra.mxu0 0.0
    %421 = vmatprep.mubr.f32.mxu0 0.0
    %422 = vmatmul.mubr.f32.gmra.mrb[0].mxu0 %v108
    %v423 = vpop.f32.mrb[0].mxu0
    %v424 = vadd.f32 %v85, %v423
    %v425 = vpop.f32.mrb[0].mxu0
    %v426 = vadd.f32 %v89, %v425
    %427 = vmatprep.mubr.f32.mxu0 0.0
    %428 = vmatmul.mubr.f32.gmra.mrb[0].mxu0 %v111
    %v429 = vpop.f32.mrb[0].mxu0
    %v430 = vadd.f32 %v85, %v429
    %v431 = vpop.f32.mrb[0].mxu0
    %v432 = vadd.f32 %v89, %v431
    %433 = vmatprep.mubr.f32.mxu0 0.0
    %434 = vmatmul.mubr.f32.gmra.mrb[0].mxu0 %v114
    %v435 = vpop.f32.mrb[0].mxu0
    %v436 = vadd.f32 %v85, %v435
    %v437 = vpop.f32.mrb[0].mxu0
    %v438 = vadd.f32 %v89, %v437
    %439 = vmatprep.mubr.f32.mxu0 0.0
    %440 = vmatmul.mubr.f32.gmra.mrb[0].mxu0 %v117
    %v441 = vpop.f32.mrb[0].mxu0
    %v442 = vadd.f32 %v85, %v441
    %v443 = vpop.f32.mrb[0].mxu0
    %v444 = vadd.f32 %v89, %v443
    %445 = vmatprep.mubr.f32.mxu0 0.0
    %446 = vmatmul.mubr.f32.gmra.mrb[0].mxu0 %v120
    %v447 = vpop.f32.mrb[0].mxu0
    %v448 = vadd.f32 %v85, %v447
    %v449 = vpop.f32.mrb[0].mxu0
    %v450 = vadd.f32 %v89, %v449
    %451 = vmatprep.mubr.f32.mxu0 0.0
    %452 = vmatmul.mubr.f32.gmra.mrb[0].mxu0 %v123
    %v453 = vpop.f32.mrb[0].mxu0
    %v454 = vadd.f32 %v85, %v453
    %v455 = vpop.f32.mrb[0].mxu0
    %v456 = vadd.f32 %v89, %v455
    %457 = vmatprep.mubr.f32.mxu0 0.0
    %458 = vmatmul.mubr.f32.gmra.mrb[0].mxu0 %v126
    %v459 = vpop.f32.mrb[0].mxu0
    %v460 = vadd.f32 %v85, %v459
    %v461 = vpop.f32.mrb[0].mxu0
    %v462 = vadd.f32 %v89, %v461
    %463 = vmatprep.mubr.f32.mxu0 0.0
    %464 = vmatmul.mubr.f32.gmra.mrb[0].mxu0 %v129
    %v465 = vpop.f32.mrb[0].mxu0
    %v466 = vadd.f32 %v85, %v465
    %v467 = vpop.f32.mrb[0].mxu0
    %v468 = vadd.f32 %v89, %v467
    %469 = vdwg.mxu0
    %470 = vmatprep.subr.mxu0 %v39
    %471 = vmatpush1.msra.mxu0 %v38
    %472 = vmatprep.subr.mxu0 %v47
    %473 = vmatpush1.msra.mxu0 %v46
    %474 = vmatprep.subr.mxu0 %v55
    %475 = vmatpush1.msra.mxu0 %v54
    %476 = vmatprep.subr.mxu0 %v63
    %477 = vmatpush1.msra.mxu0 %v62
    %478 = vmatprep.subr.mxu0 0.0
    %479 = vmatpush1.msra.mxu0 0.0
    %480 = vmatprep.subr.mxu0 0.0
    %481 = vmatpush1.msra.mxu0 0.0
    %482 = vmatprep.subr.mxu0 0.0
    %483 = vmatpush1.msra.mxu0 0.0
    %484 = vmatprep.subr.mxu0 0.0
    %485 = vmatpush1.msra.mxu0 0.0
    %486 = vmatprep.subr.mxu0 0.0
    %487 = vmatpush1.msra.mxu0 0.0
    %488 = vmatprep.subr.mxu0 0.0
    %489 = vmatpush1.msra.mxu0 0.0
    %490 = vmatprep.subr.mxu0 0.0
    %491 = vmatpush1.msra.mxu0 0.0
    %492 = vmatprep.subr.mxu0 0.0
    %493 = vmatpush1.msra.mxu0 0.0
    %494 = vmatprep.subr.mxu0 0.0
    %495 = vmatpush1.msra.mxu0 0.0
    %496 = vmatprep.subr.mxu0 0.0
    %497 = vmatpush1.msra.mxu0 0.0
    %498 = vmatprep.subr.mxu0 0.0
    %499 = vmatpush1.msra.mxu0 0.0
    %500 = vmatprep.subr.mxu0 0.0
    %501 = vmatpush1.msra.mxu0 0.0
    %502 = vmatprep.subr.mxu0 0.0
    %503 = vmatpush1.msra.mxu0 0.0
    %504 = vmatprep.subr.mxu0 0.0
    %505 = vmatpush1.msra.mxu0 0.0
    %506 = vmatprep.subr.mxu0 0.0
    %507 = vmatpush1.msra.mxu0 0.0
    %508 = vmatprep.subr.mxu0 0.0
    %509 = vmatpush1.msra.mxu0 0.0
    %510 = vmatprep.subr.mxu0 0.0
    %511 = vmatpush1.msra.mxu0 0.0
    %512 = vmatprep.subr.mxu0 0.0
    %513 = vmatpush1.msra.mxu0 0.0
    %514 = vmatprep.subr.mxu0 0.0
    %515 = vmatpush1.msra.mxu0 0.0
    %516 = vmatprep.subr.mxu0 0.0
    %517 = vmatpush1.msra.mxu0 0.0
    %518 = vmatprep.subr.mxu0 0.0
    %519 = vmatpush1.msra.mxu0 0.0
    %520 = vmatprep.subr.mxu0 0.0
    %521 = vmatpush1.msra.mxu0 0.0
    %522 = vmatprep.subr.mxu0 0.0
    %523 = vmatpush1.msra.mxu0 0.0
    %524 = vmatprep.subr.mxu0 0.0
    %525 = vmatpush1.msra.mxu0 0.0
    %526 = vmatprep.subr.mxu0 0.0
    %527 = vmatpush1.msra.mxu0 0.0
    %528 = vmatprep.subr.mxu0 0.0
    %529 = vmatpush1.msra.mxu0 0.0
    %530 = vmatprep.subr.mxu0 0.0
    %531 = vmatpush1.msra.mxu0 0.0
    %532 = vmatprep.subr.mxu0 0.0
    %533 = vmatpush1.msra.mxu0 0.0
    %534 = vmatprep.mubr.f32.mxu0 0.0
    %535 = vmatmul.mubr.f32.gmra.mrb[0].mxu0 %v108
    %v536 = vpop.f32.mrb[0].mxu0
    %v537 = vadd.f32 %v93, %v536
    %v538 = vpop.f32.mrb[0].mxu0
    %v539 = vadd.f32 %v97, %v538
    %540 = vmatprep.mubr.f32.mxu0 0.0
    %541 = vmatmul.mubr.f32.gmra.mrb[0].mxu0 %v111
    %v542 = vpop.f32.mrb[0].mxu0
    %v543 = vadd.f32 %v93, %v542
    %v544 = vpop.f32.mrb[0].mxu0
    %v545 = vadd.f32 %v97, %v544
    %546 = vmatprep.mubr.f32.mxu0 0.0
    %547 = vmatmul.mubr.f32.gmra.mrb[0].mxu0 %v114
    %v548 = vpop.f32.mrb[0].mxu0
    %v549 = vadd.f32 %v93, %v548
    %v550 = vpop.f32.mrb[0].mxu0
    %v551 = vadd.f32 %v97, %v550
    %552 = vmatprep.mubr.f32.mxu0 0.0
    %553 = vmatmul.mubr.f32.gmra.mrb[0].mxu0 %v117
    %v554 = vpop.f32.mrb[0].mxu0
    %v555 = vadd.f32 %v93, %v554
    %v556 = vpop.f32.mrb[0].mxu0
    %v557 = vadd.f32 %v97, %v556
    %558 = vmatprep.mubr.f32.mxu0 0.0
    %559 = vmatmul.mubr.f32.gmra.mrb[0].mxu0 %v120
    %v560 = vpop.f32.mrb[0].mxu0
    %v561 = vadd.f32 %v93, %v560
    %v562 = vpop.f32.mrb[0].mxu0
    %v563 = vadd.f32 %v97, %v562
    %564 = vmatprep.mubr.f32.mxu0 0.0
    %565 = vmatmul.mubr.f32.gmra.mrb[0].mxu0 %v123
    %v566 = vpop.f32.mrb[0].mxu0
    %v567 = vadd.f32 %v93, %v566
    %v568 = vpop.f32.mrb[0].mxu0
    %v569 = vadd.f32 %v97, %v568
    %570 = vmatprep.mubr.f32.mxu0 0.0
    %571 = vmatmul.mubr.f32.gmra.mrb[0].mxu0 %v126
    %v572 = vpop.f32.mrb[0].mxu0
    %v573 = vadd.f32 %v93, %v572
    %v574 = vpop.f32.mrb[0].mxu0
    %v575 = vadd.f32 %v97, %v574
    %576 = vmatprep.mubr.f32.mxu0 0.0
    %577 = vmatmul.mubr.f32.gmra.mrb[0].mxu0 %v129
    %v578 = vpop.f32.mrb[0].mxu0
    %v579 = vadd.f32 %v93, %v578
    %v580 = vpop.f32.mrb[0].mxu0
    %v581 = vadd.f32 %v97, %v580
    %582 = vdwg.mxu0
    %583 = vst [vmem:[#allocation2] sm:$0xff] %v198
    %584 = vst [vmem:[#allocation2 + $0x8] sm:$0xff] %v200
    %585 = vst [vmem:[#allocation2 + $0x10] sm:$0xff] %v311
    %586 = vst [vmem:[#allocation2 + $0x18] sm:$0xff] %v313
    %587 = vst [vmem:[#allocation2 + $0x20] sm:$0xff] %v424
    %588 = vst [vmem:[#allocation2 + $0x28] sm:$0xff] %v426
    %589 = vst [vmem:[#allocation2 + $0x30] sm:$0xff] %v537
    %590 = vst [vmem:[#allocation2 + $0x38] sm:$0xff] %v539
    %591 = vst [vmem:[#allocation2 + $0x40] sm:$0xff] %v204
    %592 = vst [vmem:[#allocation2 + $0x48] sm:$0xff] %v206
    %593 = vst [vmem:[#allocation2 + $0x50] sm:$0xff] %v317
    %594 = vst [vmem:[#allocation2 + $0x58] sm:$0xff] %v319
    %595 = vst [vmem:[#allocation2 + $0x60] sm:$0xff] %v430
    %596 = vst [vmem:[#allocation2 + $0x68] sm:$0xff] %v432
    %597 = vst [vmem:[#allocation2 + $0x70] sm:$0xff] %v543
    %598 = vst [vmem:[#allocation2 + $0x78] sm:$0xff] %v545
    %599 = vst [vmem:[#allocation2 + $0x80] sm:$0xff] %v210
    %600 = vst [vmem:[#allocation2 + $0x88] sm:$0xff] %v212
    %601 = vst [vmem:[#allocation2 + $0x90] sm:$0xff] %v323
    %602 = vst [vmem:[#allocation2 + $0x98] sm:$0xff] %v325
    %603 = vst [vmem:[#allocation2 + $0xa0] sm:$0xff] %v436
    %604 = vst [vmem:[#allocation2 + $0xa8] sm:$0xff] %v438
    %605 = vst [vmem:[#allocation2 + $0xb0] sm:$0xff] %v549
    %606 = vst [vmem:[#allocation2 + $0xb8] sm:$0xff] %v551
    %607 = vst [vmem:[#allocation2 + $0xc0] sm:$0xff] %v216
    %608 = vst [vmem:[#allocation2 + $0xc8] sm:$0xff] %v218
    %609 = vst [vmem:[#allocation2 + $0xd0] sm:$0xff] %v329
    %610 = vst [vmem:[#allocation2 + $0xd8] sm:$0xff] %v331
    %611 = vst [vmem:[#allocation2 + $0xe0] sm:$0xff] %v442
    %612 = vst [vmem:[#allocation2 + $0xe8] sm:$0xff] %v444
    %613 = vst [vmem:[#allocation2 + $0xf0] sm:$0xff] %v555
    %614 = vst [vmem:[#allocation2 + $0xf8] sm:$0xff] %v557
    %615 = vst [vmem:[#allocation2 + $0x100] sm:$0xff] %v222
    %616 = vst [vmem:[#allocation2 + $0x108] sm:$0xff] %v224
    %617 = vst [vmem:[#allocation2 + $0x110] sm:$0xff] %v335
    %618 = vst [vmem:[#allocation2 + $0x118] sm:$0xff] %v337
    %619 = vst [vmem:[#allocation2 + $0x120] sm:$0xff] %v448
    %620 = vst [vmem:[#allocation2 + $0x128] sm:$0xff] %v450
    %621 = vst [vmem:[#allocation2 + $0x130] sm:$0xff] %v561
    %622 = vst [vmem:[#allocation2 + $0x138] sm:$0xff] %v563
    %623 = vst [vmem:[#allocation2 + $0x140] sm:$0xff] %v228
    %624 = vst [vmem:[#allocation2 + $0x148] sm:$0xff] %v230
    %625 = vst [vmem:[#allocation2 + $0x150] sm:$0xff] %v341
    %626 = vst [vmem:[#allocation2 + $0x158] sm:$0xff] %v343
    %627 = vst [vmem:[#allocation2 + $0x160] sm:$0xff] %v454
    %628 = vst [vmem:[#allocation2 + $0x168] sm:$0xff] %v456
    %629 = vst [vmem:[#allocation2 + $0x170] sm:$0xff] %v567
    %630 = vst [vmem:[#allocation2 + $0x178] sm:$0xff] %v569
    %631 = vst [vmem:[#allocation2 + $0x180] sm:$0xff] %v234
    %632 = vst [vmem:[#allocation2 + $0x188] sm:$0xff] %v236
    %633 = vst [vmem:[#allocation2 + $0x190] sm:$0xff] %v347
    %634 = vst [vmem:[#allocation2 + $0x198] sm:$0xff] %v349
    %635 = vst [vmem:[#allocation2 + $0x1a0] sm:$0xff] %v460
    %636 = vst [vmem:[#allocation2 + $0x1a8] sm:$0xff] %v462
    %637 = vst [vmem:[#allocation2 + $0x1b0] sm:$0xff] %v573
    %638 = vst [vmem:[#allocation2 + $0x1b8] sm:$0xff] %v575
    %639 = vst [vmem:[#allocation2 + $0x1c0] sm:$0xff] %v240
    %640 = vst [vmem:[#allocation2 + $0x1c8] sm:$0xff] %v242
    %641 = vst [vmem:[#allocation2 + $0x1d0] sm:$0xff] %v353
    %642 = vst [vmem:[#allocation2 + $0x1d8] sm:$0xff] %v355
    %643 = vst [vmem:[#allocation2 + $0x1e0] sm:$0xff] %v466
    %644 = vst [vmem:[#allocation2 + $0x1e8] sm:$0xff] %v468
    %645 = vst [vmem:[#allocation2 + $0x1f0] sm:$0xff] %v579
    %646 = vst [vmem:[#allocation2 + $0x1f8] sm:$0xff] %v581
    %p647 = scmp.eq.s32.totalorder 0, 0
    // Predicated region
    $region26: #{lstm_classifier_forward.1} parent=1 // pred_check
      %p648 = pneg %p647
    $region27: #{lstm_classifier_forward.1} parent=1 // pred_check_branch
      %650 = sbr.rel (%p648) target = $region29
    $region28: #{lstm_classifier_forward.1} parent=1 // pred_region
      %651 = vst [vmem:[#allocation3] sm:$0xff] 0.0
      %652 = vst [vmem:[#allocation3 + $0x8] sm:$0xff] 0.0
      %653 = vst [vmem:[#allocation4] sm:$0xff] 0.0
      %654 = vst [vmem:[#allocation4 + $0x8] sm:$0xff] 0.0
    $region29: #{lstm_classifier_forward.1} parent=1 // pred_fallthru
      _
    %v655 = vld [vmem:[#allocation3] sm:$0xff]
    %v656 = vld [vmem:[#allocation3 + $0x8] sm:$0xff]
    %v657 = vld [vmem:[#allocation4] sm:$0xff]
    %v658 = vld [vmem:[#allocation4 + $0x8] sm:$0xff]
    %s659 = smul.u32 0, 8
    %s660 = smul.addr %s659, 8
    %s661 = scalar_lea.vmem [#allocation2], %s660
    %v662 = vld [vmem:[%s661] sm:$0xff]
    %v663 = vld [vmem:[%s661 + $0x8] sm:$0xff]
    %v664 = vld [vmem:[%s661 + $0x10] sm:$0xff]
    %v665 = vld [vmem:[%s661 + $0x18] sm:$0xff]
    %v666 = vld [vmem:[%s661 + $0x20] sm:$0xff]
    %v667 = vld [vmem:[%s661 + $0x28] sm:$0xff]
    %v668 = vld [vmem:[%s661 + $0x30] sm:$0xff]
    %v669 = vld [vmem:[%s661 + $0x38] sm:$0xff]
    %v670 = vld [vmem:[%s2] sm:$0xff]
    %v671 = vld [vmem:[%s2 + $0x8] sm:$0xff]
    %v672 = vld [vmem:[%s2 + $0x10] sm:$0xff]
    %v673 = vld [vmem:[%s2 + $0x18] sm:$0xff]
    %v674 = vld [vmem:[%s2 + $0x20] sm:$0xff]
    %v675 = vld [vmem:[%s2 + $0x28] sm:$0xff]
    %v676 = vld [vmem:[%s2 + $0x30] sm:$0xff]
    %v677 = vld [vmem:[%s2 + $0x38] sm:$0xff]
    %v678 = vld [vmem:[%s2 + $0x40] sm:$0xff]
    %v679 = vld [vmem:[%s2 + $0x48] sm:$0xff]
    %v680 = vld [vmem:[%s2 + $0x50] sm:$0xff]
    %v681 = vld [vmem:[%s2 + $0x58] sm:$0xff]
    %v682 = vld [vmem:[%s2 + $0x60] sm:$0xff]
    %v683 = vld [vmem:[%s2 + $0x68] sm:$0xff]
    %v684 = vld [vmem:[%s2 + $0x70] sm:$0xff]
    %v685 = vld [vmem:[%s2 + $0x78] sm:$0xff]
    %v686 = vld [vmem:[%s2 + $0x80] sm:$0xff]
    %v687 = vld [vmem:[%s2 + $0x88] sm:$0xff]
    %v688 = vld [vmem:[%s2 + $0x90] sm:$0xff]
    %v689 = vld [vmem:[%s2 + $0x98] sm:$0xff]
    %v690 = vld [vmem:[%s2 + $0xa0] sm:$0xff]
    %v691 = vld [vmem:[%s2 + $0xa8] sm:$0xff]
    %v692 = vld [vmem:[%s2 + $0xb0] sm:$0xff]
    %v693 = vld [vmem:[%s2 + $0xb8] sm:$0xff]
    %v694 = vld [vmem:[%s2 + $0xc0] sm:$0xff]
    %v695 = vld [vmem:[%s2 + $0xc8] sm:$0xff]
    %v696 = vld [vmem:[%s2 + $0xd0] sm:$0xff]
    %v697 = vld [vmem:[%s2 + $0xd8] sm:$0xff]
    %v698 = vld [vmem:[%s2 + $0xe0] sm:$0xff]
    %v699 = vld [vmem:[%s2 + $0xe8] sm:$0xff]
    %v700 = vld [vmem:[%s2 + $0xf0] sm:$0xff]
    %v701 = vld [vmem:[%s2 + $0xf8] sm:$0xff]
    %v702 = vld [vmem:[%s2 + $0x100] sm:$0xff]
    %v703 = vld [vmem:[%s2 + $0x108] sm:$0xff]
    %v704 = vld [vmem:[%s2 + $0x110] sm:$0xff]
    %v705 = vld [vmem:[%s2 + $0x118] sm:$0xff]
    %v706 = vld [vmem:[%s2 + $0x120] sm:$0xff]
    %v707 = vld [vmem:[%s2 + $0x128] sm:$0xff]
    %v708 = vld [vmem:[%s2 + $0x130] sm:$0xff]
    %v709 = vld [vmem:[%s2 + $0x138] sm:$0xff]
    %v710 = vld [vmem:[%s2 + $0x140] sm:$0xff]
    %v711 = vld [vmem:[%s2 + $0x148] sm:$0xff]
    %v712 = vld [vmem:[%s2 + $0x150] sm:$0xff]
    %v713 = vld [vmem:[%s2 + $0x158] sm:$0xff]
    %v714 = vld [vmem:[%s2 + $0x160] sm:$0xff]
    %v715 = vld [vmem:[%s2 + $0x168] sm:$0xff]
    %v716 = vld [vmem:[%s2 + $0x170] sm:$0xff]
    %v717 = vld [vmem:[%s2 + $0x178] sm:$0xff]
    %v718 = vld [vmem:[%s2 + $0x180] sm:$0xff]
    %v719 = vld [vmem:[%s2 + $0x188] sm:$0xff]
    %v720 = vld [vmem:[%s2 + $0x190] sm:$0xff]
    %v721 = vld [vmem:[%s2 + $0x198] sm:$0xff]
    %v722 = vld [vmem:[%s2 + $0x1a0] sm:$0xff]
    %v723 = vld [vmem:[%s2 + $0x1a8] sm:$0xff]
    %v724 = vld [vmem:[%s2 + $0x1b0] sm:$0xff]
    %v725 = vld [vmem:[%s2 + $0x1b8] sm:$0xff]
    %v726 = vld [vmem:[%s2 + $0x1c0] sm:$0xff]
    %v727 = vld [vmem:[%s2 + $0x1c8] sm:$0xff]
    %v728 = vld [vmem:[%s2 + $0x1d0] sm:$0xff]
    %v729 = vld [vmem:[%s2 + $0x1d8] sm:$0xff]
    %v730 = vld [vmem:[%s2 + $0x1e0] sm:$0xff]
    %v731 = vld [vmem:[%s2 + $0x1e8] sm:$0xff]
    %v732 = vld [vmem:[%s2 + $0x1f0] sm:$0xff]
    %v733 = vld [vmem:[%s2 + $0x1f8] sm:$0xff]
    %v734 = vld [vmem:[%s2 + $0x200] sm:$0xff]
    %v735 = vld [vmem:[%s2 + $0x208] sm:$0xff]
    %v736 = vld [vmem:[%s2 + $0x210] sm:$0xff]
    %v737 = vld [vmem:[%s2 + $0x218] sm:$0xff]
    %v738 = vld [vmem:[%s2 + $0x220] sm:$0xff]
    %v739 = vld [vmem:[%s2 + $0x228] sm:$0xff]
    %v740 = vld [vmem:[%s2 + $0x230] sm:$0xff]
    %v741 = vld [vmem:[%s2 + $0x238] sm:$0xff]
    %v742 = vld [vmem:[%s2 + $0x240] sm:$0xff]
    %v743 = vld [vmem:[%s2 + $0x248] sm:$0xff]
    %v744 = vld [vmem:[%s2 + $0x250] sm:$0xff]
    %v745 = vld [vmem:[%s2 + $0x258] sm:$0xff]
    %v746 = vld [vmem:[%s2 + $0x260] sm:$0xff]
    %v747 = vld [vmem:[%s2 + $0x268] sm:$0xff]
    %v748 = vld [vmem:[%s2 + $0x270] sm:$0xff]
    %v749 = vld [vmem:[%s2 + $0x278] sm:$0xff]
    %v750 = vld [vmem:[%s2 + $0x280] sm:$0xff]
    %v751 = vld [vmem:[%s2 + $0x288] sm:$0xff]
    %v752 = vld [vmem:[%s2 + $0x290] sm:$0xff]
    %v753 = vld [vmem:[%s2 + $0x298] sm:$0xff]
    %v754 = vld [vmem:[%s2 + $0x2a0] sm:$0xff]
    %v755 = vld [vmem:[%s2 + $0x2a8] sm:$0xff]
    %v756 = vld [vmem:[%s2 + $0x2b0] sm:$0xff]
    %v757 = vld [vmem:[%s2 + $0x2b8] sm:$0xff]
    %v758 = vld [vmem:[%s2 + $0x2c0] sm:$0xff]
    %v759 = vld [vmem:[%s2 + $0x2c8] sm:$0xff]
    %v760 = vld [vmem:[%s2 + $0x2d0] sm:$0xff]
    %v761 = vld [vmem:[%s2 + $0x2d8] sm:$0xff]
    %v762 = vld [vmem:[%s2 + $0x2e0] sm:$0xff]
    %v763 = vld [vmem:[%s2 + $0x2e8] sm:$0xff]
    %v764 = vld [vmem:[%s2 + $0x2f0] sm:$0xff]
    %v765 = vld [vmem:[%s2 + $0x2f8] sm:$0xff]
    %v766 = vld [vmem:[%s2 + $0x300] sm:$0xff]
    %v767 = vld [vmem:[%s2 + $0x308] sm:$0xff]
    %v768 = vld [vmem:[%s2 + $0x310] sm:$0xff]
    %v769 = vld [vmem:[%s2 + $0x318] sm:$0xff]
    %v770 = vld [vmem:[%s2 + $0x320] sm:$0xff]
    %v771 = vld [vmem:[%s2 + $0x328] sm:$0xff]
    %v772 = vld [vmem:[%s2 + $0x330] sm:$0xff]
    %v773 = vld [vmem:[%s2 + $0x338] sm:$0xff]
    %v774 = vld [vmem:[%s2 + $0x340] sm:$0xff]
    %v775 = vld [vmem:[%s2 + $0x348] sm:$0xff]
    %v776 = vld [vmem:[%s2 + $0x350] sm:$0xff]
    %v777 = vld [vmem:[%s2 + $0x358] sm:$0xff]
    %v778 = vld [vmem:[%s2 + $0x360] sm:$0xff]
    %v779 = vld [vmem:[%s2 + $0x368] sm:$0xff]
    %v780 = vld [vmem:[%s2 + $0x370] sm:$0xff]
    %v781 = vld [vmem:[%s2 + $0x378] sm:$0xff]
    %v782 = vld [vmem:[%s2 + $0x380] sm:$0xff]
    %v783 = vld [vmem:[%s2 + $0x388] sm:$0xff]
    %v784 = vld [vmem:[%s2 + $0x390] sm:$0xff]
    %v785 = vld [vmem:[%s2 + $0x398] sm:$0xff]
    %v786 = vld [vmem:[%s2 + $0x3a0] sm:$0xff]
    %v787 = vld [vmem:[%s2 + $0x3a8] sm:$0xff]
    %v788 = vld [vmem:[%s2 + $0x3b0] sm:$0xff]
    %v789 = vld [vmem:[%s2 + $0x3b8] sm:$0xff]
    %v790 = vld [vmem:[%s2 + $0x3c0] sm:$0xff]
    %v791 = vld [vmem:[%s2 + $0x3c8] sm:$0xff]
    %v792 = vld [vmem:[%s2 + $0x3d0] sm:$0xff]
    %v793 = vld [vmem:[%s2 + $0x3d8] sm:$0xff]
    %v794 = vld [vmem:[%s2 + $0x3e0] sm:$0xff]
    %v795 = vld [vmem:[%s2 + $0x3e8] sm:$0xff]
    %v796 = vld [vmem:[%s2 + $0x3f0] sm:$0xff]
    %v797 = vld [vmem:[%s2 + $0x3f8] sm:$0xff]
    %v798 = vld [vmem:[%s2 + $0x400] sm:$0xff]
    %v799 = vld [vmem:[%s2 + $0x408] sm:$0xff]
    %v800 = vld [vmem:[%s2 + $0x410] sm:$0xff]
    %v801 = vld [vmem:[%s2 + $0x418] sm:$0xff]
    %v802 = vld [vmem:[%s2 + $0x420] sm:$0xff]
    %v803 = vld [vmem:[%s2 + $0x428] sm:$0xff]
    %v804 = vld [vmem:[%s2 + $0x430] sm:$0xff]
    %v805 = vld [vmem:[%s2 + $0x438] sm:$0xff]
    %v806 = vld [vmem:[%s2 + $0x440] sm:$0xff]
    %v807 = vld [vmem:[%s2 + $0x448] sm:$0xff]
    %v808 = vld [vmem:[%s2 + $0x450] sm:$0xff]
    %v809 = vld [vmem:[%s2 + $0x458] sm:$0xff]
    %v810 = vld [vmem:[%s2 + $0x460] sm:$0xff]
    %v811 = vld [vmem:[%s2 + $0x468] sm:$0xff]
    %v812 = vld [vmem:[%s2 + $0x470] sm:$0xff]
    %v813 = vld [vmem:[%s2 + $0x478] sm:$0xff]
    %v814 = vld [vmem:[%s2 + $0x480] sm:$0xff]
    %v815 = vld [vmem:[%s2 + $0x488] sm:$0xff]
    %v816 = vld [vmem:[%s2 + $0x490] sm:$0xff]
    %v817 = vld [vmem:[%s2 + $0x498] sm:$0xff]
    %v818 = vld [vmem:[%s2 + $0x4a0] sm:$0xff]
    %v819 = vld [vmem:[%s2 + $0x4a8] sm:$0xff]
    %v820 = vld [vmem:[%s2 + $0x4b0] sm:$0xff]
    %v821 = vld [vmem:[%s2 + $0x4b8] sm:$0xff]
    %v822 = vld [vmem:[%s2 + $0x4c0] sm:$0xff]
    %v823 = vld [vmem:[%s2 + $0x4c8] sm:$0xff]
    %v824 = vld [vmem:[%s2 + $0x4d0] sm:$0xff]
    %v825 = vld [vmem:[%s2 + $0x4d8] sm:$0xff]
    %v826 = vld [vmem:[%s2 + $0x4e0] sm:$0xff]
    %v827 = vld [vmem:[%s2 + $0x4e8] sm:$0xff]
    %v828 = vld [vmem:[%s2 + $0x4f0] sm:$0xff]
    %v829 = vld [vmem:[%s2 + $0x4f8] sm:$0xff]
    %v830 = vld [vmem:[%s2 + $0x500] sm:$0xff]
    %v831 = vld [vmem:[%s2 + $0x508] sm:$0xff]
    %v832 = vld [vmem:[%s2 + $0x510] sm:$0xff]
    %v833 = vld [vmem:[%s2 + $0x518] sm:$0xff]
    %v834 = vld [vmem:[%s2 + $0x520] sm:$0xff]
    %v835 = vld [vmem:[%s2 + $0x528] sm:$0xff]
    %v836 = vld [vmem:[%s2 + $0x530] sm:$0xff]
    %v837 = vld [vmem:[%s2 + $0x538] sm:$0xff]
    %v838 = vld [vmem:[%s2 + $0x540] sm:$0xff]
    %v839 = vld [vmem:[%s2 + $0x548] sm:$0xff]
    %v840 = vld [vmem:[%s2 + $0x550] sm:$0xff]
    %v841 = vld [vmem:[%s2 + $0x558] sm:$0xff]
    %v842 = vld [vmem:[%s2 + $0x560] sm:$0xff]
    %v843 = vld [vmem:[%s2 + $0x568] sm:$0xff]
    %v844 = vld [vmem:[%s2 + $0x570] sm:$0xff]
    %v845 = vld [vmem:[%s2 + $0x578] sm:$0xff]
    %v846 = vld [vmem:[%s2 + $0x580] sm:$0xff]
    %v847 = vld [vmem:[%s2 + $0x588] sm:$0xff]
    %v848 = vld [vmem:[%s2 + $0x590] sm:$0xff]
    %v849 = vld [vmem:[%s2 + $0x598] sm:$0xff]
    %v850 = vld [vmem:[%s2 + $0x5a0] sm:$0xff]
    %v851 = vld [vmem:[%s2 + $0x5a8] sm:$0xff]
    %v852 = vld [vmem:[%s2 + $0x5b0] sm:$0xff]
    %v853 = vld [vmem:[%s2 + $0x5b8] sm:$0xff]
    %v854 = vld [vmem:[%s2 + $0x5c0] sm:$0xff]
    %v855 = vld [vmem:[%s2 + $0x5c8] sm:$0xff]
    %v856 = vld [vmem:[%s2 + $0x5d0] sm:$0xff]
    %v857 = vld [vmem:[%s2 + $0x5d8] sm:$0xff]
    %v858 = vld [vmem:[%s2 + $0x5e0] sm:$0xff]
    %v859 = vld [vmem:[%s2 + $0x5e8] sm:$0xff]
    %v860 = vld [vmem:[%s2 + $0x5f0] sm:$0xff]
    %v861 = vld [vmem:[%s2 + $0x5f8] sm:$0xff]
    %v862 = vld [vmem:[%s2 + $0x600] sm:$0xff]
    %v863 = vld [vmem:[%s2 + $0x608] sm:$0xff]
    %v864 = vld [vmem:[%s2 + $0x610] sm:$0xff]
    %v865 = vld [vmem:[%s2 + $0x618] sm:$0xff]
    %v866 = vld [vmem:[%s2 + $0x620] sm:$0xff]
    %v867 = vld [vmem:[%s2 + $0x628] sm:$0xff]
    %v868 = vld [vmem:[%s2 + $0x630] sm:$0xff]
    %v869 = vld [vmem:[%s2 + $0x638] sm:$0xff]
    %v870 = vld [vmem:[%s2 + $0x640] sm:$0xff]
    %v871 = vld [vmem:[%s2 + $0x648] sm:$0xff]
    %v872 = vld [vmem:[%s2 + $0x650] sm:$0xff]
    %v873 = vld [vmem:[%s2 + $0x658] sm:$0xff]
    %v874 = vld [vmem:[%s2 + $0x660] sm:$0xff]
    %v875 = vld [vmem:[%s2 + $0x668] sm:$0xff]
    %v876 = vld [vmem:[%s2 + $0x670] sm:$0xff]
    %v877 = vld [vmem:[%s2 + $0x678] sm:$0xff]
    %v878 = vld [vmem:[%s2 + $0x680] sm:$0xff]
    %v879 = vld [vmem:[%s2 + $0x688] sm:$0xff]
    %v880 = vld [vmem:[%s2 + $0x690] sm:$0xff]
    %v881 = vld [vmem:[%s2 + $0x698] sm:$0xff]
    %v882 = vld [vmem:[%s2 + $0x6a0] sm:$0xff]
    %v883 = vld [vmem:[%s2 + $0x6a8] sm:$0xff]
    %v884 = vld [vmem:[%s2 + $0x6b0] sm:$0xff]
    %v885 = vld [vmem:[%s2 + $0x6b8] sm:$0xff]
    %v886 = vld [vmem:[%s2 + $0x6c0] sm:$0xff]
    %v887 = vld [vmem:[%s2 + $0x6c8] sm:$0xff]
    %v888 = vld [vmem:[%s2 + $0x6d0] sm:$0xff]
    %v889 = vld [vmem:[%s2 + $0x6d8] sm:$0xff]
    %v890 = vld [vmem:[%s2 + $0x6e0] sm:$0xff]
    %v891 = vld [vmem:[%s2 + $0x6e8] sm:$0xff]
    %v892 = vld [vmem:[%s2 + $0x6f0] sm:$0xff]
    %v893 = vld [vmem:[%s2 + $0x6f8] sm:$0xff]
    %v894 = vld [vmem:[%s2 + $0x700] sm:$0xff]
    %v895 = vld [vmem:[%s2 + $0x708] sm:$0xff]
    %v896 = vld [vmem:[%s2 + $0x710] sm:$0xff]
    %v897 = vld [vmem:[%s2 + $0x718] sm:$0xff]
    %v898 = vld [vmem:[%s2 + $0x720] sm:$0xff]
    %v899 = vld [vmem:[%s2 + $0x728] sm:$0xff]
    %v900 = vld [vmem:[%s2 + $0x730] sm:$0xff]
    %v901 = vld [vmem:[%s2 + $0x738] sm:$0xff]
    %v902 = vld [vmem:[%s2 + $0x740] sm:$0xff]
    %v903 = vld [vmem:[%s2 + $0x748] sm:$0xff]
    %v904 = vld [vmem:[%s2 + $0x750] sm:$0xff]
    %v905 = vld [vmem:[%s2 + $0x758] sm:$0xff]
    %v906 = vld [vmem:[%s2 + $0x760] sm:$0xff]
    %v907 = vld [vmem:[%s2 + $0x768] sm:$0xff]
    %v908 = vld [vmem:[%s2 + $0x770] sm:$0xff]
    %v909 = vld [vmem:[%s2 + $0x778] sm:$0xff]
    %v910 = vld [vmem:[%s2 + $0x780] sm:$0xff]
    %v911 = vld [vmem:[%s2 + $0x788] sm:$0xff]
    %v912 = vld [vmem:[%s2 + $0x790] sm:$0xff]
    %v913 = vld [vmem:[%s2 + $0x798] sm:$0xff]
    %v914 = vld [vmem:[%s2 + $0x7a0] sm:$0xff]
    %v915 = vld [vmem:[%s2 + $0x7a8] sm:$0xff]
    %v916 = vld [vmem:[%s2 + $0x7b0] sm:$0xff]
    %v917 = vld [vmem:[%s2 + $0x7b8] sm:$0xff]
    %v918 = vld [vmem:[%s2 + $0x7c0] sm:$0xff]
    %v919 = vld [vmem:[%s2 + $0x7c8] sm:$0xff]
    %v920 = vld [vmem:[%s2 + $0x7d0] sm:$0xff]
    %v921 = vld [vmem:[%s2 + $0x7d8] sm:$0xff]
    %v922 = vld [vmem:[%s2 + $0x7e0] sm:$0xff]
    %v923 = vld [vmem:[%s2 + $0x7e8] sm:$0xff]
    %v924 = vld [vmem:[%s2 + $0x7f0] sm:$0xff]
    %v925 = vld [vmem:[%s2 + $0x7f8] sm:$0xff]
    %926 = vmatprep.subr.mxu0 %v671
    %927 = vmatpush1.msra.mxu0 %v670
    %928 = vmatprep.subr.mxu0 %v679
    %929 = vmatpush1.msra.mxu0 %v678
    %930 = vmatprep.subr.mxu0 %v687
    %931 = vmatpush1.msra.mxu0 %v686
    %932 = vmatprep.subr.mxu0 %v695
    %933 = vmatpush1.msra.mxu0 %v694
    %934 = vmatprep.subr.mxu0 %v703
    %935 = vmatpush1.msra.mxu0 %v702
    %936 = vmatprep.subr.mxu0 %v711
    %937 = vmatpush1.msra.mxu0 %v710
    %938 = vmatprep.subr.mxu0 %v719
    %939 = vmatpush1.msra.mxu0 %v718
    %940 = vmatprep.subr.mxu0 %v727
    %941 = vmatpush1.msra.mxu0 %v726
    %942 = vmatprep.subr.mxu0 %v735
    %943 = vmatpush1.msra.mxu0 %v734
    %944 = vmatprep.subr.mxu0 %v743
    %945 = vmatpush1.msra.mxu0 %v742
    %946 = vmatprep.subr.mxu0 %v751
    %947 = vmatpush1.msra.mxu0 %v750
    %948 = vmatprep.subr.mxu0 %v759
    %949 = vmatpush1.msra.mxu0 %v758
    %950 = vmatprep.subr.mxu0 %v767
    %951 = vmatpush1.msra.mxu0 %v766
    %952 = vmatprep.subr.mxu0 %v775
    %953 = vmatpush1.msra.mxu0 %v774
    %954 = vmatprep.subr.mxu0 %v783
    %955 = vmatpush1.msra.mxu0 %v782
    %956 = vmatprep.subr.mxu0 %v791
    %957 = vmatpush1.msra.mxu0 %v790
    %958 = vmatprep.subr.mxu0 %v799
    %959 = vmatpush1.msra.mxu0 %v798
    %960 = vmatprep.subr.mxu0 %v807
    %961 = vmatpush1.msra.mxu0 %v806
    %962 = vmatprep.subr.mxu0 %v815
    %963 = vmatpush1.msra.mxu0 %v814
    %964 = vmatprep.subr.mxu0 %v823
    %965 = vmatpush1.msra.mxu0 %v822
    %966 = vmatprep.subr.mxu0 %v831
    %967 = vmatpush1.msra.mxu0 %v830
    %968 = vmatprep.subr.mxu0 %v839
    %969 = vmatpush1.msra.mxu0 %v838
    %970 = vmatprep.subr.mxu0 %v847
    %971 = vmatpush1.msra.mxu0 %v846
    %972 = vmatprep.subr.mxu0 %v855
    %973 = vmatpush1.msra.mxu0 %v854
    %974 = vmatprep.subr.mxu0 %v863
    %975 = vmatpush1.msra.mxu0 %v862
    %976 = vmatprep.subr.mxu0 %v871
    %977 = vmatpush1.msra.mxu0 %v870
    %978 = vmatprep.subr.mxu0 %v879
    %979 = vmatpush1.msra.mxu0 %v878
    %980 = vmatprep.subr.mxu0 %v887
    %981 = vmatpush1.msra.mxu0 %v886
    %982 = vmatprep.subr.mxu0 %v895
    %983 = vmatpush1.msra.mxu0 %v894
    %984 = vmatprep.subr.mxu0 %v903
    %985 = vmatpush1.msra.mxu0 %v902
    %986 = vmatprep.subr.mxu0 %v911
    %987 = vmatpush1.msra.mxu0 %v910
    %988 = vmatprep.subr.mxu0 %v919
    %989 = vmatpush1.msra.mxu0 %v918
    %990 = vmatprep.mubr.f32.mxu0 %v656
    %991 = vmatmul.mubr.f32.gmra.mrb[0].mxu0 %v655
    %v992 = vpop.f32.mrb[0].mxu0
    %v993 = vadd.f32 0.0, %v992
    %v994 = vpop.f32.mrb[0].mxu0
    %v995 = vadd.f32 0.0, %v994
    %996 = vdwg.mxu0
    %997 = vmatprep.subr.mxu0 %v673
    %998 = vmatpush1.msra.mxu0 %v672
    %999 = vmatprep.subr.mxu0 %v681
    %1000 = vmatpush1.msra.mxu0 %v680
    %1001 = vmatprep.subr.mxu0 %v689
    %1002 = vmatpush1.msra.mxu0 %v688
    %1003 = vmatprep.subr.mxu0 %v697
    %1004 = vmatpush1.msra.mxu0 %v696
    %1005 = vmatprep.subr.mxu0 %v705
    %1006 = vmatpush1.msra.mxu0 %v704
    %1007 = vmatprep.subr.mxu0 %v713
    %1008 = vmatpush1.msra.mxu0 %v712
    %1009 = vmatprep.subr.mxu0 %v721
    %1010 = vmatpush1.msra.mxu0 %v720
    %1011 = vmatprep.subr.mxu0 %v729
    %1012 = vmatpush1.msra.mxu0 %v728
    %1013 = vmatprep.subr.mxu0 %v737
    %1014 = vmatpush1.msra.mxu0 %v736
    %1015 = vmatprep.subr.mxu0 %v745
    %1016 = vmatpush1.msra.mxu0 %v744
    %1017 = vmatprep.subr.mxu0 %v753
    %1018 = vmatpush1.msra.mxu0 %v752
    %1019 = vmatprep.subr.mxu0 %v761
    %1020 = vmatpush1.msra.mxu0 %v760
    %1021 = vmatprep.subr.mxu0 %v769
    %1022 = vmatpush1.msra.mxu0 %v768
    %1023 = vmatprep.subr.mxu0 %v777
    %1024 = vmatpush1.msra.mxu0 %v776
    %1025 = vmatprep.subr.mxu0 %v785
    %1026 = vmatpush1.msra.mxu0 %v784
    %1027 = vmatprep.subr.mxu0 %v793
    %1028 = vmatpush1.msra.mxu0 %v792
    %1029 = vmatprep.subr.mxu0 %v801
    %1030 = vmatpush1.msra.mxu0 %v800
    %1031 = vmatprep.subr.mxu0 %v809
    %1032 = vmatpush1.msra.mxu0 %v808
    %1033 = vmatprep.subr.mxu0 %v817
    %1034 = vmatpush1.msra.mxu0 %v816
    %1035 = vmatprep.subr.mxu0 %v825
    %1036 = vmatpush1.msra.mxu0 %v824
    %1037 = vmatprep.subr.mxu0 %v833
    %1038 = vmatpush1.msra.mxu0 %v832
    %1039 = vmatprep.subr.mxu0 %v841
    %1040 = vmatpush1.msra.mxu0 %v840
    %1041 = vmatprep.subr.mxu0 %v849
    %1042 = vmatpush1.msra.mxu0 %v848
    %1043 = vmatprep.subr.mxu0 %v857
    %1044 = vmatpush1.msra.mxu0 %v856
    %1045 = vmatprep.subr.mxu0 %v865
    %1046 = vmatpush1.msra.mxu0 %v864
    %1047 = vmatprep.subr.mxu0 %v873
    %1048 = vmatpush1.msra.mxu0 %v872
    %1049 = vmatprep.subr.mxu0 %v881
    %1050 = vmatpush1.msra.mxu0 %v880
    %1051 = vmatprep.subr.mxu0 %v889
    %1052 = vmatpush1.msra.mxu0 %v888
    %1053 = vmatprep.subr.mxu0 %v897
    %1054 = vmatpush1.msra.mxu0 %v896
    %1055 = vmatprep.subr.mxu0 %v905
    %1056 = vmatpush1.msra.mxu0 %v904
    %1057 = vmatprep.subr.mxu0 %v913
    %1058 = vmatpush1.msra.mxu0 %v912
    %1059 = vmatprep.subr.mxu0 %v921
    %1060 = vmatpush1.msra.mxu0 %v920
    %1061 = vmatprep.mubr.f32.mxu0 %v656
    %1062 = vmatmul.mubr.f32.gmra.mrb[0].mxu0 %v655
    %v1063 = vpop.f32.mrb[0].mxu0
    %v1064 = vadd.f32 0.0, %v1063
    %v1065 = vpop.f32.mrb[0].mxu0
    %v1066 = vadd.f32 0.0, %v1065
    %1067 = vdwg.mxu0
    %1068 = vmatprep.subr.mxu0 %v675
    %1069 = vmatpush1.msra.mxu0 %v674
    %1070 = vmatprep.subr.mxu0 %v683
    %1071 = vmatpush1.msra.mxu0 %v682
    %1072 = vmatprep.subr.mxu0 %v691
    %1073 = vmatpush1.msra.mxu0 %v690
    %1074 = vmatprep.subr.mxu0 %v699
    %1075 = vmatpush1.msra.mxu0 %v698
    %1076 = vmatprep.subr.mxu0 %v707
    %1077 = vmatpush1.msra.mxu0 %v706
    %1078 = vmatprep.subr.mxu0 %v715
    %1079 = vmatpush1.msra.mxu0 %v714
    %1080 = vmatprep.subr.mxu0 %v723
    %1081 = vmatpush1.msra.mxu0 %v722
    %1082 = vmatprep.subr.mxu0 %v731
    %1083 = vmatpush1.msra.mxu0 %v730
    %1084 = vmatprep.subr.mxu0 %v739
    %1085 = vmatpush1.msra.mxu0 %v738
    %1086 = vmatprep.subr.mxu0 %v747
    %1087 = vmatpush1.msra.mxu0 %v746
    %1088 = vmatprep.subr.mxu0 %v755
    %1089 = vmatpush1.msra.mxu0 %v754
    %1090 = vmatprep.subr.mxu0 %v763
    %1091 = vmatpush1.msra.mxu0 %v762
    %1092 = vmatprep.subr.mxu0 %v771
    %1093 = vmatpush1.msra.mxu0 %v770
    %1094 = vmatprep.subr.mxu0 %v779
    %1095 = vmatpush1.msra.mxu0 %v778
    %1096 = vmatprep.subr.mxu0 %v787
    %1097 = vmatpush1.msra.mxu0 %v786
    %1098 = vmatprep.subr.mxu0 %v795
    %1099 = vmatpush1.msra.mxu0 %v794
    %1100 = vmatprep.subr.mxu0 %v803
    %1101 = vmatpush1.msra.mxu0 %v802
    %1102 = vmatprep.subr.mxu0 %v811
    %1103 = vmatpush1.msra.mxu0 %v810
    %1104 = vmatprep.subr.mxu0 %v819
    %1105 = vmatpush1.msra.mxu0 %v818
    %1106 = vmatprep.subr.mxu0 %v827
    %1107 = vmatpush1.msra.mxu0 %v826
    %1108 = vmatprep.subr.mxu0 %v835
    %1109 = vmatpush1.msra.mxu0 %v834
    %1110 = vmatprep.subr.mxu0 %v843
    %1111 = vmatpush1.msra.mxu0 %v842
    %1112 = vmatprep.subr.mxu0 %v851
    %1113 = vmatpush1.msra.mxu0 %v850
    %1114 = vmatprep.subr.mxu0 %v859
    %1115 = vmatpush1.msra.mxu0 %v858
    %1116 = vmatprep.subr.mxu0 %v867
    %1117 = vmatpush1.msra.mxu0 %v866
    %1118 = vmatprep.subr.mxu0 %v875
    %1119 = vmatpush1.msra.mxu0 %v874
    %1120 = vmatprep.subr.mxu0 %v883
    %1121 = vmatpush1.msra.mxu0 %v882
    %1122 = vmatprep.subr.mxu0 %v891
    %1123 = vmatpush1.msra.mxu0 %v890
    %1124 = vmatprep.subr.mxu0 %v899
    %1125 = vmatpush1.msra.mxu0 %v898
    %1126 = vmatprep.subr.mxu0 %v907
    %1127 = vmatpush1.msra.mxu0 %v906
    %1128 = vmatprep.subr.mxu0 %v915
    %1129 = vmatpush1.msra.mxu0 %v914
    %1130 = vmatprep.subr.mxu0 %v923
    %1131 = vmatpush1.msra.mxu0 %v922
    %1132 = vmatprep.mubr.f32.mxu0 %v656
    %1133 = vmatmul.mubr.f32.gmra.mrb[0].mxu0 %v655
    %v1134 = vpop.f32.mrb[0].mxu0
    %v1135 = vadd.f32 0.0, %v1134
    %v1136 = vpop.f32.mrb[0].mxu0
    %v1137 = vadd.f32 0.0, %v1136
    %1138 = vdwg.mxu0
    %1139 = vmatprep.subr.mxu0 %v677
    %1140 = vmatpush1.msra.mxu0 %v676
    %1141 = vmatprep.subr.mxu0 %v685
    %1142 = vmatpush1.msra.mxu0 %v684
    %1143 = vmatprep.subr.mxu0 %v693
    %1144 = vmatpush1.msra.mxu0 %v692
    %1145 = vmatprep.subr.mxu0 %v701
    %1146 = vmatpush1.msra.mxu0 %v700
    %1147 = vmatprep.subr.mxu0 %v709
    %1148 = vmatpush1.msra.mxu0 %v708
    %1149 = vmatprep.subr.mxu0 %v717
    %1150 = vmatpush1.msra.mxu0 %v716
    %1151 = vmatprep.subr.mxu0 %v725
    %1152 = vmatpush1.msra.mxu0 %v724
    %1153 = vmatprep.subr.mxu0 %v733
    %1154 = vmatpush1.msra.mxu0 %v732
    %1155 = vmatprep.subr.mxu0 %v741
    %1156 = vmatpush1.msra.mxu0 %v740
    %1157 = vmatprep.subr.mxu0 %v749
    %1158 = vmatpush1.msra.mxu0 %v748
    %1159 = vmatprep.subr.mxu0 %v757
    %1160 = vmatpush1.msra.mxu0 %v756
    %1161 = vmatprep.subr.mxu0 %v765
    %1162 = vmatpush1.msra.mxu0 %v764
    %1163 = vmatprep.subr.mxu0 %v773
    %1164 = vmatpush1.msra.mxu0 %v772
    %1165 = vmatprep.subr.mxu0 %v781
    %1166 = vmatpush1.msra.mxu0 %v780
    %1167 = vmatprep.subr.mxu0 %v789
    %1168 = vmatpush1.msra.mxu0 %v788
    %1169 = vmatprep.subr.mxu0 %v797
    %1170 = vmatpush1.msra.mxu0 %v796
    %1171 = vmatprep.subr.mxu0 %v805
    %1172 = vmatpush1.msra.mxu0 %v804
    %1173 = vmatprep.subr.mxu0 %v813
    %1174 = vmatpush1.msra.mxu0 %v812
    %1175 = vmatprep.subr.mxu0 %v821
    %1176 = vmatpush1.msra.mxu0 %v820
    %1177 = vmatprep.subr.mxu0 %v829
    %1178 = vmatpush1.msra.mxu0 %v828
    %1179 = vmatprep.subr.mxu0 %v837
    %1180 = vmatpush1.msra.mxu0 %v836
    %1181 = vmatprep.subr.mxu0 %v845
    %1182 = vmatpush1.msra.mxu0 %v844
    %1183 = vmatprep.subr.mxu0 %v853
    %1184 = vmatpush1.msra.mxu0 %v852
    %1185 = vmatprep.subr.mxu0 %v861
    %1186 = vmatpush1.msra.mxu0 %v860
    %1187 = vmatprep.subr.mxu0 %v869
    %1188 = vmatpush1.msra.mxu0 %v868
    %1189 = vmatprep.subr.mxu0 %v877
    %1190 = vmatpush1.msra.mxu0 %v876
    %1191 = vmatprep.subr.mxu0 %v885
    %1192 = vmatpush1.msra.mxu0 %v884
    %1193 = vmatprep.subr.mxu0 %v893
    %1194 = vmatpush1.msra.mxu0 %v892
    %1195 = vmatprep.subr.mxu0 %v901
    %1196 = vmatpush1.msra.mxu0 %v900
    %1197 = vmatprep.subr.mxu0 %v909
    %1198 = vmatpush1.msra.mxu0 %v908
    %1199 = vmatprep.subr.mxu0 %v917
    %1200 = vmatpush1.msra.mxu0 %v916
    %1201 = vmatprep.subr.mxu0 %v925
    %1202 = vmatpush1.msra.mxu0 %v924
    %1203 = vmatprep.mubr.f32.mxu0 %v656
    %1204 = vmatmul.mubr.f32.gmra.mrb[0].mxu0 %v655
    %v1205 = vpop.f32.mrb[0].mxu0
    %v1206 = vadd.f32 0.0, %v1205
    %v1207 = vpop.f32.mrb[0].mxu0
    %v1208 = vadd.f32 0.0, %v1207
    %1209 = vdwg.mxu0
    %v1210 = vadd.f32 %v662, %v993
    %v1211 = vadd.f32 %v663, %v995
    %v1212 = vadd.f32 %v664, %v1064
    %v1213 = vadd.f32 %v665, %v1066
    %v1214 = vadd.f32 %v666, %v1135
    %v1215 = vadd.f32 %v667, %v1137
    %v1216 = vadd.f32 %v668, %v1206
    %v1217 = vadd.f32 %v669, %v1208
    %v1218 = vxor.u32 %v1210, 2147483648
    %v1219 = vxor.u32 %v1211, 2147483648
    %v1220 = vmul.f32 %v1218, 1.442695
    %v1221 = vpow.pop %v1220
    %v1222 = vmul.f32 %v1219, 1.442695
    %v1223 = vpow.pop %v1222
    %v1224 = vadd.f32 %v1221, 1.0
    %v1225 = vadd.f32 %v1223, 1.0
    %v1226 = vrcp.pop %v1224
    %v1227 = vmul.f32 1.0, %v1226
    %v1228 = vrcp.pop %v1225
    %v1229 = vmul.f32 1.0, %v1228
    %v1230 = vxor.u32 %v1212, 2147483648
    %v1231 = vxor.u32 %v1213, 2147483648
    %v1232 = vmul.f32 %v1230, 1.442695
    %v1233 = vpow.pop %v1232
    %v1234 = vmul.f32 %v1231, 1.442695
    %v1235 = vpow.pop %v1234
    %v1236 = vadd.f32 %v1233, 1.0
    %v1237 = vadd.f32 %v1235, 1.0
    %v1238 = vrcp.pop %v1236
    %v1239 = vmul.f32 1.0, %v1238
    %v1240 = vrcp.pop %v1237
    %v1241 = vmul.f32 1.0, %v1240
    %v1242 = vtanh.pop %v1214
    %v1243 = vtanh.pop %v1215
    %v1244 = vxor.u32 %v1216, 2147483648
    %v1245 = vxor.u32 %v1217, 2147483648
    %v1246 = vmul.f32 %v1244, 1.442695
    %v1247 = vpow.pop %v1246
    %v1248 = vmul.f32 %v1245, 1.442695
    %v1249 = vpow.pop %v1248
    %v1250 = vadd.f32 %v1247, 1.0
    %v1251 = vadd.f32 %v1249, 1.0
    %v1252 = vrcp.pop %v1250
    %v1253 = vmul.f32 1.0, %v1252
    %v1254 = vrcp.pop %v1251
    %v1255 = vmul.f32 1.0, %v1254
    %v1256 = vmul.f32 %v1239, %v657
    %v1257 = vmul.f32 %v1241, %v658
    %v1258 = vmul.f32 %v1227, %v1242
    %v1259 = vmul.f32 %v1229, %v1243
    %v1260 = vadd.f32 %v1256, %v1258
    %v1261 = vadd.f32 %v1257, %v1259
    %v1262 = vtanh.pop %v1260
    %v1263 = vtanh.pop %v1261
    %v1264 = vmul.f32 %v1253, %v1262
    %v1265 = vmul.f32 %v1255, %v1263
    %s1266 = smul.u32 1, 8
    %s1267 = smul.addr %s1266, 8
    %s1268 = scalar_lea.vmem [#allocation2], %s1267
    %v1269 = vld [vmem:[%s1268] sm:$0xff]
    %v1270 = vld [vmem:[%s1268 + $0x8] sm:$0xff]
    %v1271 = vld [vmem:[%s1268 + $0x10] sm:$0xff]
    %v1272 = vld [vmem:[%s1268 + $0x18] sm:$0xff]
    %v1273 = vld [vmem:[%s1268 + $0x20] sm:$0xff]
    %v1274 = vld [vmem:[%s1268 + $0x28] sm:$0xff]
    %v1275 = vld [vmem:[%s1268 + $0x30] sm:$0xff]
    %v1276 = vld [vmem:[%s1268 + $0x38] sm:$0xff]
    %1277 = vmatprep.subr.mxu0 %v671
    %1278 = vmatpush1.msra.mxu0 %v670
    %1279 = vmatprep.subr.mxu0 %v679
    %1280 = vmatpush1.msra.mxu0 %v678
    %1281 = vmatprep.subr.mxu0 %v687
    %1282 = vmatpush1.msra.mxu0 %v686
    %1283 = vmatprep.subr.mxu0 %v695
    %1284 = vmatpush1.msra.mxu0 %v694
    %1285 = vmatprep.subr.mxu0 %v703
    %1286 = vmatpush1.msra.mxu0 %v702
    %1287 = vmatprep.subr.mxu0 %v711
    %1288 = vmatpush1.msra.mxu0 %v710
    %1289 = vmatprep.subr.mxu0 %v719
    %1290 = vmatpush1.msra.mxu0 %v718
    %1291 = vmatprep.subr.mxu0 %v727
    %1292 = vmatpush1.msra.mxu0 %v726
    %1293 = vmatprep.subr.mxu0 %v735
    %1294 = vmatpush1.msra.mxu0 %v734
    %1295 = vmatprep.subr.mxu0 %v743
    %1296 = vmatpush1.msra.mxu0 %v742
    %1297 = vmatprep.subr.mxu0 %v751
    %1298 = vmatpush1.msra.mxu0 %v750
    %1299 = vmatprep.subr.mxu0 %v759
    %1300 = vmatpush1.msra.mxu0 %v758
    %1301 = vmatprep.subr.mxu0 %v767
    %1302 = vmatpush1.msra.mxu0 %v766
    %1303 = vmatprep.subr.mxu0 %v775
    %1304 = vmatpush1.msra.mxu0 %v774
    %1305 = vmatprep.subr.mxu0 %v783
    %1306 = vmatpush1.msra.mxu0 %v782
    %1307 = vmatprep.subr.mxu0 %v791
    %1308 = vmatpush1.msra.mxu0 %v790
    %1309 = vmatprep.subr.mxu0 %v799
    %1310 = vmatpush1.msra.mxu0 %v798
    %1311 = vmatprep.subr.mxu0 %v807
    %1312 = vmatpush1.msra.mxu0 %v806
    %1313 = vmatprep.subr.mxu0 %v815
    %1314 = vmatpush1.msra.mxu0 %v814
    %1315 = vmatprep.subr.mxu0 %v823
    %1316 = vmatpush1.msra.mxu0 %v822
    %1317 = vmatprep.subr.mxu0 %v831
    %1318 = vmatpush1.msra.mxu0 %v830
    %1319 = vmatprep.subr.mxu0 %v839
    %1320 = vmatpush1.msra.mxu0 %v838
    %1321 = vmatprep.subr.mxu0 %v847
    %1322 = vmatpush1.msra.mxu0 %v846
    %1323 = vmatprep.subr.mxu0 %v855
    %1324 = vmatpush1.msra.mxu0 %v854
    %1325 = vmatprep.subr.mxu0 %v863
    %1326 = vmatpush1.msra.mxu0 %v862
    %1327 = vmatprep.subr.mxu0 %v871
    %1328 = vmatpush1.msra.mxu0 %v870
    %1329 = vmatprep.subr.mxu0 %v879
    %1330 = vmatpush1.msra.mxu0 %v878
    %1331 = vmatprep.subr.mxu0 %v887
    %1332 = vmatpush1.msra.mxu0 %v886
    %1333 = vmatprep.subr.mxu0 %v895
    %1334 = vmatpush1.msra.mxu0 %v894
    %1335 = vmatprep.subr.mxu0 %v903
    %1336 = vmatpush1.msra.mxu0 %v902
    %1337 = vmatprep.subr.mxu0 %v911
    %1338 = vmatpush1.msra.mxu0 %v910
    %1339 = vmatprep.subr.mxu0 %v919
    %1340 = vmatpush1.msra.mxu0 %v918
    %1341 = vmatprep.mubr.f32.mxu0 %v1265
    %1342 = vmatmul.mubr.f32.gmra.mrb[0].mxu0 %v1264
    %v1343 = vpop.f32.mrb[0].mxu0
    %v1344 = vadd.f32 0.0, %v1343
    %v1345 = vpop.f32.mrb[0].mxu0
    %v1346 = vadd.f32 0.0, %v1345
    %1347 = vdwg.mxu0
    %1348 = vmatprep.subr.mxu0 %v673
    %1349 = vmatpush1.msra.mxu0 %v672
    %1350 = vmatprep.subr.mxu0 %v681
    %1351 = vmatpush1.msra.mxu0 %v680
    %1352 = vmatprep.subr.mxu0 %v689
    %1353 = vmatpush1.msra.mxu0 %v688
    %1354 = vmatprep.subr.mxu0 %v697
    %1355 = vmatpush1.msra.mxu0 %v696
    %1356 = vmatprep.subr.mxu0 %v705
    %1357 = vmatpush1.msra.mxu0 %v704
    %1358 = vmatprep.subr.mxu0 %v713
    %1359 = vmatpush1.msra.mxu0 %v712
    %1360 = vmatprep.subr.mxu0 %v721
    %1361 = vmatpush1.msra.mxu0 %v720
    %1362 = vmatprep.subr.mxu0 %v729
    %1363 = vmatpush1.msra.mxu0 %v728
    %1364 = vmatprep.subr.mxu0 %v737
    %1365 = vmatpush1.msra.mxu0 %v736
    %1366 = vmatprep.subr.mxu0 %v745
    %1367 = vmatpush1.msra.mxu0 %v744
    %1368 = vmatprep.subr.mxu0 %v753
    %1369 = vmatpush1.msra.mxu0 %v752
    %1370 = vmatprep.subr.mxu0 %v761
    %1371 = vmatpush1.msra.mxu0 %v760
    %1372 = vmatprep.subr.mxu0 %v769
    %1373 = vmatpush1.msra.mxu0 %v768
    %1374 = vmatprep.subr.mxu0 %v777
    %1375 = vmatpush1.msra.mxu0 %v776
    %1376 = vmatprep.subr.mxu0 %v785
    %1377 = vmatpush1.msra.mxu0 %v784
    %1378 = vmatprep.subr.mxu0 %v793
    %1379 = vmatpush1.msra.mxu0 %v792
    %1380 = vmatprep.subr.mxu0 %v801
    %1381 = vmatpush1.msra.mxu0 %v800
    %1382 = vmatprep.subr.mxu0 %v809
    %1383 = vmatpush1.msra.mxu0 %v808
    %1384 = vmatprep.subr.mxu0 %v817
    %1385 = vmatpush1.msra.mxu0 %v816
    %1386 = vmatprep.subr.mxu0 %v825
    %1387 = vmatpush1.msra.mxu0 %v824
    %1388 = vmatprep.subr.mxu0 %v833
    %1389 = vmatpush1.msra.mxu0 %v832
    %1390 = vmatprep.subr.mxu0 %v841
    %1391 = vmatpush1.msra.mxu0 %v840
    %1392 = vmatprep.subr.mxu0 %v849
    %1393 = vmatpush1.msra.mxu0 %v848
    %1394 = vmatprep.subr.mxu0 %v857
    %1395 = vmatpush1.msra.mxu0 %v856
    %1396 = vmatprep.subr.mxu0 %v865
    %1397 = vmatpush1.msra.mxu0 %v864
    %1398 = vmatprep.subr.mxu0 %v873
    %1399 = vmatpush1.msra.mxu0 %v872
    %1400 = vmatprep.subr.mxu0 %v881
    %1401 = vmatpush1.msra.mxu0 %v880
    %1402 = vmatprep.subr.mxu0 %v889
    %1403 = vmatpush1.msra.mxu0 %v888
    %1404 = vmatprep.subr.mxu0 %v897
    %1405 = vmatpush1.msra.mxu0 %v896
    %1406 = vmatprep.subr.mxu0 %v905
    %1407 = vmatpush1.msra.mxu0 %v904
    %1408 = vmatprep.subr.mxu0 %v913
    %1409 = vmatpush1.msra.mxu0 %v912
    %1410 = vmatprep.subr.mxu0 %v921
    %1411 = vmatpush1.msra.mxu0 %v920
    %1412 = vmatprep.mubr.f32.mxu0 %v1265
    %1413 = vmatmul.mubr.f32.gmra.mrb[0].mxu0 %v1264
    %v1414 = vpop.f32.mrb[0].mxu0
    %v1415 = vadd.f32 0.0, %v1414
    %v1416 = vpop.f32.mrb[0].mxu0
    %v1417 = vadd.f32 0.0, %v1416
    %1418 = vdwg.mxu0
    %1419 = vmatprep.subr.mxu0 %v675
    %1420 = vmatpush1.msra.mxu0 %v674
    %1421 = vmatprep.subr.mxu0 %v683
    %1422 = vmatpush1.msra.mxu0 %v682
    %1423 = vmatprep.subr.mxu0 %v691
    %1424 = vmatpush1.msra.mxu0 %v690
    %1425 = vmatprep.subr.mxu0 %v699
    %1426 = vmatpush1.msra.mxu0 %v698
    %1427 = vmatprep.subr.mxu0 %v707
    %1428 = vmatpush1.msra.mxu0 %v706
    %1429 = vmatprep.subr.mxu0 %v715
    %1430 = vmatpush1.msra.mxu0 %v714
    %1431 = vmatprep.subr.mxu0 %v723
    %1432 = vmatpush1.msra.mxu0 %v722
    %1433 = vmatprep.subr.mxu0 %v731
    %1434 = vmatpush1.msra.mxu0 %v730
    %1435 = vmatprep.subr.mxu0 %v739
    %1436 = vmatpush1.msra.mxu0 %v738
    %1437 = vmatprep.subr.mxu0 %v747
    %1438 = vmatpush1.msra.mxu0 %v746
    %1439 = vmatprep.subr.mxu0 %v755
    %1440 = vmatpush1.msra.mxu0 %v754
    %1441 = vmatprep.subr.mxu0 %v763
    %1442 = vmatpush1.msra.mxu0 %v762
    %1443 = vmatprep.subr.mxu0 %v771
    %1444 = vmatpush1.msra.mxu0 %v770
    %1445 = vmatprep.subr.mxu0 %v779
    %1446 = vmatpush1.msra.mxu0 %v778
    %1447 = vmatprep.subr.mxu0 %v787
    %1448 = vmatpush1.msra.mxu0 %v786
    %1449 = vmatprep.subr.mxu0 %v795
    %1450 = vmatpush1.msra.mxu0 %v794
    %1451 = vmatprep.subr.mxu0 %v803
    %1452 = vmatpush1.msra.mxu0 %v802
    %1453 = vmatprep.subr.mxu0 %v811
    %1454 = vmatpush1.msra.mxu0 %v810
    %1455 = vmatprep.subr.mxu0 %v819
    %1456 = vmatpush1.msra.mxu0 %v818
    %1457 = vmatprep.subr.mxu0 %v827
    %1458 = vmatpush1.msra.mxu0 %v826
    %1459 = vmatprep.subr.mxu0 %v835
    %1460 = vmatpush1.msra.mxu0 %v834
    %1461 = vmatprep.subr.mxu0 %v843
    %1462 = vmatpush1.msra.mxu0 %v842
    %1463 = vmatprep.subr.mxu0 %v851
    %1464 = vmatpush1.msra.mxu0 %v850
    %1465 = vmatprep.subr.mxu0 %v859
    %1466 = vmatpush1.msra.mxu0 %v858
    %1467 = vmatprep.subr.mxu0 %v867
    %1468 = vmatpush1.msra.mxu0 %v866
    %1469 = vmatprep.subr.mxu0 %v875
    %1470 = vmatpush1.msra.mxu0 %v874
    %1471 = vmatprep.subr.mxu0 %v883
    %1472 = vmatpush1.msra.mxu0 %v882
    %1473 = vmatprep.subr.mxu0 %v891
    %1474 = vmatpush1.msra.mxu0 %v890
    %1475 = vmatprep.subr.mxu0 %v899
    %1476 = vmatpush1.msra.mxu0 %v898
    %1477 = vmatprep.subr.mxu0 %v907
    %1478 = vmatpush1.msra.mxu0 %v906
    %1479 = vmatprep.subr.mxu0 %v915
    %1480 = vmatpush1.msra.mxu0 %v914
    %1481 = vmatprep.subr.mxu0 %v923
    %1482 = vmatpush1.msra.mxu0 %v922
    %1483 = vmatprep.mubr.f32.mxu0 %v1265
    %1484 = vmatmul.mubr.f32.gmra.mrb[0].mxu0 %v1264
    %v1485 = vpop.f32.mrb[0].mxu0
    %v1486 = vadd.f32 0.0, %v1485
    %v1487 = vpop.f32.mrb[0].mxu0
    %v1488 = vadd.f32 0.0, %v1487
    %1489 = vdwg.mxu0
    %1490 = vmatprep.subr.mxu0 %v677
    %1491 = vmatpush1.msra.mxu0 %v676
    %1492 = vmatprep.subr.mxu0 %v685
    %1493 = vmatpush1.msra.mxu0 %v684
    %1494 = vmatprep.subr.mxu0 %v693
    %1495 = vmatpush1.msra.mxu0 %v692
    %1496 = vmatprep.subr.mxu0 %v701
    %1497 = vmatpush1.msra.mxu0 %v700
    %1498 = vmatprep.subr.mxu0 %v709
    %1499 = vmatpush1.msra.mxu0 %v708
    %1500 = vmatprep.subr.mxu0 %v717
    %1501 = vmatpush1.msra.mxu0 %v716
    %1502 = vmatprep.subr.mxu0 %v725
    %1503 = vmatpush1.msra.mxu0 %v724
    %1504 = vmatprep.subr.mxu0 %v733
    %1505 = vmatpush1.msra.mxu0 %v732
    %1506 = vmatprep.subr.mxu0 %v741
    %1507 = vmatpush1.msra.mxu0 %v740
    %1508 = vmatprep.subr.mxu0 %v749
    %1509 = vmatpush1.msra.mxu0 %v748
    %1510 = vmatprep.subr.mxu0 %v757
    %1511 = vmatpush1.msra.mxu0 %v756
    %1512 = vmatprep.subr.mxu0 %v765
    %1513 = vmatpush1.msra.mxu0 %v764
    %1514 = vmatprep.subr.mxu0 %v773
    %1515 = vmatpush1.msra.mxu0 %v772
    %1516 = vmatprep.subr.mxu0 %v781
    %1517 = vmatpush1.msra.mxu0 %v780
    %1518 = vmatprep.subr.mxu0 %v789
    %1519 = vmatpush1.msra.mxu0 %v788
    %1520 = vmatprep.subr.mxu0 %v797
    %1521 = vmatpush1.msra.mxu0 %v796
    %1522 = vmatprep.subr.mxu0 %v805
    %1523 = vmatpush1.msra.mxu0 %v804
    %1524 = vmatprep.subr.mxu0 %v813
    %1525 = vmatpush1.msra.mxu0 %v812
    %1526 = vmatprep.subr.mxu0 %v821
    %1527 = vmatpush1.msra.mxu0 %v820
    %1528 = vmatprep.subr.mxu0 %v829
    %1529 = vmatpush1.msra.mxu0 %v828
    %1530 = vmatprep.subr.mxu0 %v837
    %1531 = vmatpush1.msra.mxu0 %v836
    %1532 = vmatprep.subr.mxu0 %v845
    %1533 = vmatpush1.msra.mxu0 %v844
    %1534 = vmatprep.subr.mxu0 %v853
    %1535 = vmatpush1.msra.mxu0 %v852
    %1536 = vmatprep.subr.mxu0 %v861
    %1537 = vmatpush1.msra.mxu0 %v860
    %1538 = vmatprep.subr.mxu0 %v869
    %1539 = vmatpush1.msra.mxu0 %v868
    %1540 = vmatprep.subr.mxu0 %v877
    %1541 = vmatpush1.msra.mxu0 %v876
    %1542 = vmatprep.subr.mxu0 %v885
    %1543 = vmatpush1.msra.mxu0 %v884
    %1544 = vmatprep.subr.mxu0 %v893
    %1545 = vmatpush1.msra.mxu0 %v892
    %1546 = vmatprep.subr.mxu0 %v901
    %1547 = vmatpush1.msra.mxu0 %v900
    %1548 = vmatprep.subr.mxu0 %v909
    %1549 = vmatpush1.msra.mxu0 %v908
    %1550 = vmatprep.subr.mxu0 %v917
    %1551 = vmatpush1.msra.mxu0 %v916
    %1552 = vmatprep.subr.mxu0 %v925
    %1553 = vmatpush1.msra.mxu0 %v924
    %1554 = vmatprep.mubr.f32.mxu0 %v1265
    %1555 = vmatmul.mubr.f32.gmra.mrb[0].mxu0 %v1264
    %v1556 = vpop.f32.mrb[0].mxu0
    %v1557 = vadd.f32 0.0, %v1556
    %v1558 = vpop.f32.mrb[0].mxu0
    %v1559 = vadd.f32 0.0, %v1558
    %1560 = vdwg.mxu0
    %v1561 = vadd.f32 %v1269, %v1344
    %v1562 = vadd.f32 %v1270, %v1346
    %v1563 = vadd.f32 %v1271, %v1415
    %v1564 = vadd.f32 %v1272, %v1417
    %v1565 = vadd.f32 %v1273, %v1486
    %v1566 = vadd.f32 %v1274, %v1488
    %v1567 = vadd.f32 %v1275, %v1557
    %v1568 = vadd.f32 %v1276, %v1559
    %v1569 = vxor.u32 %v1561, 2147483648
    %v1570 = vxor.u32 %v1562, 2147483648
    %v1571 = vmul.f32 %v1569, 1.442695
    %v1572 = vpow.pop %v1571
    %v1573 = vmul.f32 %v1570, 1.442695
    %v1574 = vpow.pop %v1573
    %v1575 = vadd.f32 %v1572, 1.0
    %v1576 = vadd.f32 %v1574, 1.0
    %v1577 = vrcp.pop %v1575
    %v1578 = vmul.f32 1.0, %v1577
    %v1579 = vrcp.pop %v1576
    %v1580 = vmul.f32 1.0, %v1579
    %v1581 = vxor.u32 %v1563, 2147483648
    %v1582 = vxor.u32 %v1564, 2147483648
    %v1583 = vmul.f32 %v1581, 1.442695
    %v1584 = vpow.pop %v1583
    %v1585 = vmul.f32 %v1582, 1.442695
    %v1586 = vpow.pop %v1585
    %v1587 = vadd.f32 %v1584, 1.0
    %v1588 = vadd.f32 %v1586, 1.0
    %v1589 = vrcp.pop %v1587
    %v1590 = vmul.f32 1.0, %v1589
    %v1591 = vrcp.pop %v1588
    %v1592 = vmul.f32 1.0, %v1591
    %v1593 = vtanh.pop %v1565
    %v1594 = vtanh.pop %v1566
    %v1595 = vxor.u32 %v1567, 2147483648
    %v1596 = vxor.u32 %v1568, 2147483648
    %v1597 = vmul.f32 %v1595, 1.442695
    %v1598 = vpow.pop %v1597
    %v1599 = vmul.f32 %v1596, 1.442695
    %v1600 = vpow.pop %v1599
    %v1601 = vadd.f32 %v1598, 1.0
    %v1602 = vadd.f32 %v1600, 1.0
    %v1603 = vrcp.pop %v1601
    %v1604 = vmul.f32 1.0, %v1603
    %v1605 = vrcp.pop %v1602
    %v1606 = vmul.f32 1.0, %v1605
    %v1607 = vmul.f32 %v1590, %v1260
    %v1608 = vmul.f32 %v1592, %v1261
    %v1609 = vmul.f32 %v1578, %v1593
    %v1610 = vmul.f32 %v1580, %v1594
    %v1611 = vadd.f32 %v1607, %v1609
    %v1612 = vadd.f32 %v1608, %v1610
    %v1613 = vtanh.pop %v1611
    %v1614 = vtanh.pop %v1612
    %v1615 = vmul.f32 %v1604, %v1613
    %v1616 = vmul.f32 %v1606, %v1614
    %s1617 = smul.u32 2, 8
    %s1618 = smul.addr %s1617, 8
    %s1619 = scalar_lea.vmem [#allocation2], %s1618
    %v1620 = vld [vmem:[%s1619] sm:$0xff]
    %v1621 = vld [vmem:[%s1619 + $0x8] sm:$0xff]
    %v1622 = vld [vmem:[%s1619 + $0x10] sm:$0xff]
    %v1623 = vld [vmem:[%s1619 + $0x18] sm:$0xff]
    %v1624 = vld [vmem:[%s1619 + $0x20] sm:$0xff]
    %v1625 = vld [vmem:[%s1619 + $0x28] sm:$0xff]
    %v1626 = vld [vmem:[%s1619 + $0x30] sm:$0xff]
    %v1627 = vld [vmem:[%s1619 + $0x38] sm:$0xff]
    %1628 = vmatprep.subr.mxu0 %v671
    %1629 = vmatpush1.msra.mxu0 %v670
    %1630 = vmatprep.subr.mxu0 %v679
    %1631 = vmatpush1.msra.mxu0 %v678
    %1632 = vmatprep.subr.mxu0 %v687
    %1633 = vmatpush1.msra.mxu0 %v686
    %1634 = vmatprep.subr.mxu0 %v695
    %1635 = vmatpush1.msra.mxu0 %v694
    %1636 = vmatprep.subr.mxu0 %v703
    %1637 = vmatpush1.msra.mxu0 %v702
    %1638 = vmatprep.subr.mxu0 %v711
    %1639 = vmatpush1.msra.mxu0 %v710
    %1640 = vmatprep.subr.mxu0 %v719
    %1641 = vmatpush1.msra.mxu0 %v718
    %1642 = vmatprep.subr.mxu0 %v727
    %1643 = vmatpush1.msra.mxu0 %v726
    %1644 = vmatprep.subr.mxu0 %v735
    %1645 = vmatpush1.msra.mxu0 %v734
    %1646 = vmatprep.subr.mxu0 %v743
    %1647 = vmatpush1.msra.mxu0 %v742
    %1648 = vmatprep.subr.mxu0 %v751
    %1649 = vmatpush1.msra.mxu0 %v750
    %1650 = vmatprep.subr.mxu0 %v759
    %1651 = vmatpush1.msra.mxu0 %v758
    %1652 = vmatprep.subr.mxu0 %v767
    %1653 = vmatpush1.msra.mxu0 %v766
    %1654 = vmatprep.subr.mxu0 %v775
    %1655 = vmatpush1.msra.mxu0 %v774
    %1656 = vmatprep.subr.mxu0 %v783
    %1657 = vmatpush1.msra.mxu0 %v782
    %1658 = vmatprep.subr.mxu0 %v791
    %1659 = vmatpush1.msra.mxu0 %v790
    %1660 = vmatprep.subr.mxu0 %v799
    %1661 = vmatpush1.msra.mxu0 %v798
    %1662 = vmatprep.subr.mxu0 %v807
    %1663 = vmatpush1.msra.mxu0 %v806
    %1664 = vmatprep.subr.mxu0 %v815
    %1665 = vmatpush1.msra.mxu0 %v814
    %1666 = vmatprep.subr.mxu0 %v823
    %1667 = vmatpush1.msra.mxu0 %v822
    %1668 = vmatprep.subr.mxu0 %v831
    %1669 = vmatpush1.msra.mxu0 %v830
    %1670 = vmatprep.subr.mxu0 %v839
    %1671 = vmatpush1.msra.mxu0 %v838
    %1672 = vmatprep.subr.mxu0 %v847
    %1673 = vmatpush1.msra.mxu0 %v846
    %1674 = vmatprep.subr.mxu0 %v855
    %1675 = vmatpush1.msra.mxu0 %v854
    %1676 = vmatprep.subr.mxu0 %v863
    %1677 = vmatpush1.msra.mxu0 %v862
    %1678 = vmatprep.subr.mxu0 %v871
    %1679 = vmatpush1.msra.mxu0 %v870
    %1680 = vmatprep.subr.mxu0 %v879
    %1681 = vmatpush1.msra.mxu0 %v878
    %1682 = vmatprep.subr.mxu0 %v887
    %1683 = vmatpush1.msra.mxu0 %v886
    %1684 = vmatprep.subr.mxu0 %v895
    %1685 = vmatpush1.msra.mxu0 %v894
    %1686 = vmatprep.subr.mxu0 %v903
    %1687 = vmatpush1.msra.mxu0 %v902
    %1688 = vmatprep.subr.mxu0 %v911
    %1689 = vmatpush1.msra.mxu0 %v910
    %1690 = vmatprep.subr.mxu0 %v919
    %1691 = vmatpush1.msra.mxu0 %v918
    %1692 = vmatprep.mubr.f32.mxu0 %v1616
    %1693 = vmatmul.mubr.f32.gmra.mrb[0].mxu0 %v1615
    %v1694 = vpop.f32.mrb[0].mxu0
    %v1695 = vadd.f32 0.0, %v1694
    %v1696 = vpop.f32.mrb[0].mxu0
    %v1697 = vadd.f32 0.0, %v1696
    %1698 = vdwg.mxu0
    %1699 = vmatprep.subr.mxu0 %v673
    %1700 = vmatpush1.msra.mxu0 %v672
    %1701 = vmatprep.subr.mxu0 %v681
    %1702 = vmatpush1.msra.mxu0 %v680
    %1703 = vmatprep.subr.mxu0 %v689
    %1704 = vmatpush1.msra.mxu0 %v688
    %1705 = vmatprep.subr.mxu0 %v697
    %1706 = vmatpush1.msra.mxu0 %v696
    %1707 = vmatprep.subr.mxu0 %v705
    %1708 = vmatpush1.msra.mxu0 %v704
    %1709 = vmatprep.subr.mxu0 %v713
    %1710 = vmatpush1.msra.mxu0 %v712
    %1711 = vmatprep.subr.mxu0 %v721
    %1712 = vmatpush1.msra.mxu0 %v720
    %1713 = vmatprep.subr.mxu0 %v729
    %1714 = vmatpush1.msra.mxu0 %v728
    %1715 = vmatprep.subr.mxu0 %v737
    %1716 = vmatpush1.msra.mxu0 %v736
    %1717 = vmatprep.subr.mxu0 %v745
    %1718 = vmatpush1.msra.mxu0 %v744
    %1719 = vmatprep.subr.mxu0 %v753
    %1720 = vmatpush1.msra.mxu0 %v752
    %1721 = vmatprep.subr.mxu0 %v761
    %1722 = vmatpush1.msra.mxu0 %v760
    %1723 = vmatprep.subr.mxu0 %v769
    %1724 = vmatpush1.msra.mxu0 %v768
    %1725 = vmatprep.subr.mxu0 %v777
    %1726 = vmatpush1.msra.mxu0 %v776
    %1727 = vmatprep.subr.mxu0 %v785
    %1728 = vmatpush1.msra.mxu0 %v784
    %1729 = vmatprep.subr.mxu0 %v793
    %1730 = vmatpush1.msra.mxu0 %v792
    %1731 = vmatprep.subr.mxu0 %v801
    %1732 = vmatpush1.msra.mxu0 %v800
    %1733 = vmatprep.subr.mxu0 %v809
    %1734 = vmatpush1.msra.mxu0 %v808
    %1735 = vmatprep.subr.mxu0 %v817
    %1736 = vmatpush1.msra.mxu0 %v816
    %1737 = vmatprep.subr.mxu0 %v825
    %1738 = vmatpush1.msra.mxu0 %v824
    %1739 = vmatprep.subr.mxu0 %v833
    %1740 = vmatpush1.msra.mxu0 %v832
    %1741 = vmatprep.subr.mxu0 %v841
    %1742 = vmatpush1.msra.mxu0 %v840
    %1743 = vmatprep.subr.mxu0 %v849
    %1744 = vmatpush1.msra.mxu0 %v848
    %1745 = vmatprep.subr.mxu0 %v857
    %1746 = vmatpush1.msra.mxu0 %v856
    %1747 = vmatprep.subr.mxu0 %v865
    %1748 = vmatpush1.msra.mxu0 %v864
    %1749 = vmatprep.subr.mxu0 %v873
    %1750 = vmatpush1.msra.mxu0 %v872
    %1751 = vmatprep.subr.mxu0 %v881
    %1752 = vmatpush1.msra.mxu0 %v880
    %1753 = vmatprep.subr.mxu0 %v889
    %1754 = vmatpush1.msra.mxu0 %v888
    %1755 = vmatprep.subr.mxu0 %v897
    %1756 = vmatpush1.msra.mxu0 %v896
    %1757 = vmatprep.subr.mxu0 %v905
    %1758 = vmatpush1.msra.mxu0 %v904
    %1759 = vmatprep.subr.mxu0 %v913
    %1760 = vmatpush1.msra.mxu0 %v912
    %1761 = vmatprep.subr.mxu0 %v921
    %1762 = vmatpush1.msra.mxu0 %v920
    %1763 = vmatprep.mubr.f32.mxu0 %v1616
    %1764 = vmatmul.mubr.f32.gmra.mrb[0].mxu0 %v1615
    %v1765 = vpop.f32.mrb[0].mxu0
    %v1766 = vadd.f32 0.0, %v1765
    %v1767 = vpop.f32.mrb[0].mxu0
    %v1768 = vadd.f32 0.0, %v1767
    %1769 = vdwg.mxu0
    %1770 = vmatprep.subr.mxu0 %v675
    %1771 = vmatpush1.msra.mxu0 %v674
    %1772 = vmatprep.subr.mxu0 %v683
    %1773 = vmatpush1.msra.mxu0 %v682
    %1774 = vmatprep.subr.mxu0 %v691
    %1775 = vmatpush1.msra.mxu0 %v690
    %1776 = vmatprep.subr.mxu0 %v699
    %1777 = vmatpush1.msra.mxu0 %v698
    %1778 = vmatprep.subr.mxu0 %v707
    %1779 = vmatpush1.msra.mxu0 %v706
    %1780 = vmatprep.subr.mxu0 %v715
    %1781 = vmatpush1.msra.mxu0 %v714
    %1782 = vmatprep.subr.mxu0 %v723
    %1783 = vmatpush1.msra.mxu0 %v722
    %1784 = vmatprep.subr.mxu0 %v731
    %1785 = vmatpush1.msra.mxu0 %v730
    %1786 = vmatprep.subr.mxu0 %v739
    %1787 = vmatpush1.msra.mxu0 %v738
    %1788 = vmatprep.subr.mxu0 %v747
    %1789 = vmatpush1.msra.mxu0 %v746
    %1790 = vmatprep.subr.mxu0 %v755
    %1791 = vmatpush1.msra.mxu0 %v754
    %1792 = vmatprep.subr.mxu0 %v763
    %1793 = vmatpush1.msra.mxu0 %v762
    %1794 = vmatprep.subr.mxu0 %v771
    %1795 = vmatpush1.msra.mxu0 %v770
    %1796 = vmatprep.subr.mxu0 %v779
    %1797 = vmatpush1.msra.mxu0 %v778
    %1798 = vmatprep.subr.mxu0 %v787
    %1799 = vmatpush1.msra.mxu0 %v786
    %1800 = vmatprep.subr.mxu0 %v795
    %1801 = vmatpush1.msra.mxu0 %v794
    %1802 = vmatprep.subr.mxu0 %v803
    %1803 = vmatpush1.msra.mxu0 %v802
    %1804 = vmatprep.subr.mxu0 %v811
    %1805 = vmatpush1.msra.mxu0 %v810
    %1806 = vmatprep.subr.mxu0 %v819
    %1807 = vmatpush1.msra.mxu0 %v818
    %1808 = vmatprep.subr.mxu0 %v827
    %1809 = vmatpush1.msra.mxu0 %v826
    %1810 = vmatprep.subr.mxu0 %v835
    %1811 = vmatpush1.msra.mxu0 %v834
    %1812 = vmatprep.subr.mxu0 %v843
    %1813 = vmatpush1.msra.mxu0 %v842
    %1814 = vmatprep.subr.mxu0 %v851
    %1815 = vmatpush1.msra.mxu0 %v850
    %1816 = vmatprep.subr.mxu0 %v859
    %1817 = vmatpush1.msra.mxu0 %v858
    %1818 = vmatprep.subr.mxu0 %v867
    %1819 = vmatpush1.msra.mxu0 %v866
    %1820 = vmatprep.subr.mxu0 %v875
    %1821 = vmatpush1.msra.mxu0 %v874
    %1822 = vmatprep.subr.mxu0 %v883
    %1823 = vmatpush1.msra.mxu0 %v882
    %1824 = vmatprep.subr.mxu0 %v891
    %1825 = vmatpush1.msra.mxu0 %v890
    %1826 = vmatprep.subr.mxu0 %v899
    %1827 = vmatpush1.msra.mxu0 %v898
    %1828 = vmatprep.subr.mxu0 %v907
    %1829 = vmatpush1.msra.mxu0 %v906
    %1830 = vmatprep.subr.mxu0 %v915
    %1831 = vmatpush1.msra.mxu0 %v914
    %1832 = vmatprep.subr.mxu0 %v923
    %1833 = vmatpush1.msra.mxu0 %v922
    %1834 = vmatprep.mubr.f32.mxu0 %v1616
    %1835 = vmatmul.mubr.f32.gmra.mrb[0].mxu0 %v1615
    %v1836 = vpop.f32.mrb[0].mxu0
    %v1837 = vadd.f32 0.0, %v1836
    %v1838 = vpop.f32.mrb[0].mxu0
    %v1839 = vadd.f32 0.0, %v1838
    %1840 = vdwg.mxu0
    %1841 = vmatprep.subr.mxu0 %v677
    %1842 = vmatpush1.msra.mxu0 %v676
    %1843 = vmatprep.subr.mxu0 %v685
    %1844 = vmatpush1.msra.mxu0 %v684
    %1845 = vmatprep.subr.mxu0 %v693
    %1846 = vmatpush1.msra.mxu0 %v692
    %1847 = vmatprep.subr.mxu0 %v701
    %1848 = vmatpush1.msra.mxu0 %v700
    %1849 = vmatprep.subr.mxu0 %v709
    %1850 = vmatpush1.msra.mxu0 %v708
    %1851 = vmatprep.subr.mxu0 %v717
    %1852 = vmatpush1.msra.mxu0 %v716
    %1853 = vmatprep.subr.mxu0 %v725
    %1854 = vmatpush1.msra.mxu0 %v724
    %1855 = vmatprep.subr.mxu0 %v733
    %1856 = vmatpush1.msra.mxu0 %v732
    %1857 = vmatprep.subr.mxu0 %v741
    %1858 = vmatpush1.msra.mxu0 %v740
    %1859 = vmatprep.subr.mxu0 %v749
    %1860 = vmatpush1.msra.mxu0 %v748
    %1861 = vmatprep.subr.mxu0 %v757
    %1862 = vmatpush1.msra.mxu0 %v756
    %1863 = vmatprep.subr.mxu0 %v765
    %1864 = vmatpush1.msra.mxu0 %v764
    %1865 = vmatprep.subr.mxu0 %v773
    %1866 = vmatpush1.msra.mxu0 %v772
    %1867 = vmatprep.subr.mxu0 %v781
    %1868 = vmatpush1.msra.mxu0 %v780
    %1869 = vmatprep.subr.mxu0 %v789
    %1870 = vmatpush1.msra.mxu0 %v788
    %1871 = vmatprep.subr.mxu0 %v797
    %1872 = vmatpush1.msra.mxu0 %v796
    %1873 = vmatprep.subr.mxu0 %v805
    %1874 = vmatpush1.msra.mxu0 %v804
    %1875 = vmatprep.subr.mxu0 %v813
    %1876 = vmatpush1.msra.mxu0 %v812
    %1877 = vmatprep.subr.mxu0 %v821
    %1878 = vmatpush1.msra.mxu0 %v820
    %1879 = vmatprep.subr.mxu0 %v829
    %1880 = vmatpush1.msra.mxu0 %v828
    %1881 = vmatprep.subr.mxu0 %v837
    %1882 = vmatpush1.msra.mxu0 %v836
    %1883 = vmatprep.subr.mxu0 %v845
    %1884 = vmatpush1.msra.mxu0 %v844
    %1885 = vmatprep.subr.mxu0 %v853
    %1886 = vmatpush1.msra.mxu0 %v852
    %1887 = vmatprep.subr.mxu0 %v861
    %1888 = vmatpush1.msra.mxu0 %v860
    %1889 = vmatprep.subr.mxu0 %v869
    %1890 = vmatpush1.msra.mxu0 %v868
    %1891 = vmatprep.subr.mxu0 %v877
    %1892 = vmatpush1.msra.mxu0 %v876
    %1893 = vmatprep.subr.mxu0 %v885
    %1894 = vmatpush1.msra.mxu0 %v884
    %1895 = vmatprep.subr.mxu0 %v893
    %1896 = vmatpush1.msra.mxu0 %v892
    %1897 = vmatprep.subr.mxu0 %v901
    %1898 = vmatpush1.msra.mxu0 %v900
    %1899 = vmatprep.subr.mxu0 %v909
    %1900 = vmatpush1.msra.mxu0 %v908
    %1901 = vmatprep.subr.mxu0 %v917
    %1902 = vmatpush1.msra.mxu0 %v916
    %1903 = vmatprep.subr.mxu0 %v925
    %1904 = vmatpush1.msra.mxu0 %v924
    %1905 = vmatprep.mubr.f32.mxu0 %v1616
    %1906 = vmatmul.mubr.f32.gmra.mrb[0].mxu0 %v1615
    %v1907 = vpop.f32.mrb[0].mxu0
    %v1908 = vadd.f32 0.0, %v1907
    %v1909 = vpop.f32.mrb[0].mxu0
    %v1910 = vadd.f32 0.0, %v1909
    %1911 = vdwg.mxu0
    %v1912 = vadd.f32 %v1620, %v1695
    %v1913 = vadd.f32 %v1621, %v1697
    %v1914 = vadd.f32 %v1622, %v1766
    %v1915 = vadd.f32 %v1623, %v1768
    %v1916 = vadd.f32 %v1624, %v1837
    %v1917 = vadd.f32 %v1625, %v1839
    %v1918 = vadd.f32 %v1626, %v1908
    %v1919 = vadd.f32 %v1627, %v1910
    %v1920 = vxor.u32 %v1912, 2147483648
    %v1921 = vxor.u32 %v1913, 2147483648
    %v1922 = vmul.f32 %v1920, 1.442695
    %v1923 = vpow.pop %v1922
    %v1924 = vmul.f32 %v1921, 1.442695
    %v1925 = vpow.pop %v1924
    %v1926 = vadd.f32 %v1923, 1.0
    %v1927 = vadd.f32 %v1925, 1.0
    %v1928 = vrcp.pop %v1926
    %v1929 = vmul.f32 1.0, %v1928
    %v1930 = vrcp.pop %v1927
    %v1931 = vmul.f32 1.0, %v1930
    %v1932 = vxor.u32 %v1914, 2147483648
    %v1933 = vxor.u32 %v1915, 2147483648
    %v1934 = vmul.f32 %v1932, 1.442695
    %v1935 = vpow.pop %v1934
    %v1936 = vmul.f32 %v1933, 1.442695
    %v1937 = vpow.pop %v1936
    %v1938 = vadd.f32 %v1935, 1.0
    %v1939 = vadd.f32 %v1937, 1.0
    %v1940 = vrcp.pop %v1938
    %v1941 = vmul.f32 1.0, %v1940
    %v1942 = vrcp.pop %v1939
    %v1943 = vmul.f32 1.0, %v1942
    %v1944 = vtanh.pop %v1916
    %v1945 = vtanh.pop %v1917
    %v1946 = vxor.u32 %v1918, 2147483648
    %v1947 = vxor.u32 %v1919, 2147483648
    %v1948 = vmul.f32 %v1946, 1.442695
    %v1949 = vpow.pop %v1948
    %v1950 = vmul.f32 %v1947, 1.442695
    %v1951 = vpow.pop %v1950
    %v1952 = vadd.f32 %v1949, 1.0
    %v1953 = vadd.f32 %v1951, 1.0
    %v1954 = vrcp.pop %v1952
    %v1955 = vmul.f32 1.0, %v1954
    %v1956 = vrcp.pop %v1953
    %v1957 = vmul.f32 1.0, %v1956
    %v1958 = vmul.f32 %v1941, %v1611
    %v1959 = vmul.f32 %v1943, %v1612
    %v1960 = vmul.f32 %v1929, %v1944
    %v1961 = vmul.f32 %v1931, %v1945
    %v1962 = vadd.f32 %v1958, %v1960
    %v1963 = vadd.f32 %v1959, %v1961
    %v1964 = vtanh.pop %v1962
    %v1965 = vtanh.pop %v1963
    %v1966 = vmul.f32 %v1955, %v1964
    %v1967 = vmul.f32 %v1957, %v1965
    %s1968 = smul.u32 3, 8
    %s1969 = smul.addr %s1968, 8
    %s1970 = scalar_lea.vmem [#allocation2], %s1969
    %v1971 = vld [vmem:[%s1970] sm:$0xff]
    %v1972 = vld [vmem:[%s1970 + $0x8] sm:$0xff]
    %v1973 = vld [vmem:[%s1970 + $0x10] sm:$0xff]
    %v1974 = vld [vmem:[%s1970 + $0x18] sm:$0xff]
    %v1975 = vld [vmem:[%s1970 + $0x20] sm:$0xff]
    %v1976 = vld [vmem:[%s1970 + $0x28] sm:$0xff]
    %v1977 = vld [vmem:[%s1970 + $0x30] sm:$0xff]
    %v1978 = vld [vmem:[%s1970 + $0x38] sm:$0xff]
    %1979 = vmatprep.subr.mxu0 %v671
    %1980 = vmatpush1.msra.mxu0 %v670
    %1981 = vmatprep.subr.mxu0 %v679
    %1982 = vmatpush1.msra.mxu0 %v678
    %1983 = vmatprep.subr.mxu0 %v687
    %1984 = vmatpush1.msra.mxu0 %v686
    %1985 = vmatprep.subr.mxu0 %v695
    %1986 = vmatpush1.msra.mxu0 %v694
    %1987 = vmatprep.subr.mxu0 %v703
    %1988 = vmatpush1.msra.mxu0 %v702
    %1989 = vmatprep.subr.mxu0 %v711
    %1990 = vmatpush1.msra.mxu0 %v710
    %1991 = vmatprep.subr.mxu0 %v719
    %1992 = vmatpush1.msra.mxu0 %v718
    %1993 = vmatprep.subr.mxu0 %v727
    %1994 = vmatpush1.msra.mxu0 %v726
    %1995 = vmatprep.subr.mxu0 %v735
    %1996 = vmatpush1.msra.mxu0 %v734
    %1997 = vmatprep.subr.mxu0 %v743
    %1998 = vmatpush1.msra.mxu0 %v742
    %1999 = vmatprep.subr.mxu0 %v751
    %2000 = vmatpush1.msra.mxu0 %v750
    %2001 = vmatprep.subr.mxu0 %v759
    %2002 = vmatpush1.msra.mxu0 %v758
    %2003 = vmatprep.subr.mxu0 %v767
    %2004 = vmatpush1.msra.mxu0 %v766
    %2005 = vmatprep.subr.mxu0 %v775
    %2006 = vmatpush1.msra.mxu0 %v774
    %2007 = vmatprep.subr.mxu0 %v783
    %2008 = vmatpush1.msra.mxu0 %v782
    %2009 = vmatprep.subr.mxu0 %v791
    %2010 = vmatpush1.msra.mxu0 %v790
    %2011 = vmatprep.subr.mxu0 %v799
    %2012 = vmatpush1.msra.mxu0 %v798
    %2013 = vmatprep.subr.mxu0 %v807
    %2014 = vmatpush1.msra.mxu0 %v806
    %2015 = vmatprep.subr.mxu0 %v815
    %2016 = vmatpush1.msra.mxu0 %v814
    %2017 = vmatprep.subr.mxu0 %v823
    %2018 = vmatpush1.msra.mxu0 %v822
    %2019 = vmatprep.subr.mxu0 %v831
    %2020 = vmatpush1.msra.mxu0 %v830
    %2021 = vmatprep.subr.mxu0 %v839
    %2022 = vmatpush1.msra.mxu0 %v838
    %2023 = vmatprep.subr.mxu0 %v847
    %2024 = vmatpush1.msra.mxu0 %v846
    %2025 = vmatprep.subr.mxu0 %v855
    %2026 = vmatpush1.msra.mxu0 %v854
    %2027 = vmatprep.subr.mxu0 %v863
    %2028 = vmatpush1.msra.mxu0 %v862
    %2029 = vmatprep.subr.mxu0 %v871
    %2030 = vmatpush1.msra.mxu0 %v870
    %2031 = vmatprep.subr.mxu0 %v879
    %2032 = vmatpush1.msra.mxu0 %v878
    %2033 = vmatprep.subr.mxu0 %v887
    %2034 = vmatpush1.msra.mxu0 %v886
    %2035 = vmatprep.subr.mxu0 %v895
    %2036 = vmatpush1.msra.mxu0 %v894
    %2037 = vmatprep.subr.mxu0 %v903
    %2038 = vmatpush1.msra.mxu0 %v902
    %2039 = vmatprep.subr.mxu0 %v911
    %2040 = vmatpush1.msra.mxu0 %v910
    %2041 = vmatprep.subr.mxu0 %v919
    %2042 = vmatpush1.msra.mxu0 %v918
    %2043 = vmatprep.mubr.f32.mxu0 %v1967
    %2044 = vmatmul.mubr.f32.gmra.mrb[0].mxu0 %v1966
    %v2045 = vpop.f32.mrb[0].mxu0
    %v2046 = vadd.f32 0.0, %v2045
    %v2047 = vpop.f32.mrb[0].mxu0
    %v2048 = vadd.f32 0.0, %v2047
    %2049 = vdwg.mxu0
    %2050 = vmatprep.subr.mxu0 %v673
    %2051 = vmatpush1.msra.mxu0 %v672
    %2052 = vmatprep.subr.mxu0 %v681
    %2053 = vmatpush1.msra.mxu0 %v680
    %2054 = vmatprep.subr.mxu0 %v689
    %2055 = vmatpush1.msra.mxu0 %v688
    %2056 = vmatprep.subr.mxu0 %v697
    %2057 = vmatpush1.msra.mxu0 %v696
    %2058 = vmatprep.subr.mxu0 %v705
    %2059 = vmatpush1.msra.mxu0 %v704
    %2060 = vmatprep.subr.mxu0 %v713
    %2061 = vmatpush1.msra.mxu0 %v712
    %2062 = vmatprep.subr.mxu0 %v721
    %2063 = vmatpush1.msra.mxu0 %v720
    %2064 = vmatprep.subr.mxu0 %v729
    %2065 = vmatpush1.msra.mxu0 %v728
    %2066 = vmatprep.subr.mxu0 %v737
    %2067 = vmatpush1.msra.mxu0 %v736
    %2068 = vmatprep.subr.mxu0 %v745
    %2069 = vmatpush1.msra.mxu0 %v744
    %2070 = vmatprep.subr.mxu0 %v753
    %2071 = vmatpush1.msra.mxu0 %v752
    %2072 = vmatprep.subr.mxu0 %v761
    %2073 = vmatpush1.msra.mxu0 %v760
    %2074 = vmatprep.subr.mxu0 %v769
    %2075 = vmatpush1.msra.mxu0 %v768
    %2076 = vmatprep.subr.mxu0 %v777
    %2077 = vmatpush1.msra.mxu0 %v776
    %2078 = vmatprep.subr.mxu0 %v785
    %2079 = vmatpush1.msra.mxu0 %v784
    %2080 = vmatprep.subr.mxu0 %v793
    %2081 = vmatpush1.msra.mxu0 %v792
    %2082 = vmatprep.subr.mxu0 %v801
    %2083 = vmatpush1.msra.mxu0 %v800
    %2084 = vmatprep.subr.mxu0 %v809
    %2085 = vmatpush1.msra.mxu0 %v808
    %2086 = vmatprep.subr.mxu0 %v817
    %2087 = vmatpush1.msra.mxu0 %v816
    %2088 = vmatprep.subr.mxu0 %v825
    %2089 = vmatpush1.msra.mxu0 %v824
    %2090 = vmatprep.subr.mxu0 %v833
    %2091 = vmatpush1.msra.mxu0 %v832
    %2092 = vmatprep.subr.mxu0 %v841
    %2093 = vmatpush1.msra.mxu0 %v840
    %2094 = vmatprep.subr.mxu0 %v849
    %2095 = vmatpush1.msra.mxu0 %v848
    %2096 = vmatprep.subr.mxu0 %v857
    %2097 = vmatpush1.msra.mxu0 %v856
    %2098 = vmatprep.subr.mxu0 %v865
    %2099 = vmatpush1.msra.mxu0 %v864
    %2100 = vmatprep.subr.mxu0 %v873
    %2101 = vmatpush1.msra.mxu0 %v872
    %2102 = vmatprep.subr.mxu0 %v881
    %2103 = vmatpush1.msra.mxu0 %v880
    %2104 = vmatprep.subr.mxu0 %v889
    %2105 = vmatpush1.msra.mxu0 %v888
    %2106 = vmatprep.subr.mxu0 %v897
    %2107 = vmatpush1.msra.mxu0 %v896
    %2108 = vmatprep.subr.mxu0 %v905
    %2109 = vmatpush1.msra.mxu0 %v904
    %2110 = vmatprep.subr.mxu0 %v913
    %2111 = vmatpush1.msra.mxu0 %v912
    %2112 = vmatprep.subr.mxu0 %v921
    %2113 = vmatpush1.msra.mxu0 %v920
    %2114 = vmatprep.mubr.f32.mxu0 %v1967
    %2115 = vmatmul.mubr.f32.gmra.mrb[0].mxu0 %v1966
    %v2116 = vpop.f32.mrb[0].mxu0
    %v2117 = vadd.f32 0.0, %v2116
    %v2118 = vpop.f32.mrb[0].mxu0
    %v2119 = vadd.f32 0.0, %v2118
    %2120 = vdwg.mxu0
    %2121 = vmatprep.subr.mxu0 %v675
    %2122 = vmatpush1.msra.mxu0 %v674
    %2123 = vmatprep.subr.mxu0 %v683
    %2124 = vmatpush1.msra.mxu0 %v682
    %2125 = vmatprep.subr.mxu0 %v691
    %2126 = vmatpush1.msra.mxu0 %v690
    %2127 = vmatprep.subr.mxu0 %v699
    %2128 = vmatpush1.msra.mxu0 %v698
    %2129 = vmatprep.subr.mxu0 %v707
    %2130 = vmatpush1.msra.mxu0 %v706
    %2131 = vmatprep.subr.mxu0 %v715
    %2132 = vmatpush1.msra.mxu0 %v714
    %2133 = vmatprep.subr.mxu0 %v723
    %2134 = vmatpush1.msra.mxu0 %v722
    %2135 = vmatprep.subr.mxu0 %v731
    %2136 = vmatpush1.msra.mxu0 %v730
    %2137 = vmatprep.subr.mxu0 %v739
    %2138 = vmatpush1.msra.mxu0 %v738
    %2139 = vmatprep.subr.mxu0 %v747
    %2140 = vmatpush1.msra.mxu0 %v746
    %2141 = vmatprep.subr.mxu0 %v755
    %2142 = vmatpush1.msra.mxu0 %v754
    %2143 = vmatprep.subr.mxu0 %v763
    %2144 = vmatpush1.msra.mxu0 %v762
    %2145 = vmatprep.subr.mxu0 %v771
    %2146 = vmatpush1.msra.mxu0 %v770
    %2147 = vmatprep.subr.mxu0 %v779
    %2148 = vmatpush1.msra.mxu0 %v778
    %2149 = vmatprep.subr.mxu0 %v787
    %2150 = vmatpush1.msra.mxu0 %v786
    %2151 = vmatprep.subr.mxu0 %v795
    %2152 = vmatpush1.msra.mxu0 %v794
    %2153 = vmatprep.subr.mxu0 %v803
    %2154 = vmatpush1.msra.mxu0 %v802
    %2155 = vmatprep.subr.mxu0 %v811
    %2156 = vmatpush1.msra.mxu0 %v810
    %2157 = vmatprep.subr.mxu0 %v819
    %2158 = vmatpush1.msra.mxu0 %v818
    %2159 = vmatprep.subr.mxu0 %v827
    %2160 = vmatpush1.msra.mxu0 %v826
    %2161 = vmatprep.subr.mxu0 %v835
    %2162 = vmatpush1.msra.mxu0 %v834
    %2163 = vmatprep.subr.mxu0 %v843
    %2164 = vmatpush1.msra.mxu0 %v842
    %2165 = vmatprep.subr.mxu0 %v851
    %2166 = vmatpush1.msra.mxu0 %v850
    %2167 = vmatprep.subr.mxu0 %v859
    %2168 = vmatpush1.msra.mxu0 %v858
    %2169 = vmatprep.subr.mxu0 %v867
    %2170 = vmatpush1.msra.mxu0 %v866
    %2171 = vmatprep.subr.mxu0 %v875
    %2172 = vmatpush1.msra.mxu0 %v874
    %2173 = vmatprep.subr.mxu0 %v883
    %2174 = vmatpush1.msra.mxu0 %v882
    %2175 = vmatprep.subr.mxu0 %v891
    %2176 = vmatpush1.msra.mxu0 %v890
    %2177 = vmatprep.subr.mxu0 %v899
    %2178 = vmatpush1.msra.mxu0 %v898
    %2179 = vmatprep.subr.mxu0 %v907
    %2180 = vmatpush1.msra.mxu0 %v906
    %2181 = vmatprep.subr.mxu0 %v915
    %2182 = vmatpush1.msra.mxu0 %v914
    %2183 = vmatprep.subr.mxu0 %v923
    %2184 = vmatpush1.msra.mxu0 %v922
    %2185 = vmatprep.mubr.f32.mxu0 %v1967
    %2186 = vmatmul.mubr.f32.gmra.mrb[0].mxu0 %v1966
    %v2187 = vpop.f32.mrb[0].mxu0
    %v2188 = vadd.f32 0.0, %v2187
    %v2189 = vpop.f32.mrb[0].mxu0
    %v2190 = vadd.f32 0.0, %v2189
    %2191 = vdwg.mxu0
    %2192 = vmatprep.subr.mxu0 %v677
    %2193 = vmatpush1.msra.mxu0 %v676
    %2194 = vmatprep.subr.mxu0 %v685
    %2195 = vmatpush1.msra.mxu0 %v684
    %2196 = vmatprep.subr.mxu0 %v693
    %2197 = vmatpush1.msra.mxu0 %v692
    %2198 = vmatprep.subr.mxu0 %v701
    %2199 = vmatpush1.msra.mxu0 %v700
    %2200 = vmatprep.subr.mxu0 %v709
    %2201 = vmatpush1.msra.mxu0 %v708
    %2202 = vmatprep.subr.mxu0 %v717
    %2203 = vmatpush1.msra.mxu0 %v716
    %2204 = vmatprep.subr.mxu0 %v725
    %2205 = vmatpush1.msra.mxu0 %v724
    %2206 = vmatprep.subr.mxu0 %v733
    %2207 = vmatpush1.msra.mxu0 %v732
    %2208 = vmatprep.subr.mxu0 %v741
    %2209 = vmatpush1.msra.mxu0 %v740
    %2210 = vmatprep.subr.mxu0 %v749
    %2211 = vmatpush1.msra.mxu0 %v748
    %2212 = vmatprep.subr.mxu0 %v757
    %2213 = vmatpush1.msra.mxu0 %v756
    %2214 = vmatprep.subr.mxu0 %v765
    %2215 = vmatpush1.msra.mxu0 %v764
    %2216 = vmatprep.subr.mxu0 %v773
    %2217 = vmatpush1.msra.mxu0 %v772
    %2218 = vmatprep.subr.mxu0 %v781
    %2219 = vmatpush1.msra.mxu0 %v780
    %2220 = vmatprep.subr.mxu0 %v789
    %2221 = vmatpush1.msra.mxu0 %v788
    %2222 = vmatprep.subr.mxu0 %v797
    %2223 = vmatpush1.msra.mxu0 %v796
    %2224 = vmatprep.subr.mxu0 %v805
    %2225 = vmatpush1.msra.mxu0 %v804
    %2226 = vmatprep.subr.mxu0 %v813
    %2227 = vmatpush1.msra.mxu0 %v812
    %2228 = vmatprep.subr.mxu0 %v821
    %2229 = vmatpush1.msra.mxu0 %v820
    %2230 = vmatprep.subr.mxu0 %v829
    %2231 = vmatpush1.msra.mxu0 %v828
    %2232 = vmatprep.subr.mxu0 %v837
    %2233 = vmatpush1.msra.mxu0 %v836
    %2234 = vmatprep.subr.mxu0 %v845
    %2235 = vmatpush1.msra.mxu0 %v844
    %2236 = vmatprep.subr.mxu0 %v853
    %2237 = vmatpush1.msra.mxu0 %v852
    %2238 = vmatprep.subr.mxu0 %v861
    %2239 = vmatpush1.msra.mxu0 %v860
    %2240 = vmatprep.subr.mxu0 %v869
    %2241 = vmatpush1.msra.mxu0 %v868
    %2242 = vmatprep.subr.mxu0 %v877
    %2243 = vmatpush1.msra.mxu0 %v876
    %2244 = vmatprep.subr.mxu0 %v885
    %2245 = vmatpush1.msra.mxu0 %v884
    %2246 = vmatprep.subr.mxu0 %v893
    %2247 = vmatpush1.msra.mxu0 %v892
    %2248 = vmatprep.subr.mxu0 %v901
    %2249 = vmatpush1.msra.mxu0 %v900
    %2250 = vmatprep.subr.mxu0 %v909
    %2251 = vmatpush1.msra.mxu0 %v908
    %2252 = vmatprep.subr.mxu0 %v917
    %2253 = vmatpush1.msra.mxu0 %v916
    %2254 = vmatprep.subr.mxu0 %v925
    %2255 = vmatpush1.msra.mxu0 %v924
    %2256 = vmatprep.mubr.f32.mxu0 %v1967
    %2257 = vmatmul.mubr.f32.gmra.mrb[0].mxu0 %v1966
    %v2258 = vpop.f32.mrb[0].mxu0
    %v2259 = vadd.f32 0.0, %v2258
    %v2260 = vpop.f32.mrb[0].mxu0
    %v2261 = vadd.f32 0.0, %v2260
    %2262 = vdwg.mxu0
    %v2263 = vadd.f32 %v1971, %v2046
    %v2264 = vadd.f32 %v1972, %v2048
    %v2265 = vadd.f32 %v1973, %v2117
    %v2266 = vadd.f32 %v1974, %v2119
    %v2267 = vadd.f32 %v1975, %v2188
    %v2268 = vadd.f32 %v1976, %v2190
    %v2269 = vadd.f32 %v1977, %v2259
    %v2270 = vadd.f32 %v1978, %v2261
    %v2271 = vxor.u32 %v2263, 2147483648
    %v2272 = vxor.u32 %v2264, 2147483648
    %v2273 = vmul.f32 %v2271, 1.442695
    %v2274 = vpow.pop %v2273
    %v2275 = vmul.f32 %v2272, 1.442695
    %v2276 = vpow.pop %v2275
    %v2277 = vadd.f32 %v2274, 1.0
    %v2278 = vadd.f32 %v2276, 1.0
    %v2279 = vrcp.pop %v2277
    %v2280 = vmul.f32 1.0, %v2279
    %v2281 = vrcp.pop %v2278
    %v2282 = vmul.f32 1.0, %v2281
    %v2283 = vxor.u32 %v2265, 2147483648
    %v2284 = vxor.u32 %v2266, 2147483648
    %v2285 = vmul.f32 %v2283, 1.442695
    %v2286 = vpow.pop %v2285
    %v2287 = vmul.f32 %v2284, 1.442695
    %v2288 = vpow.pop %v2287
    %v2289 = vadd.f32 %v2286, 1.0
    %v2290 = vadd.f32 %v2288, 1.0
    %v2291 = vrcp.pop %v2289
    %v2292 = vmul.f32 1.0, %v2291
    %v2293 = vrcp.pop %v2290
    %v2294 = vmul.f32 1.0, %v2293
    %v2295 = vtanh.pop %v2267
    %v2296 = vtanh.pop %v2268
    %v2297 = vxor.u32 %v2269, 2147483648
    %v2298 = vxor.u32 %v2270, 2147483648
    %v2299 = vmul.f32 %v2297, 1.442695
    %v2300 = vpow.pop %v2299
    %v2301 = vmul.f32 %v2298, 1.442695
    %v2302 = vpow.pop %v2301
    %v2303 = vadd.f32 %v2300, 1.0
    %v2304 = vadd.f32 %v2302, 1.0
    %v2305 = vrcp.pop %v2303
    %v2306 = vmul.f32 1.0, %v2305
    %v2307 = vrcp.pop %v2304
    %v2308 = vmul.f32 1.0, %v2307
    %v2309 = vmul.f32 %v2292, %v1962
    %v2310 = vmul.f32 %v2294, %v1963
    %v2311 = vmul.f32 %v2280, %v2295
    %v2312 = vmul.f32 %v2282, %v2296
    %v2313 = vadd.f32 %v2309, %v2311
    %v2314 = vadd.f32 %v2310, %v2312
    %v2315 = vtanh.pop %v2313
    %v2316 = vtanh.pop %v2314
    %v2317 = vmul.f32 %v2306, %v2315
    %v2318 = vmul.f32 %v2308, %v2316
    %s2319 = smul.u32 4, 8
    %s2320 = smul.addr %s2319, 8
    %s2321 = scalar_lea.vmem [#allocation2], %s2320
    %v2322 = vld [vmem:[%s2321] sm:$0xff]
    %v2323 = vld [vmem:[%s2321 + $0x8] sm:$0xff]
    %v2324 = vld [vmem:[%s2321 + $0x10] sm:$0xff]
    %v2325 = vld [vmem:[%s2321 + $0x18] sm:$0xff]
    %v2326 = vld [vmem:[%s2321 + $0x20] sm:$0xff]
    %v2327 = vld [vmem:[%s2321 + $0x28] sm:$0xff]
    %v2328 = vld [vmem:[%s2321 + $0x30] sm:$0xff]
    %v2329 = vld [vmem:[%s2321 + $0x38] sm:$0xff]
    %2330 = vmatprep.subr.mxu0 %v671
    %2331 = vmatpush1.msra.mxu0 %v670
    %2332 = vmatprep.subr.mxu0 %v679
    %2333 = vmatpush1.msra.mxu0 %v678
    %2334 = vmatprep.subr.mxu0 %v687
    %2335 = vmatpush1.msra.mxu0 %v686
    %2336 = vmatprep.subr.mxu0 %v695
    %2337 = vmatpush1.msra.mxu0 %v694
    %2338 = vmatprep.subr.mxu0 %v703
    %2339 = vmatpush1.msra.mxu0 %v702
    %2340 = vmatprep.subr.mxu0 %v711
    %2341 = vmatpush1.msra.mxu0 %v710
    %2342 = vmatprep.subr.mxu0 %v719
    %2343 = vmatpush1.msra.mxu0 %v718
    %2344 = vmatprep.subr.mxu0 %v727
    %2345 = vmatpush1.msra.mxu0 %v726
    %2346 = vmatprep.subr.mxu0 %v735
    %2347 = vmatpush1.msra.mxu0 %v734
    %2348 = vmatprep.subr.mxu0 %v743
    %2349 = vmatpush1.msra.mxu0 %v742
    %2350 = vmatprep.subr.mxu0 %v751
    %2351 = vmatpush1.msra.mxu0 %v750
    %2352 = vmatprep.subr.mxu0 %v759
    %2353 = vmatpush1.msra.mxu0 %v758
    %2354 = vmatprep.subr.mxu0 %v767
    %2355 = vmatpush1.msra.mxu0 %v766
    %2356 = vmatprep.subr.mxu0 %v775
    %2357 = vmatpush1.msra.mxu0 %v774
    %2358 = vmatprep.subr.mxu0 %v783
    %2359 = vmatpush1.msra.mxu0 %v782
    %2360 = vmatprep.subr.mxu0 %v791
    %2361 = vmatpush1.msra.mxu0 %v790
    %2362 = vmatprep.subr.mxu0 %v799
    %2363 = vmatpush1.msra.mxu0 %v798
    %2364 = vmatprep.subr.mxu0 %v807
    %2365 = vmatpush1.msra.mxu0 %v806
    %2366 = vmatprep.subr.mxu0 %v815
    %2367 = vmatpush1.msra.mxu0 %v814
    %2368 = vmatprep.subr.mxu0 %v823
    %2369 = vmatpush1.msra.mxu0 %v822
    %2370 = vmatprep.subr.mxu0 %v831
    %2371 = vmatpush1.msra.mxu0 %v830
    %2372 = vmatprep.subr.mxu0 %v839
    %2373 = vmatpush1.msra.mxu0 %v838
    %2374 = vmatprep.subr.mxu0 %v847
    %2375 = vmatpush1.msra.mxu0 %v846
    %2376 = vmatprep.subr.mxu0 %v855
    %2377 = vmatpush1.msra.mxu0 %v854
    %2378 = vmatprep.subr.mxu0 %v863
    %2379 = vmatpush1.msra.mxu0 %v862
    %2380 = vmatprep.subr.mxu0 %v871
    %2381 = vmatpush1.msra.mxu0 %v870
    %2382 = vmatprep.subr.mxu0 %v879
    %2383 = vmatpush1.msra.mxu0 %v878
    %2384 = vmatprep.subr.mxu0 %v887
    %2385 = vmatpush1.msra.mxu0 %v886
    %2386 = vmatprep.subr.mxu0 %v895
    %2387 = vmatpush1.msra.mxu0 %v894
    %2388 = vmatprep.subr.mxu0 %v903
    %2389 = vmatpush1.msra.mxu0 %v902
    %2390 = vmatprep.subr.mxu0 %v911
    %2391 = vmatpush1.msra.mxu0 %v910
    %2392 = vmatprep.subr.mxu0 %v919
    %2393 = vmatpush1.msra.mxu0 %v918
    %2394 = vmatprep.mubr.f32.mxu0 %v2318
    %2395 = vmatmul.mubr.f32.gmra.mrb[0].mxu0 %v2317
    %v2396 = vpop.f32.mrb[0].mxu0
    %v2397 = vadd.f32 0.0, %v2396
    %v2398 = vpop.f32.mrb[0].mxu0
    %v2399 = vadd.f32 0.0, %v2398
    %2400 = vdwg.mxu0
    %2401 = vmatprep.subr.mxu0 %v673
    %2402 = vmatpush1.msra.mxu0 %v672
    %2403 = vmatprep.subr.mxu0 %v681
    %2404 = vmatpush1.msra.mxu0 %v680
    %2405 = vmatprep.subr.mxu0 %v689
    %2406 = vmatpush1.msra.mxu0 %v688
    %2407 = vmatprep.subr.mxu0 %v697
    %2408 = vmatpush1.msra.mxu0 %v696
    %2409 = vmatprep.subr.mxu0 %v705
    %2410 = vmatpush1.msra.mxu0 %v704
    %2411 = vmatprep.subr.mxu0 %v713
    %2412 = vmatpush1.msra.mxu0 %v712
    %2413 = vmatprep.subr.mxu0 %v721
    %2414 = vmatpush1.msra.mxu0 %v720
    %2415 = vmatprep.subr.mxu0 %v729
    %2416 = vmatpush1.msra.mxu0 %v728
    %2417 = vmatprep.subr.mxu0 %v737
    %2418 = vmatpush1.msra.mxu0 %v736
    %2419 = vmatprep.subr.mxu0 %v745
    %2420 = vmatpush1.msra.mxu0 %v744
    %2421 = vmatprep.subr.mxu0 %v753
    %2422 = vmatpush1.msra.mxu0 %v752
    %2423 = vmatprep.subr.mxu0 %v761
    %2424 = vmatpush1.msra.mxu0 %v760
    %2425 = vmatprep.subr.mxu0 %v769
    %2426 = vmatpush1.msra.mxu0 %v768
    %2427 = vmatprep.subr.mxu0 %v777
    %2428 = vmatpush1.msra.mxu0 %v776
    %2429 = vmatprep.subr.mxu0 %v785
    %2430 = vmatpush1.msra.mxu0 %v784
    %2431 = vmatprep.subr.mxu0 %v793
    %2432 = vmatpush1.msra.mxu0 %v792
    %2433 = vmatprep.subr.mxu0 %v801
    %2434 = vmatpush1.msra.mxu0 %v800
    %2435 = vmatprep.subr.mxu0 %v809
    %2436 = vmatpush1.msra.mxu0 %v808
    %2437 = vmatprep.subr.mxu0 %v817
    %2438 = vmatpush1.msra.mxu0 %v816
    %2439 = vmatprep.subr.mxu0 %v825
    %2440 = vmatpush1.msra.mxu0 %v824
    %2441 = vmatprep.subr.mxu0 %v833
    %2442 = vmatpush1.msra.mxu0 %v832
    %2443 = vmatprep.subr.mxu0 %v841
    %2444 = vmatpush1.msra.mxu0 %v840
    %2445 = vmatprep.subr.mxu0 %v849
    %2446 = vmatpush1.msra.mxu0 %v848
    %2447 = vmatprep.subr.mxu0 %v857
    %2448 = vmatpush1.msra.mxu0 %v856
    %2449 = vmatprep.subr.mxu0 %v865
    %2450 = vmatpush1.msra.mxu0 %v864
    %2451 = vmatprep.subr.mxu0 %v873
    %2452 = vmatpush1.msra.mxu0 %v872
    %2453 = vmatprep.subr.mxu0 %v881
    %2454 = vmatpush1.msra.mxu0 %v880
    %2455 = vmatprep.subr.mxu0 %v889
    %2456 = vmatpush1.msra.mxu0 %v888
    %2457 = vmatprep.subr.mxu0 %v897
    %2458 = vmatpush1.msra.mxu0 %v896
    %2459 = vmatprep.subr.mxu0 %v905
    %2460 = vmatpush1.msra.mxu0 %v904
    %2461 = vmatprep.subr.mxu0 %v913
    %2462 = vmatpush1.msra.mxu0 %v912
    %2463 = vmatprep.subr.mxu0 %v921
    %2464 = vmatpush1.msra.mxu0 %v920
    %2465 = vmatprep.mubr.f32.mxu0 %v2318
    %2466 = vmatmul.mubr.f32.gmra.mrb[0].mxu0 %v2317
    %v2467 = vpop.f32.mrb[0].mxu0
    %v2468 = vadd.f32 0.0, %v2467
    %v2469 = vpop.f32.mrb[0].mxu0
    %v2470 = vadd.f32 0.0, %v2469
    %2471 = vdwg.mxu0
    %2472 = vmatprep.subr.mxu0 %v675
    %2473 = vmatpush1.msra.mxu0 %v674
    %2474 = vmatprep.subr.mxu0 %v683
    %2475 = vmatpush1.msra.mxu0 %v682
    %2476 = vmatprep.subr.mxu0 %v691
    %2477 = vmatpush1.msra.mxu0 %v690
    %2478 = vmatprep.subr.mxu0 %v699
    %2479 = vmatpush1.msra.mxu0 %v698
    %2480 = vmatprep.subr.mxu0 %v707
    %2481 = vmatpush1.msra.mxu0 %v706
    %2482 = vmatprep.subr.mxu0 %v715
    %2483 = vmatpush1.msra.mxu0 %v714
    %2484 = vmatprep.subr.mxu0 %v723
    %2485 = vmatpush1.msra.mxu0 %v722
    %2486 = vmatprep.subr.mxu0 %v731
    %2487 = vmatpush1.msra.mxu0 %v730
    %2488 = vmatprep.subr.mxu0 %v739
    %2489 = vmatpush1.msra.mxu0 %v738
    %2490 = vmatprep.subr.mxu0 %v747
    %2491 = vmatpush1.msra.mxu0 %v746
    %2492 = vmatprep.subr.mxu0 %v755
    %2493 = vmatpush1.msra.mxu0 %v754
    %2494 = vmatprep.subr.mxu0 %v763
    %2495 = vmatpush1.msra.mxu0 %v762
    %2496 = vmatprep.subr.mxu0 %v771
    %2497 = vmatpush1.msra.mxu0 %v770
    %2498 = vmatprep.subr.mxu0 %v779
    %2499 = vmatpush1.msra.mxu0 %v778
    %2500 = vmatprep.subr.mxu0 %v787
    %2501 = vmatpush1.msra.mxu0 %v786
    %2502 = vmatprep.subr.mxu0 %v795
    %2503 = vmatpush1.msra.mxu0 %v794
    %2504 = vmatprep.subr.mxu0 %v803
    %2505 = vmatpush1.msra.mxu0 %v802
    %2506 = vmatprep.subr.mxu0 %v811
    %2507 = vmatpush1.msra.mxu0 %v810
    %2508 = vmatprep.subr.mxu0 %v819
    %2509 = vmatpush1.msra.mxu0 %v818
    %2510 = vmatprep.subr.mxu0 %v827
    %2511 = vmatpush1.msra.mxu0 %v826
    %2512 = vmatprep.subr.mxu0 %v835
    %2513 = vmatpush1.msra.mxu0 %v834
    %2514 = vmatprep.subr.mxu0 %v843
    %2515 = vmatpush1.msra.mxu0 %v842
    %2516 = vmatprep.subr.mxu0 %v851
    %2517 = vmatpush1.msra.mxu0 %v850
    %2518 = vmatprep.subr.mxu0 %v859
    %2519 = vmatpush1.msra.mxu0 %v858
    %2520 = vmatprep.subr.mxu0 %v867
    %2521 = vmatpush1.msra.mxu0 %v866
    %2522 = vmatprep.subr.mxu0 %v875
    %2523 = vmatpush1.msra.mxu0 %v874
    %2524 = vmatprep.subr.mxu0 %v883
    %2525 = vmatpush1.msra.mxu0 %v882
    %2526 = vmatprep.subr.mxu0 %v891
    %2527 = vmatpush1.msra.mxu0 %v890
    %2528 = vmatprep.subr.mxu0 %v899
    %2529 = vmatpush1.msra.mxu0 %v898
    %2530 = vmatprep.subr.mxu0 %v907
    %2531 = vmatpush1.msra.mxu0 %v906
    %2532 = vmatprep.subr.mxu0 %v915
    %2533 = vmatpush1.msra.mxu0 %v914
    %2534 = vmatprep.subr.mxu0 %v923
    %2535 = vmatpush1.msra.mxu0 %v922
    %2536 = vmatprep.mubr.f32.mxu0 %v2318
    %2537 = vmatmul.mubr.f32.gmra.mrb[0].mxu0 %v2317
    %v2538 = vpop.f32.mrb[0].mxu0
    %v2539 = vadd.f32 0.0, %v2538
    %v2540 = vpop.f32.mrb[0].mxu0
    %v2541 = vadd.f32 0.0, %v2540
    %2542 = vdwg.mxu0
    %2543 = vmatprep.subr.mxu0 %v677
    %2544 = vmatpush1.msra.mxu0 %v676
    %2545 = vmatprep.subr.mxu0 %v685
    %2546 = vmatpush1.msra.mxu0 %v684
    %2547 = vmatprep.subr.mxu0 %v693
    %2548 = vmatpush1.msra.mxu0 %v692
    %2549 = vmatprep.subr.mxu0 %v701
    %2550 = vmatpush1.msra.mxu0 %v700
    %2551 = vmatprep.subr.mxu0 %v709
    %2552 = vmatpush1.msra.mxu0 %v708
    %2553 = vmatprep.subr.mxu0 %v717
    %2554 = vmatpush1.msra.mxu0 %v716
    %2555 = vmatprep.subr.mxu0 %v725
    %2556 = vmatpush1.msra.mxu0 %v724
    %2557 = vmatprep.subr.mxu0 %v733
    %2558 = vmatpush1.msra.mxu0 %v732
    %2559 = vmatprep.subr.mxu0 %v741
    %2560 = vmatpush1.msra.mxu0 %v740
    %2561 = vmatprep.subr.mxu0 %v749
    %2562 = vmatpush1.msra.mxu0 %v748
    %2563 = vmatprep.subr.mxu0 %v757
    %2564 = vmatpush1.msra.mxu0 %v756
    %2565 = vmatprep.subr.mxu0 %v765
    %2566 = vmatpush1.msra.mxu0 %v764
    %2567 = vmatprep.subr.mxu0 %v773
    %2568 = vmatpush1.msra.mxu0 %v772
    %2569 = vmatprep.subr.mxu0 %v781
    %2570 = vmatpush1.msra.mxu0 %v780
    %2571 = vmatprep.subr.mxu0 %v789
    %2572 = vmatpush1.msra.mxu0 %v788
    %2573 = vmatprep.subr.mxu0 %v797
    %2574 = vmatpush1.msra.mxu0 %v796
    %2575 = vmatprep.subr.mxu0 %v805
    %2576 = vmatpush1.msra.mxu0 %v804
    %2577 = vmatprep.subr.mxu0 %v813
    %2578 = vmatpush1.msra.mxu0 %v812
    %2579 = vmatprep.subr.mxu0 %v821
    %2580 = vmatpush1.msra.mxu0 %v820
    %2581 = vmatprep.subr.mxu0 %v829
    %2582 = vmatpush1.msra.mxu0 %v828
    %2583 = vmatprep.subr.mxu0 %v837
    %2584 = vmatpush1.msra.mxu0 %v836
    %2585 = vmatprep.subr.mxu0 %v845
    %2586 = vmatpush1.msra.mxu0 %v844
    %2587 = vmatprep.subr.mxu0 %v853
    %2588 = vmatpush1.msra.mxu0 %v852
    %2589 = vmatprep.subr.mxu0 %v861
    %2590 = vmatpush1.msra.mxu0 %v860
    %2591 = vmatprep.subr.mxu0 %v869
    %2592 = vmatpush1.msra.mxu0 %v868
    %2593 = vmatprep.subr.mxu0 %v877
    %2594 = vmatpush1.msra.mxu0 %v876
    %2595 = vmatprep.subr.mxu0 %v885
    %2596 = vmatpush1.msra.mxu0 %v884
    %2597 = vmatprep.subr.mxu0 %v893
    %2598 = vmatpush1.msra.mxu0 %v892
    %2599 = vmatprep.subr.mxu0 %v901
    %2600 = vmatpush1.msra.mxu0 %v900
    %2601 = vmatprep.subr.mxu0 %v909
    %2602 = vmatpush1.msra.mxu0 %v908
    %2603 = vmatprep.subr.mxu0 %v917
    %2604 = vmatpush1.msra.mxu0 %v916
    %2605 = vmatprep.subr.mxu0 %v925
    %2606 = vmatpush1.msra.mxu0 %v924
    %2607 = vmatprep.mubr.f32.mxu0 %v2318
    %2608 = vmatmul.mubr.f32.gmra.mrb[0].mxu0 %v2317
    %v2609 = vpop.f32.mrb[0].mxu0
    %v2610 = vadd.f32 0.0, %v2609
    %v2611 = vpop.f32.mrb[0].mxu0
    %v2612 = vadd.f32 0.0, %v2611
    %2613 = vdwg.mxu0
    %v2614 = vadd.f32 %v2322, %v2397
    %v2615 = vadd.f32 %v2323, %v2399
    %v2616 = vadd.f32 %v2324, %v2468
    %v2617 = vadd.f32 %v2325, %v2470
    %v2618 = vadd.f32 %v2326, %v2539
    %v2619 = vadd.f32 %v2327, %v2541
    %v2620 = vadd.f32 %v2328, %v2610
    %v2621 = vadd.f32 %v2329, %v2612
    %v2622 = vxor.u32 %v2614, 2147483648
    %v2623 = vxor.u32 %v2615, 2147483648
    %v2624 = vmul.f32 %v2622, 1.442695
    %v2625 = vpow.pop %v2624
    %v2626 = vmul.f32 %v2623, 1.442695
    %v2627 = vpow.pop %v2626
    %v2628 = vadd.f32 %v2625, 1.0
    %v2629 = vadd.f32 %v2627, 1.0
    %v2630 = vrcp.pop %v2628
    %v2631 = vmul.f32 1.0, %v2630
    %v2632 = vrcp.pop %v2629
    %v2633 = vmul.f32 1.0, %v2632
    %v2634 = vxor.u32 %v2616, 2147483648
    %v2635 = vxor.u32 %v2617, 2147483648
    %v2636 = vmul.f32 %v2634, 1.442695
    %v2637 = vpow.pop %v2636
    %v2638 = vmul.f32 %v2635, 1.442695
    %v2639 = vpow.pop %v2638
    %v2640 = vadd.f32 %v2637, 1.0
    %v2641 = vadd.f32 %v2639, 1.0
    %v2642 = vrcp.pop %v2640
    %v2643 = vmul.f32 1.0, %v2642
    %v2644 = vrcp.pop %v2641
    %v2645 = vmul.f32 1.0, %v2644
    %v2646 = vtanh.pop %v2618
    %v2647 = vtanh.pop %v2619
    %v2648 = vxor.u32 %v2620, 2147483648
    %v2649 = vxor.u32 %v2621, 2147483648
    %v2650 = vmul.f32 %v2648, 1.442695
    %v2651 = vpow.pop %v2650
    %v2652 = vmul.f32 %v2649, 1.442695
    %v2653 = vpow.pop %v2652
    %v2654 = vadd.f32 %v2651, 1.0
    %v2655 = vadd.f32 %v2653, 1.0
    %v2656 = vrcp.pop %v2654
    %v2657 = vmul.f32 1.0, %v2656
    %v2658 = vrcp.pop %v2655
    %v2659 = vmul.f32 1.0, %v2658
    %v2660 = vmul.f32 %v2643, %v2313
    %v2661 = vmul.f32 %v2645, %v2314
    %v2662 = vmul.f32 %v2631, %v2646
    %v2663 = vmul.f32 %v2633, %v2647
    %v2664 = vadd.f32 %v2660, %v2662
    %v2665 = vadd.f32 %v2661, %v2663
    %v2666 = vtanh.pop %v2664
    %v2667 = vtanh.pop %v2665
    %v2668 = vmul.f32 %v2657, %v2666
    %v2669 = vmul.f32 %v2659, %v2667
    %s2670 = smul.u32 5, 8
    %s2671 = smul.addr %s2670, 8
    %s2672 = scalar_lea.vmem [#allocation2], %s2671
    %v2673 = vld [vmem:[%s2672] sm:$0xff]
    %v2674 = vld [vmem:[%s2672 + $0x8] sm:$0xff]
    %v2675 = vld [vmem:[%s2672 + $0x10] sm:$0xff]
    %v2676 = vld [vmem:[%s2672 + $0x18] sm:$0xff]
    %v2677 = vld [vmem:[%s2672 + $0x20] sm:$0xff]
    %v2678 = vld [vmem:[%s2672 + $0x28] sm:$0xff]
    %v2679 = vld [vmem:[%s2672 + $0x30] sm:$0xff]
    %v2680 = vld [vmem:[%s2672 + $0x38] sm:$0xff]
    %2681 = vmatprep.subr.mxu0 %v671
    %2682 = vmatpush1.msra.mxu0 %v670
    %2683 = vmatprep.subr.mxu0 %v679
    %2684 = vmatpush1.msra.mxu0 %v678
    %2685 = vmatprep.subr.mxu0 %v687
    %2686 = vmatpush1.msra.mxu0 %v686
    %2687 = vmatprep.subr.mxu0 %v695
    %2688 = vmatpush1.msra.mxu0 %v694
    %2689 = vmatprep.subr.mxu0 %v703
    %2690 = vmatpush1.msra.mxu0 %v702
    %2691 = vmatprep.subr.mxu0 %v711
    %2692 = vmatpush1.msra.mxu0 %v710
    %2693 = vmatprep.subr.mxu0 %v719
    %2694 = vmatpush1.msra.mxu0 %v718
    %2695 = vmatprep.subr.mxu0 %v727
    %2696 = vmatpush1.msra.mxu0 %v726
    %2697 = vmatprep.subr.mxu0 %v735
    %2698 = vmatpush1.msra.mxu0 %v734
    %2699 = vmatprep.subr.mxu0 %v743
    %2700 = vmatpush1.msra.mxu0 %v742
    %2701 = vmatprep.subr.mxu0 %v751
    %2702 = vmatpush1.msra.mxu0 %v750
    %2703 = vmatprep.subr.mxu0 %v759
    %2704 = vmatpush1.msra.mxu0 %v758
    %2705 = vmatprep.subr.mxu0 %v767
    %2706 = vmatpush1.msra.mxu0 %v766
    %2707 = vmatprep.subr.mxu0 %v775
    %2708 = vmatpush1.msra.mxu0 %v774
    %2709 = vmatprep.subr.mxu0 %v783
    %2710 = vmatpush1.msra.mxu0 %v782
    %2711 = vmatprep.subr.mxu0 %v791
    %2712 = vmatpush1.msra.mxu0 %v790
    %2713 = vmatprep.subr.mxu0 %v799
    %2714 = vmatpush1.msra.mxu0 %v798
    %2715 = vmatprep.subr.mxu0 %v807
    %2716 = vmatpush1.msra.mxu0 %v806
    %2717 = vmatprep.subr.mxu0 %v815
    %2718 = vmatpush1.msra.mxu0 %v814
    %2719 = vmatprep.subr.mxu0 %v823
    %2720 = vmatpush1.msra.mxu0 %v822
    %2721 = vmatprep.subr.mxu0 %v831
    %2722 = vmatpush1.msra.mxu0 %v830
    %2723 = vmatprep.subr.mxu0 %v839
    %2724 = vmatpush1.msra.mxu0 %v838
    %2725 = vmatprep.subr.mxu0 %v847
    %2726 = vmatpush1.msra.mxu0 %v846
    %2727 = vmatprep.subr.mxu0 %v855
    %2728 = vmatpush1.msra.mxu0 %v854
    %2729 = vmatprep.subr.mxu0 %v863
    %2730 = vmatpush1.msra.mxu0 %v862
    %2731 = vmatprep.subr.mxu0 %v871
    %2732 = vmatpush1.msra.mxu0 %v870
    %2733 = vmatprep.subr.mxu0 %v879
    %2734 = vmatpush1.msra.mxu0 %v878
    %2735 = vmatprep.subr.mxu0 %v887
    %2736 = vmatpush1.msra.mxu0 %v886
    %2737 = vmatprep.subr.mxu0 %v895
    %2738 = vmatpush1.msra.mxu0 %v894
    %2739 = vmatprep.subr.mxu0 %v903
    %2740 = vmatpush1.msra.mxu0 %v902
    %2741 = vmatprep.subr.mxu0 %v911
    %2742 = vmatpush1.msra.mxu0 %v910
    %2743 = vmatprep.subr.mxu0 %v919
    %2744 = vmatpush1.msra.mxu0 %v918
    %2745 = vmatprep.mubr.f32.mxu0 %v2669
    %2746 = vmatmul.mubr.f32.gmra.mrb[0].mxu0 %v2668
    %v2747 = vpop.f32.mrb[0].mxu0
    %v2748 = vadd.f32 0.0, %v2747
    %v2749 = vpop.f32.mrb[0].mxu0
    %v2750 = vadd.f32 0.0, %v2749
    %2751 = vdwg.mxu0
    %2752 = vmatprep.subr.mxu0 %v673
    %2753 = vmatpush1.msra.mxu0 %v672
    %2754 = vmatprep.subr.mxu0 %v681
    %2755 = vmatpush1.msra.mxu0 %v680
    %2756 = vmatprep.subr.mxu0 %v689
    %2757 = vmatpush1.msra.mxu0 %v688
    %2758 = vmatprep.subr.mxu0 %v697
    %2759 = vmatpush1.msra.mxu0 %v696
    %2760 = vmatprep.subr.mxu0 %v705
    %2761 = vmatpush1.msra.mxu0 %v704
    %2762 = vmatprep.subr.mxu0 %v713
    %2763 = vmatpush1.msra.mxu0 %v712
    %2764 = vmatprep.subr.mxu0 %v721
    %2765 = vmatpush1.msra.mxu0 %v720
    %2766 = vmatprep.subr.mxu0 %v729
    %2767 = vmatpush1.msra.mxu0 %v728
    %2768 = vmatprep.subr.mxu0 %v737
    %2769 = vmatpush1.msra.mxu0 %v736
    %2770 = vmatprep.subr.mxu0 %v745
    %2771 = vmatpush1.msra.mxu0 %v744
    %2772 = vmatprep.subr.mxu0 %v753
    %2773 = vmatpush1.msra.mxu0 %v752
    %2774 = vmatprep.subr.mxu0 %v761
    %2775 = vmatpush1.msra.mxu0 %v760
    %2776 = vmatprep.subr.mxu0 %v769
    %2777 = vmatpush1.msra.mxu0 %v768
    %2778 = vmatprep.subr.mxu0 %v777
    %2779 = vmatpush1.msra.mxu0 %v776
    %2780 = vmatprep.subr.mxu0 %v785
    %2781 = vmatpush1.msra.mxu0 %v784
    %2782 = vmatprep.subr.mxu0 %v793
    %2783 = vmatpush1.msra.mxu0 %v792
    %2784 = vmatprep.subr.mxu0 %v801
    %2785 = vmatpush1.msra.mxu0 %v800
    %2786 = vmatprep.subr.mxu0 %v809
    %2787 = vmatpush1.msra.mxu0 %v808
    %2788 = vmatprep.subr.mxu0 %v817
    %2789 = vmatpush1.msra.mxu0 %v816
    %2790 = vmatprep.subr.mxu0 %v825
    %2791 = vmatpush1.msra.mxu0 %v824
    %2792 = vmatprep.subr.mxu0 %v833
    %2793 = vmatpush1.msra.mxu0 %v832
    %2794 = vmatprep.subr.mxu0 %v841
    %2795 = vmatpush1.msra.mxu0 %v840
    %2796 = vmatprep.subr.mxu0 %v849
    %2797 = vmatpush1.msra.mxu0 %v848
    %2798 = vmatprep.subr.mxu0 %v857
    %2799 = vmatpush1.msra.mxu0 %v856
    %2800 = vmatprep.subr.mxu0 %v865
    %2801 = vmatpush1.msra.mxu0 %v864
    %2802 = vmatprep.subr.mxu0 %v873
    %2803 = vmatpush1.msra.mxu0 %v872
    %2804 = vmatprep.subr.mxu0 %v881
    %2805 = vmatpush1.msra.mxu0 %v880
    %2806 = vmatprep.subr.mxu0 %v889
    %2807 = vmatpush1.msra.mxu0 %v888
    %2808 = vmatprep.subr.mxu0 %v897
    %2809 = vmatpush1.msra.mxu0 %v896
    %2810 = vmatprep.subr.mxu0 %v905
    %2811 = vmatpush1.msra.mxu0 %v904
    %2812 = vmatprep.subr.mxu0 %v913
    %2813 = vmatpush1.msra.mxu0 %v912
    %2814 = vmatprep.subr.mxu0 %v921
    %2815 = vmatpush1.msra.mxu0 %v920
    %2816 = vmatprep.mubr.f32.mxu0 %v2669
    %2817 = vmatmul.mubr.f32.gmra.mrb[0].mxu0 %v2668
    %v2818 = vpop.f32.mrb[0].mxu0
    %v2819 = vadd.f32 0.0, %v2818
    %v2820 = vpop.f32.mrb[0].mxu0
    %v2821 = vadd.f32 0.0, %v2820
    %2822 = vdwg.mxu0
    %2823 = vmatprep.subr.mxu0 %v675
    %2824 = vmatpush1.msra.mxu0 %v674
    %2825 = vmatprep.subr.mxu0 %v683
    %2826 = vmatpush1.msra.mxu0 %v682
    %2827 = vmatprep.subr.mxu0 %v691
    %2828 = vmatpush1.msra.mxu0 %v690
    %2829 = vmatprep.subr.mxu0 %v699
    %2830 = vmatpush1.msra.mxu0 %v698
    %2831 = vmatprep.subr.mxu0 %v707
    %2832 = vmatpush1.msra.mxu0 %v706
    %2833 = vmatprep.subr.mxu0 %v715
    %2834 = vmatpush1.msra.mxu0 %v714
    %2835 = vmatprep.subr.mxu0 %v723
    %2836 = vmatpush1.msra.mxu0 %v722
    %2837 = vmatprep.subr.mxu0 %v731
    %2838 = vmatpush1.msra.mxu0 %v730
    %2839 = vmatprep.subr.mxu0 %v739
    %2840 = vmatpush1.msra.mxu0 %v738
    %2841 = vmatprep.subr.mxu0 %v747
    %2842 = vmatpush1.msra.mxu0 %v746
    %2843 = vmatprep.subr.mxu0 %v755
    %2844 = vmatpush1.msra.mxu0 %v754
    %2845 = vmatprep.subr.mxu0 %v763
    %2846 = vmatpush1.msra.mxu0 %v762
    %2847 = vmatprep.subr.mxu0 %v771
    %2848 = vmatpush1.msra.mxu0 %v770
    %2849 = vmatprep.subr.mxu0 %v779
    %2850 = vmatpush1.msra.mxu0 %v778
    %2851 = vmatprep.subr.mxu0 %v787
    %2852 = vmatpush1.msra.mxu0 %v786
    %2853 = vmatprep.subr.mxu0 %v795
    %2854 = vmatpush1.msra.mxu0 %v794
    %2855 = vmatprep.subr.mxu0 %v803
    %2856 = vmatpush1.msra.mxu0 %v802
    %2857 = vmatprep.subr.mxu0 %v811
    %2858 = vmatpush1.msra.mxu0 %v810
    %2859 = vmatprep.subr.mxu0 %v819
    %2860 = vmatpush1.msra.mxu0 %v818
    %2861 = vmatprep.subr.mxu0 %v827
    %2862 = vmatpush1.msra.mxu0 %v826
    %2863 = vmatprep.subr.mxu0 %v835
    %2864 = vmatpush1.msra.mxu0 %v834
    %2865 = vmatprep.subr.mxu0 %v843
    %2866 = vmatpush1.msra.mxu0 %v842
    %2867 = vmatprep.subr.mxu0 %v851
    %2868 = vmatpush1.msra.mxu0 %v850
    %2869 = vmatprep.subr.mxu0 %v859
    %2870 = vmatpush1.msra.mxu0 %v858
    %2871 = vmatprep.subr.mxu0 %v867
    %2872 = vmatpush1.msra.mxu0 %v866
    %2873 = vmatprep.subr.mxu0 %v875
    %2874 = vmatpush1.msra.mxu0 %v874
    %2875 = vmatprep.subr.mxu0 %v883
    %2876 = vmatpush1.msra.mxu0 %v882
    %2877 = vmatprep.subr.mxu0 %v891
    %2878 = vmatpush1.msra.mxu0 %v890
    %2879 = vmatprep.subr.mxu0 %v899
    %2880 = vmatpush1.msra.mxu0 %v898
    %2881 = vmatprep.subr.mxu0 %v907
    %2882 = vmatpush1.msra.mxu0 %v906
    %2883 = vmatprep.subr.mxu0 %v915
    %2884 = vmatpush1.msra.mxu0 %v914
    %2885 = vmatprep.subr.mxu0 %v923
    %2886 = vmatpush1.msra.mxu0 %v922
    %2887 = vmatprep.mubr.f32.mxu0 %v2669
    %2888 = vmatmul.mubr.f32.gmra.mrb[0].mxu0 %v2668
    %v2889 = vpop.f32.mrb[0].mxu0
    %v2890 = vadd.f32 0.0, %v2889
    %v2891 = vpop.f32.mrb[0].mxu0
    %v2892 = vadd.f32 0.0, %v2891
    %2893 = vdwg.mxu0
    %2894 = vmatprep.subr.mxu0 %v677
    %2895 = vmatpush1.msra.mxu0 %v676
    %2896 = vmatprep.subr.mxu0 %v685
    %2897 = vmatpush1.msra.mxu0 %v684
    %2898 = vmatprep.subr.mxu0 %v693
    %2899 = vmatpush1.msra.mxu0 %v692
    %2900 = vmatprep.subr.mxu0 %v701
    %2901 = vmatpush1.msra.mxu0 %v700
    %2902 = vmatprep.subr.mxu0 %v709
    %2903 = vmatpush1.msra.mxu0 %v708
    %2904 = vmatprep.subr.mxu0 %v717
    %2905 = vmatpush1.msra.mxu0 %v716
    %2906 = vmatprep.subr.mxu0 %v725
    %2907 = vmatpush1.msra.mxu0 %v724
    %2908 = vmatprep.subr.mxu0 %v733
    %2909 = vmatpush1.msra.mxu0 %v732
    %2910 = vmatprep.subr.mxu0 %v741
    %2911 = vmatpush1.msra.mxu0 %v740
    %2912 = vmatprep.subr.mxu0 %v749
    %2913 = vmatpush1.msra.mxu0 %v748
    %2914 = vmatprep.subr.mxu0 %v757
    %2915 = vmatpush1.msra.mxu0 %v756
    %2916 = vmatprep.subr.mxu0 %v765
    %2917 = vmatpush1.msra.mxu0 %v764
    %2918 = vmatprep.subr.mxu0 %v773
    %2919 = vmatpush1.msra.mxu0 %v772
    %2920 = vmatprep.subr.mxu0 %v781
    %2921 = vmatpush1.msra.mxu0 %v780
    %2922 = vmatprep.subr.mxu0 %v789
    %2923 = vmatpush1.msra.mxu0 %v788
    %2924 = vmatprep.subr.mxu0 %v797
    %2925 = vmatpush1.msra.mxu0 %v796
    %2926 = vmatprep.subr.mxu0 %v805
    %2927 = vmatpush1.msra.mxu0 %v804
    %2928 = vmatprep.subr.mxu0 %v813
    %2929 = vmatpush1.msra.mxu0 %v812
    %2930 = vmatprep.subr.mxu0 %v821
    %2931 = vmatpush1.msra.mxu0 %v820
    %2932 = vmatprep.subr.mxu0 %v829
    %2933 = vmatpush1.msra.mxu0 %v828
    %2934 = vmatprep.subr.mxu0 %v837
    %2935 = vmatpush1.msra.mxu0 %v836
    %2936 = vmatprep.subr.mxu0 %v845
    %2937 = vmatpush1.msra.mxu0 %v844
    %2938 = vmatprep.subr.mxu0 %v853
    %2939 = vmatpush1.msra.mxu0 %v852
    %2940 = vmatprep.subr.mxu0 %v861
    %2941 = vmatpush1.msra.mxu0 %v860
    %2942 = vmatprep.subr.mxu0 %v869
    %2943 = vmatpush1.msra.mxu0 %v868
    %2944 = vmatprep.subr.mxu0 %v877
    %2945 = vmatpush1.msra.mxu0 %v876
    %2946 = vmatprep.subr.mxu0 %v885
    %2947 = vmatpush1.msra.mxu0 %v884
    %2948 = vmatprep.subr.mxu0 %v893
    %2949 = vmatpush1.msra.mxu0 %v892
    %2950 = vmatprep.subr.mxu0 %v901
    %2951 = vmatpush1.msra.mxu0 %v900
    %2952 = vmatprep.subr.mxu0 %v909
    %2953 = vmatpush1.msra.mxu0 %v908
    %2954 = vmatprep.subr.mxu0 %v917
    %2955 = vmatpush1.msra.mxu0 %v916
    %2956 = vmatprep.subr.mxu0 %v925
    %2957 = vmatpush1.msra.mxu0 %v924
    %2958 = vmatprep.mubr.f32.mxu0 %v2669
    %2959 = vmatmul.mubr.f32.gmra.mrb[0].mxu0 %v2668
    %v2960 = vpop.f32.mrb[0].mxu0
    %v2961 = vadd.f32 0.0, %v2960
    %v2962 = vpop.f32.mrb[0].mxu0
    %v2963 = vadd.f32 0.0, %v2962
    %2964 = vdwg.mxu0
    %v2965 = vadd.f32 %v2673, %v2748
    %v2966 = vadd.f32 %v2674, %v2750
    %v2967 = vadd.f32 %v2675, %v2819
    %v2968 = vadd.f32 %v2676, %v2821
    %v2969 = vadd.f32 %v2677, %v2890
    %v2970 = vadd.f32 %v2678, %v2892
    %v2971 = vadd.f32 %v2679, %v2961
    %v2972 = vadd.f32 %v2680, %v2963
    %v2973 = vxor.u32 %v2965, 2147483648
    %v2974 = vxor.u32 %v2966, 2147483648
    %v2975 = vmul.f32 %v2973, 1.442695
    %v2976 = vpow.pop %v2975
    %v2977 = vmul.f32 %v2974, 1.442695
    %v2978 = vpow.pop %v2977
    %v2979 = vadd.f32 %v2976, 1.0
    %v2980 = vadd.f32 %v2978, 1.0
    %v2981 = vrcp.pop %v2979
    %v2982 = vmul.f32 1.0, %v2981
    %v2983 = vrcp.pop %v2980
    %v2984 = vmul.f32 1.0, %v2983
    %v2985 = vxor.u32 %v2967, 2147483648
    %v2986 = vxor.u32 %v2968, 2147483648
    %v2987 = vmul.f32 %v2985, 1.442695
    %v2988 = vpow.pop %v2987
    %v2989 = vmul.f32 %v2986, 1.442695
    %v2990 = vpow.pop %v2989
    %v2991 = vadd.f32 %v2988, 1.0
    %v2992 = vadd.f32 %v2990, 1.0
    %v2993 = vrcp.pop %v2991
    %v2994 = vmul.f32 1.0, %v2993
    %v2995 = vrcp.pop %v2992
    %v2996 = vmul.f32 1.0, %v2995
    %v2997 = vtanh.pop %v2969
    %v2998 = vtanh.pop %v2970
    %v2999 = vxor.u32 %v2971, 2147483648
    %v3000 = vxor.u32 %v2972, 2147483648
    %v3001 = vmul.f32 %v2999, 1.442695
    %v3002 = vpow.pop %v3001
    %v3003 = vmul.f32 %v3000, 1.442695
    %v3004 = vpow.pop %v3003
    %v3005 = vadd.f32 %v3002, 1.0
    %v3006 = vadd.f32 %v3004, 1.0
    %v3007 = vrcp.pop %v3005
    %v3008 = vmul.f32 1.0, %v3007
    %v3009 = vrcp.pop %v3006
    %v3010 = vmul.f32 1.0, %v3009
    %v3011 = vmul.f32 %v2994, %v2664
    %v3012 = vmul.f32 %v2996, %v2665
    %v3013 = vmul.f32 %v2982, %v2997
    %v3014 = vmul.f32 %v2984, %v2998
    %v3015 = vadd.f32 %v3011, %v3013
    %v3016 = vadd.f32 %v3012, %v3014
    %v3017 = vtanh.pop %v3015
    %v3018 = vtanh.pop %v3016
    %v3019 = vmul.f32 %v3008, %v3017
    %v3020 = vmul.f32 %v3010, %v3018
    %s3021 = smul.u32 6, 8
    %s3022 = smul.addr %s3021, 8
    %s3023 = scalar_lea.vmem [#allocation2], %s3022
    %v3024 = vld [vmem:[%s3023] sm:$0xff]
    %v3025 = vld [vmem:[%s3023 + $0x8] sm:$0xff]
    %v3026 = vld [vmem:[%s3023 + $0x10] sm:$0xff]
    %v3027 = vld [vmem:[%s3023 + $0x18] sm:$0xff]
    %v3028 = vld [vmem:[%s3023 + $0x20] sm:$0xff]
    %v3029 = vld [vmem:[%s3023 + $0x28] sm:$0xff]
    %v3030 = vld [vmem:[%s3023 + $0x30] sm:$0xff]
    %v3031 = vld [vmem:[%s3023 + $0x38] sm:$0xff]
    %3032 = vmatprep.subr.mxu0 %v671
    %3033 = vmatpush1.msra.mxu0 %v670
    %3034 = vmatprep.subr.mxu0 %v679
    %3035 = vmatpush1.msra.mxu0 %v678
    %3036 = vmatprep.subr.mxu0 %v687
    %3037 = vmatpush1.msra.mxu0 %v686
    %3038 = vmatprep.subr.mxu0 %v695
    %3039 = vmatpush1.msra.mxu0 %v694
    %3040 = vmatprep.subr.mxu0 %v703
    %3041 = vmatpush1.msra.mxu0 %v702
    %3042 = vmatprep.subr.mxu0 %v711
    %3043 = vmatpush1.msra.mxu0 %v710
    %3044 = vmatprep.subr.mxu0 %v719
    %3045 = vmatpush1.msra.mxu0 %v718
    %3046 = vmatprep.subr.mxu0 %v727
    %3047 = vmatpush1.msra.mxu0 %v726
    %3048 = vmatprep.subr.mxu0 %v735
    %3049 = vmatpush1.msra.mxu0 %v734
    %3050 = vmatprep.subr.mxu0 %v743
    %3051 = vmatpush1.msra.mxu0 %v742
    %3052 = vmatprep.subr.mxu0 %v751
    %3053 = vmatpush1.msra.mxu0 %v750
    %3054 = vmatprep.subr.mxu0 %v759
    %3055 = vmatpush1.msra.mxu0 %v758
    %3056 = vmatprep.subr.mxu0 %v767
    %3057 = vmatpush1.msra.mxu0 %v766
    %3058 = vmatprep.subr.mxu0 %v775
    %3059 = vmatpush1.msra.mxu0 %v774
    %3060 = vmatprep.subr.mxu0 %v783
    %3061 = vmatpush1.msra.mxu0 %v782
    %3062 = vmatprep.subr.mxu0 %v791
    %3063 = vmatpush1.msra.mxu0 %v790
    %3064 = vmatprep.subr.mxu0 %v799
    %3065 = vmatpush1.msra.mxu0 %v798
    %3066 = vmatprep.subr.mxu0 %v807
    %3067 = vmatpush1.msra.mxu0 %v806
    %3068 = vmatprep.subr.mxu0 %v815
    %3069 = vmatpush1.msra.mxu0 %v814
    %3070 = vmatprep.subr.mxu0 %v823
    %3071 = vmatpush1.msra.mxu0 %v822
    %3072 = vmatprep.subr.mxu0 %v831
    %3073 = vmatpush1.msra.mxu0 %v830
    %3074 = vmatprep.subr.mxu0 %v839
    %3075 = vmatpush1.msra.mxu0 %v838
    %3076 = vmatprep.subr.mxu0 %v847
    %3077 = vmatpush1.msra.mxu0 %v846
    %3078 = vmatprep.subr.mxu0 %v855
    %3079 = vmatpush1.msra.mxu0 %v854
    %3080 = vmatprep.subr.mxu0 %v863
    %3081 = vmatpush1.msra.mxu0 %v862
    %3082 = vmatprep.subr.mxu0 %v871
    %3083 = vmatpush1.msra.mxu0 %v870
    %3084 = vmatprep.subr.mxu0 %v879
    %3085 = vmatpush1.msra.mxu0 %v878
    %3086 = vmatprep.subr.mxu0 %v887
    %3087 = vmatpush1.msra.mxu0 %v886
    %3088 = vmatprep.subr.mxu0 %v895
    %3089 = vmatpush1.msra.mxu0 %v894
    %3090 = vmatprep.subr.mxu0 %v903
    %3091 = vmatpush1.msra.mxu0 %v902
    %3092 = vmatprep.subr.mxu0 %v911
    %3093 = vmatpush1.msra.mxu0 %v910
    %3094 = vmatprep.subr.mxu0 %v919
    %3095 = vmatpush1.msra.mxu0 %v918
    %3096 = vmatprep.mubr.f32.mxu0 %v3020
    %3097 = vmatmul.mubr.f32.gmra.mrb[0].mxu0 %v3019
    %v3098 = vpop.f32.mrb[0].mxu0
    %v3099 = vadd.f32 0.0, %v3098
    %v3100 = vpop.f32.mrb[0].mxu0
    %v3101 = vadd.f32 0.0, %v3100
    %3102 = vdwg.mxu0
    %3103 = vmatprep.subr.mxu0 %v673
    %3104 = vmatpush1.msra.mxu0 %v672
    %3105 = vmatprep.subr.mxu0 %v681
    %3106 = vmatpush1.msra.mxu0 %v680
    %3107 = vmatprep.subr.mxu0 %v689
    %3108 = vmatpush1.msra.mxu0 %v688
    %3109 = vmatprep.subr.mxu0 %v697
    %3110 = vmatpush1.msra.mxu0 %v696
    %3111 = vmatprep.subr.mxu0 %v705
    %3112 = vmatpush1.msra.mxu0 %v704
    %3113 = vmatprep.subr.mxu0 %v713
    %3114 = vmatpush1.msra.mxu0 %v712
    %3115 = vmatprep.subr.mxu0 %v721
    %3116 = vmatpush1.msra.mxu0 %v720
    %3117 = vmatprep.subr.mxu0 %v729
    %3118 = vmatpush1.msra.mxu0 %v728
    %3119 = vmatprep.subr.mxu0 %v737
    %3120 = vmatpush1.msra.mxu0 %v736
    %3121 = vmatprep.subr.mxu0 %v745
    %3122 = vmatpush1.msra.mxu0 %v744
    %3123 = vmatprep.subr.mxu0 %v753
    %3124 = vmatpush1.msra.mxu0 %v752
    %3125 = vmatprep.subr.mxu0 %v761
    %3126 = vmatpush1.msra.mxu0 %v760
    %3127 = vmatprep.subr.mxu0 %v769
    %3128 = vmatpush1.msra.mxu0 %v768
    %3129 = vmatprep.subr.mxu0 %v777
    %3130 = vmatpush1.msra.mxu0 %v776
    %3131 = vmatprep.subr.mxu0 %v785
    %3132 = vmatpush1.msra.mxu0 %v784
    %3133 = vmatprep.subr.mxu0 %v793
    %3134 = vmatpush1.msra.mxu0 %v792
    %3135 = vmatprep.subr.mxu0 %v801
    %3136 = vmatpush1.msra.mxu0 %v800
    %3137 = vmatprep.subr.mxu0 %v809
    %3138 = vmatpush1.msra.mxu0 %v808
    %3139 = vmatprep.subr.mxu0 %v817
    %3140 = vmatpush1.msra.mxu0 %v816
    %3141 = vmatprep.subr.mxu0 %v825
    %3142 = vmatpush1.msra.mxu0 %v824
    %3143 = vmatprep.subr.mxu0 %v833
    %3144 = vmatpush1.msra.mxu0 %v832
    %3145 = vmatprep.subr.mxu0 %v841
    %3146 = vmatpush1.msra.mxu0 %v840
    %3147 = vmatprep.subr.mxu0 %v849
    %3148 = vmatpush1.msra.mxu0 %v848
    %3149 = vmatprep.subr.mxu0 %v857
    %3150 = vmatpush1.msra.mxu0 %v856
    %3151 = vmatprep.subr.mxu0 %v865
    %3152 = vmatpush1.msra.mxu0 %v864
    %3153 = vmatprep.subr.mxu0 %v873
    %3154 = vmatpush1.msra.mxu0 %v872
    %3155 = vmatprep.subr.mxu0 %v881
    %3156 = vmatpush1.msra.mxu0 %v880
    %3157 = vmatprep.subr.mxu0 %v889
    %3158 = vmatpush1.msra.mxu0 %v888
    %3159 = vmatprep.subr.mxu0 %v897
    %3160 = vmatpush1.msra.mxu0 %v896
    %3161 = vmatprep.subr.mxu0 %v905
    %3162 = vmatpush1.msra.mxu0 %v904
    %3163 = vmatprep.subr.mxu0 %v913
    %3164 = vmatpush1.msra.mxu0 %v912
    %3165 = vmatprep.subr.mxu0 %v921
    %3166 = vmatpush1.msra.mxu0 %v920
    %3167 = vmatprep.mubr.f32.mxu0 %v3020
    %3168 = vmatmul.mubr.f32.gmra.mrb[0].mxu0 %v3019
    %v3169 = vpop.f32.mrb[0].mxu0
    %v3170 = vadd.f32 0.0, %v3169
    %v3171 = vpop.f32.mrb[0].mxu0
    %v3172 = vadd.f32 0.0, %v3171
    %3173 = vdwg.mxu0
    %3174 = vmatprep.subr.mxu0 %v675
    %3175 = vmatpush1.msra.mxu0 %v674
    %3176 = vmatprep.subr.mxu0 %v683
    %3177 = vmatpush1.msra.mxu0 %v682
    %3178 = vmatprep.subr.mxu0 %v691
    %3179 = vmatpush1.msra.mxu0 %v690
    %3180 = vmatprep.subr.mxu0 %v699
    %3181 = vmatpush1.msra.mxu0 %v698
    %3182 = vmatprep.subr.mxu0 %v707
    %3183 = vmatpush1.msra.mxu0 %v706
    %3184 = vmatprep.subr.mxu0 %v715
    %3185 = vmatpush1.msra.mxu0 %v714
    %3186 = vmatprep.subr.mxu0 %v723
    %3187 = vmatpush1.msra.mxu0 %v722
    %3188 = vmatprep.subr.mxu0 %v731
    %3189 = vmatpush1.msra.mxu0 %v730
    %3190 = vmatprep.subr.mxu0 %v739
    %3191 = vmatpush1.msra.mxu0 %v738
    %3192 = vmatprep.subr.mxu0 %v747
    %3193 = vmatpush1.msra.mxu0 %v746
    %3194 = vmatprep.subr.mxu0 %v755
    %3195 = vmatpush1.msra.mxu0 %v754
    %3196 = vmatprep.subr.mxu0 %v763
    %3197 = vmatpush1.msra.mxu0 %v762
    %3198 = vmatprep.subr.mxu0 %v771
    %3199 = vmatpush1.msra.mxu0 %v770
    %3200 = vmatprep.subr.mxu0 %v779
    %3201 = vmatpush1.msra.mxu0 %v778
    %3202 = vmatprep.subr.mxu0 %v787
    %3203 = vmatpush1.msra.mxu0 %v786
    %3204 = vmatprep.subr.mxu0 %v795
    %3205 = vmatpush1.msra.mxu0 %v794
    %3206 = vmatprep.subr.mxu0 %v803
    %3207 = vmatpush1.msra.mxu0 %v802
    %3208 = vmatprep.subr.mxu0 %v811
    %3209 = vmatpush1.msra.mxu0 %v810
    %3210 = vmatprep.subr.mxu0 %v819
    %3211 = vmatpush1.msra.mxu0 %v818
    %3212 = vmatprep.subr.mxu0 %v827
    %3213 = vmatpush1.msra.mxu0 %v826
    %3214 = vmatprep.subr.mxu0 %v835
    %3215 = vmatpush1.msra.mxu0 %v834
    %3216 = vmatprep.subr.mxu0 %v843
    %3217 = vmatpush1.msra.mxu0 %v842
    %3218 = vmatprep.subr.mxu0 %v851
    %3219 = vmatpush1.msra.mxu0 %v850
    %3220 = vmatprep.subr.mxu0 %v859
    %3221 = vmatpush1.msra.mxu0 %v858
    %3222 = vmatprep.subr.mxu0 %v867
    %3223 = vmatpush1.msra.mxu0 %v866
    %3224 = vmatprep.subr.mxu0 %v875
    %3225 = vmatpush1.msra.mxu0 %v874
    %3226 = vmatprep.subr.mxu0 %v883
    %3227 = vmatpush1.msra.mxu0 %v882
    %3228 = vmatprep.subr.mxu0 %v891
    %3229 = vmatpush1.msra.mxu0 %v890
    %3230 = vmatprep.subr.mxu0 %v899
    %3231 = vmatpush1.msra.mxu0 %v898
    %3232 = vmatprep.subr.mxu0 %v907
    %3233 = vmatpush1.msra.mxu0 %v906
    %3234 = vmatprep.subr.mxu0 %v915
    %3235 = vmatpush1.msra.mxu0 %v914
    %3236 = vmatprep.subr.mxu0 %v923
    %3237 = vmatpush1.msra.mxu0 %v922
    %3238 = vmatprep.mubr.f32.mxu0 %v3020
    %3239 = vmatmul.mubr.f32.gmra.mrb[0].mxu0 %v3019
    %v3240 = vpop.f32.mrb[0].mxu0
    %v3241 = vadd.f32 0.0, %v3240
    %v3242 = vpop.f32.mrb[0].mxu0
    %v3243 = vadd.f32 0.0, %v3242
    %3244 = vdwg.mxu0
    %3245 = vmatprep.subr.mxu0 %v677
    %3246 = vmatpush1.msra.mxu0 %v676
    %3247 = vmatprep.subr.mxu0 %v685
    %3248 = vmatpush1.msra.mxu0 %v684
    %3249 = vmatprep.subr.mxu0 %v693
    %3250 = vmatpush1.msra.mxu0 %v692
    %3251 = vmatprep.subr.mxu0 %v701
    %3252 = vmatpush1.msra.mxu0 %v700
    %3253 = vmatprep.subr.mxu0 %v709
    %3254 = vmatpush1.msra.mxu0 %v708
    %3255 = vmatprep.subr.mxu0 %v717
    %3256 = vmatpush1.msra.mxu0 %v716
    %3257 = vmatprep.subr.mxu0 %v725
    %3258 = vmatpush1.msra.mxu0 %v724
    %3259 = vmatprep.subr.mxu0 %v733
    %3260 = vmatpush1.msra.mxu0 %v732
    %3261 = vmatprep.subr.mxu0 %v741
    %3262 = vmatpush1.msra.mxu0 %v740
    %3263 = vmatprep.subr.mxu0 %v749
    %3264 = vmatpush1.msra.mxu0 %v748
    %3265 = vmatprep.subr.mxu0 %v757
    %3266 = vmatpush1.msra.mxu0 %v756
    %3267 = vmatprep.subr.mxu0 %v765
    %3268 = vmatpush1.msra.mxu0 %v764
    %3269 = vmatprep.subr.mxu0 %v773
    %3270 = vmatpush1.msra.mxu0 %v772
    %3271 = vmatprep.subr.mxu0 %v781
    %3272 = vmatpush1.msra.mxu0 %v780
    %3273 = vmatprep.subr.mxu0 %v789
    %3274 = vmatpush1.msra.mxu0 %v788
    %3275 = vmatprep.subr.mxu0 %v797
    %3276 = vmatpush1.msra.mxu0 %v796
    %3277 = vmatprep.subr.mxu0 %v805
    %3278 = vmatpush1.msra.mxu0 %v804
    %3279 = vmatprep.subr.mxu0 %v813
    %3280 = vmatpush1.msra.mxu0 %v812
    %3281 = vmatprep.subr.mxu0 %v821
    %3282 = vmatpush1.msra.mxu0 %v820
    %3283 = vmatprep.subr.mxu0 %v829
    %3284 = vmatpush1.msra.mxu0 %v828
    %3285 = vmatprep.subr.mxu0 %v837
    %3286 = vmatpush1.msra.mxu0 %v836
    %3287 = vmatprep.subr.mxu0 %v845
    %3288 = vmatpush1.msra.mxu0 %v844
    %3289 = vmatprep.subr.mxu0 %v853
    %3290 = vmatpush1.msra.mxu0 %v852
    %3291 = vmatprep.subr.mxu0 %v861
    %3292 = vmatpush1.msra.mxu0 %v860
    %3293 = vmatprep.subr.mxu0 %v869
    %3294 = vmatpush1.msra.mxu0 %v868
    %3295 = vmatprep.subr.mxu0 %v877
    %3296 = vmatpush1.msra.mxu0 %v876
    %3297 = vmatprep.subr.mxu0 %v885
    %3298 = vmatpush1.msra.mxu0 %v884
    %3299 = vmatprep.subr.mxu0 %v893
    %3300 = vmatpush1.msra.mxu0 %v892
    %3301 = vmatprep.subr.mxu0 %v901
    %3302 = vmatpush1.msra.mxu0 %v900
    %3303 = vmatprep.subr.mxu0 %v909
    %3304 = vmatpush1.msra.mxu0 %v908
    %3305 = vmatprep.subr.mxu0 %v917
    %3306 = vmatpush1.msra.mxu0 %v916
    %3307 = vmatprep.subr.mxu0 %v925
    %3308 = vmatpush1.msra.mxu0 %v924
    %3309 = vmatprep.mubr.f32.mxu0 %v3020
    %3310 = vmatmul.mubr.f32.gmra.mrb[0].mxu0 %v3019
    %v3311 = vpop.f32.mrb[0].mxu0
    %v3312 = vadd.f32 0.0, %v3311
    %v3313 = vpop.f32.mrb[0].mxu0
    %v3314 = vadd.f32 0.0, %v3313
    %3315 = vdwg.mxu0
    %v3316 = vadd.f32 %v3024, %v3099
    %v3317 = vadd.f32 %v3025, %v3101
    %v3318 = vadd.f32 %v3026, %v3170
    %v3319 = vadd.f32 %v3027, %v3172
    %v3320 = vadd.f32 %v3028, %v3241
    %v3321 = vadd.f32 %v3029, %v3243
    %v3322 = vadd.f32 %v3030, %v3312
    %v3323 = vadd.f32 %v3031, %v3314
    %v3324 = vxor.u32 %v3316, 2147483648
    %v3325 = vxor.u32 %v3317, 2147483648
    %v3326 = vmul.f32 %v3324, 1.442695
    %v3327 = vpow.pop %v3326
    %v3328 = vmul.f32 %v3325, 1.442695
    %v3329 = vpow.pop %v3328
    %v3330 = vadd.f32 %v3327, 1.0
    %v3331 = vadd.f32 %v3329, 1.0
    %v3332 = vrcp.pop %v3330
    %v3333 = vmul.f32 1.0, %v3332
    %v3334 = vrcp.pop %v3331
    %v3335 = vmul.f32 1.0, %v3334
    %v3336 = vxor.u32 %v3318, 2147483648
    %v3337 = vxor.u32 %v3319, 2147483648
    %v3338 = vmul.f32 %v3336, 1.442695
    %v3339 = vpow.pop %v3338
    %v3340 = vmul.f32 %v3337, 1.442695
    %v3341 = vpow.pop %v3340
    %v3342 = vadd.f32 %v3339, 1.0
    %v3343 = vadd.f32 %v3341, 1.0
    %v3344 = vrcp.pop %v3342
    %v3345 = vmul.f32 1.0, %v3344
    %v3346 = vrcp.pop %v3343
    %v3347 = vmul.f32 1.0, %v3346
    %v3348 = vtanh.pop %v3320
    %v3349 = vtanh.pop %v3321
    %v3350 = vxor.u32 %v3322, 2147483648
    %v3351 = vxor.u32 %v3323, 2147483648
    %v3352 = vmul.f32 %v3350, 1.442695
    %v3353 = vpow.pop %v3352
    %v3354 = vmul.f32 %v3351, 1.442695
    %v3355 = vpow.pop %v3354
    %v3356 = vadd.f32 %v3353, 1.0
    %v3357 = vadd.f32 %v3355, 1.0
    %v3358 = vrcp.pop %v3356
    %v3359 = vmul.f32 1.0, %v3358
    %v3360 = vrcp.pop %v3357
    %v3361 = vmul.f32 1.0, %v3360
    %v3362 = vmul.f32 %v3345, %v3015
    %v3363 = vmul.f32 %v3347, %v3016
    %v3364 = vmul.f32 %v3333, %v3348
    %v3365 = vmul.f32 %v3335, %v3349
    %v3366 = vadd.f32 %v3362, %v3364
    %v3367 = vadd.f32 %v3363, %v3365
    %v3368 = vtanh.pop %v3366
    %v3369 = vtanh.pop %v3367
    %v3370 = vmul.f32 %v3359, %v3368
    %v3371 = vmul.f32 %v3361, %v3369
    %s3372 = smul.u32 7, 8
    %s3373 = smul.addr %s3372, 8
    %s3374 = scalar_lea.vmem [#allocation2], %s3373
    %v3375 = vld [vmem:[%s3374] sm:$0xff]
    %v3376 = vld [vmem:[%s3374 + $0x8] sm:$0xff]
    %v3377 = vld [vmem:[%s3374 + $0x10] sm:$0xff]
    %v3378 = vld [vmem:[%s3374 + $0x18] sm:$0xff]
    %v3379 = vld [vmem:[%s3374 + $0x20] sm:$0xff]
    %v3380 = vld [vmem:[%s3374 + $0x28] sm:$0xff]
    %v3381 = vld [vmem:[%s3374 + $0x30] sm:$0xff]
    %v3382 = vld [vmem:[%s3374 + $0x38] sm:$0xff]
    %3383 = vmatprep.subr.mxu0 %v671
    %3384 = vmatpush1.msra.mxu0 %v670
    %3385 = vmatprep.subr.mxu0 %v679
    %3386 = vmatpush1.msra.mxu0 %v678
    %3387 = vmatprep.subr.mxu0 %v687
    %3388 = vmatpush1.msra.mxu0 %v686
    %3389 = vmatprep.subr.mxu0 %v695
    %3390 = vmatpush1.msra.mxu0 %v694
    %3391 = vmatprep.subr.mxu0 %v703
    %3392 = vmatpush1.msra.mxu0 %v702
    %3393 = vmatprep.subr.mxu0 %v711
    %3394 = vmatpush1.msra.mxu0 %v710
    %3395 = vmatprep.subr.mxu0 %v719
    %3396 = vmatpush1.msra.mxu0 %v718
    %3397 = vmatprep.subr.mxu0 %v727
    %3398 = vmatpush1.msra.mxu0 %v726
    %3399 = vmatprep.subr.mxu0 %v735
    %3400 = vmatpush1.msra.mxu0 %v734
    %3401 = vmatprep.subr.mxu0 %v743
    %3402 = vmatpush1.msra.mxu0 %v742
    %3403 = vmatprep.subr.mxu0 %v751
    %3404 = vmatpush1.msra.mxu0 %v750
    %3405 = vmatprep.subr.mxu0 %v759
    %3406 = vmatpush1.msra.mxu0 %v758
    %3407 = vmatprep.subr.mxu0 %v767
    %3408 = vmatpush1.msra.mxu0 %v766
    %3409 = vmatprep.subr.mxu0 %v775
    %3410 = vmatpush1.msra.mxu0 %v774
    %3411 = vmatprep.subr.mxu0 %v783
    %3412 = vmatpush1.msra.mxu0 %v782
    %3413 = vmatprep.subr.mxu0 %v791
    %3414 = vmatpush1.msra.mxu0 %v790
    %3415 = vmatprep.subr.mxu0 %v799
    %3416 = vmatpush1.msra.mxu0 %v798
    %3417 = vmatprep.subr.mxu0 %v807
    %3418 = vmatpush1.msra.mxu0 %v806
    %3419 = vmatprep.subr.mxu0 %v815
    %3420 = vmatpush1.msra.mxu0 %v814
    %3421 = vmatprep.subr.mxu0 %v823
    %3422 = vmatpush1.msra.mxu0 %v822
    %3423 = vmatprep.subr.mxu0 %v831
    %3424 = vmatpush1.msra.mxu0 %v830
    %3425 = vmatprep.subr.mxu0 %v839
    %3426 = vmatpush1.msra.mxu0 %v838
    %3427 = vmatprep.subr.mxu0 %v847
    %3428 = vmatpush1.msra.mxu0 %v846
    %3429 = vmatprep.subr.mxu0 %v855
    %3430 = vmatpush1.msra.mxu0 %v854
    %3431 = vmatprep.subr.mxu0 %v863
    %3432 = vmatpush1.msra.mxu0 %v862
    %3433 = vmatprep.subr.mxu0 %v871
    %3434 = vmatpush1.msra.mxu0 %v870
    %3435 = vmatprep.subr.mxu0 %v879
    %3436 = vmatpush1.msra.mxu0 %v878
    %3437 = vmatprep.subr.mxu0 %v887
    %3438 = vmatpush1.msra.mxu0 %v886
    %3439 = vmatprep.subr.mxu0 %v895
    %3440 = vmatpush1.msra.mxu0 %v894
    %3441 = vmatprep.subr.mxu0 %v903
    %3442 = vmatpush1.msra.mxu0 %v902
    %3443 = vmatprep.subr.mxu0 %v911
    %3444 = vmatpush1.msra.mxu0 %v910
    %3445 = vmatprep.subr.mxu0 %v919
    %3446 = vmatpush1.msra.mxu0 %v918
    %3447 = vmatprep.mubr.f32.mxu0 %v3371
    %3448 = vmatmul.mubr.f32.gmra.mrb[0].mxu0 %v3370
    %v3449 = vpop.f32.mrb[0].mxu0
    %v3450 = vadd.f32 0.0, %v3449
    %v3451 = vpop.f32.mrb[0].mxu0
    %v3452 = vadd.f32 0.0, %v3451
    %3453 = vdwg.mxu0
    %3454 = vmatprep.subr.mxu0 %v673
    %3455 = vmatpush1.msra.mxu0 %v672
    %3456 = vmatprep.subr.mxu0 %v681
    %3457 = vmatpush1.msra.mxu0 %v680
    %3458 = vmatprep.subr.mxu0 %v689
    %3459 = vmatpush1.msra.mxu0 %v688
    %3460 = vmatprep.subr.mxu0 %v697
    %3461 = vmatpush1.msra.mxu0 %v696
    %3462 = vmatprep.subr.mxu0 %v705
    %3463 = vmatpush1.msra.mxu0 %v704
    %3464 = vmatprep.subr.mxu0 %v713
    %3465 = vmatpush1.msra.mxu0 %v712
    %3466 = vmatprep.subr.mxu0 %v721
    %3467 = vmatpush1.msra.mxu0 %v720
    %3468 = vmatprep.subr.mxu0 %v729
    %3469 = vmatpush1.msra.mxu0 %v728
    %3470 = vmatprep.subr.mxu0 %v737
    %3471 = vmatpush1.msra.mxu0 %v736
    %3472 = vmatprep.subr.mxu0 %v745
    %3473 = vmatpush1.msra.mxu0 %v744
    %3474 = vmatprep.subr.mxu0 %v753
    %3475 = vmatpush1.msra.mxu0 %v752
    %3476 = vmatprep.subr.mxu0 %v761
    %3477 = vmatpush1.msra.mxu0 %v760
    %3478 = vmatprep.subr.mxu0 %v769
    %3479 = vmatpush1.msra.mxu0 %v768
    %3480 = vmatprep.subr.mxu0 %v777
    %3481 = vmatpush1.msra.mxu0 %v776
    %3482 = vmatprep.subr.mxu0 %v785
    %3483 = vmatpush1.msra.mxu0 %v784
    %3484 = vmatprep.subr.mxu0 %v793
    %3485 = vmatpush1.msra.mxu0 %v792
    %3486 = vmatprep.subr.mxu0 %v801
    %3487 = vmatpush1.msra.mxu0 %v800
    %3488 = vmatprep.subr.mxu0 %v809
    %3489 = vmatpush1.msra.mxu0 %v808
    %3490 = vmatprep.subr.mxu0 %v817
    %3491 = vmatpush1.msra.mxu0 %v816
    %3492 = vmatprep.subr.mxu0 %v825
    %3493 = vmatpush1.msra.mxu0 %v824
    %3494 = vmatprep.subr.mxu0 %v833
    %3495 = vmatpush1.msra.mxu0 %v832
    %3496 = vmatprep.subr.mxu0 %v841
    %3497 = vmatpush1.msra.mxu0 %v840
    %3498 = vmatprep.subr.mxu0 %v849
    %3499 = vmatpush1.msra.mxu0 %v848
    %3500 = vmatprep.subr.mxu0 %v857
    %3501 = vmatpush1.msra.mxu0 %v856
    %3502 = vmatprep.subr.mxu0 %v865
    %3503 = vmatpush1.msra.mxu0 %v864
    %3504 = vmatprep.subr.mxu0 %v873
    %3505 = vmatpush1.msra.mxu0 %v872
    %3506 = vmatprep.subr.mxu0 %v881
    %3507 = vmatpush1.msra.mxu0 %v880
    %3508 = vmatprep.subr.mxu0 %v889
    %3509 = vmatpush1.msra.mxu0 %v888
    %3510 = vmatprep.subr.mxu0 %v897
    %3511 = vmatpush1.msra.mxu0 %v896
    %3512 = vmatprep.subr.mxu0 %v905
    %3513 = vmatpush1.msra.mxu0 %v904
    %3514 = vmatprep.subr.mxu0 %v913
    %3515 = vmatpush1.msra.mxu0 %v912
    %3516 = vmatprep.subr.mxu0 %v921
    %3517 = vmatpush1.msra.mxu0 %v920
    %3518 = vmatprep.mubr.f32.mxu0 %v3371
    %3519 = vmatmul.mubr.f32.gmra.mrb[0].mxu0 %v3370
    %v3520 = vpop.f32.mrb[0].mxu0
    %v3521 = vadd.f32 0.0, %v3520
    %v3522 = vpop.f32.mrb[0].mxu0
    %v3523 = vadd.f32 0.0, %v3522
    %3524 = vdwg.mxu0
    %3525 = vmatprep.subr.mxu0 %v675
    %3526 = vmatpush1.msra.mxu0 %v674
    %3527 = vmatprep.subr.mxu0 %v683
    %3528 = vmatpush1.msra.mxu0 %v682
    %3529 = vmatprep.subr.mxu0 %v691
    %3530 = vmatpush1.msra.mxu0 %v690
    %3531 = vmatprep.subr.mxu0 %v699
    %3532 = vmatpush1.msra.mxu0 %v698
    %3533 = vmatprep.subr.mxu0 %v707
    %3534 = vmatpush1.msra.mxu0 %v706
    %3535 = vmatprep.subr.mxu0 %v715
    %3536 = vmatpush1.msra.mxu0 %v714
    %3537 = vmatprep.subr.mxu0 %v723
    %3538 = vmatpush1.msra.mxu0 %v722
    %3539 = vmatprep.subr.mxu0 %v731
    %3540 = vmatpush1.msra.mxu0 %v730
    %3541 = vmatprep.subr.mxu0 %v739
    %3542 = vmatpush1.msra.mxu0 %v738
    %3543 = vmatprep.subr.mxu0 %v747
    %3544 = vmatpush1.msra.mxu0 %v746
    %3545 = vmatprep.subr.mxu0 %v755
    %3546 = vmatpush1.msra.mxu0 %v754
    %3547 = vmatprep.subr.mxu0 %v763
    %3548 = vmatpush1.msra.mxu0 %v762
    %3549 = vmatprep.subr.mxu0 %v771
    %3550 = vmatpush1.msra.mxu0 %v770
    %3551 = vmatprep.subr.mxu0 %v779
    %3552 = vmatpush1.msra.mxu0 %v778
    %3553 = vmatprep.subr.mxu0 %v787
    %3554 = vmatpush1.msra.mxu0 %v786
    %3555 = vmatprep.subr.mxu0 %v795
    %3556 = vmatpush1.msra.mxu0 %v794
    %3557 = vmatprep.subr.mxu0 %v803
    %3558 = vmatpush1.msra.mxu0 %v802
    %3559 = vmatprep.subr.mxu0 %v811
    %3560 = vmatpush1.msra.mxu0 %v810
    %3561 = vmatprep.subr.mxu0 %v819
    %3562 = vmatpush1.msra.mxu0 %v818
    %3563 = vmatprep.subr.mxu0 %v827
    %3564 = vmatpush1.msra.mxu0 %v826
    %3565 = vmatprep.subr.mxu0 %v835
    %3566 = vmatpush1.msra.mxu0 %v834
    %3567 = vmatprep.subr.mxu0 %v843
    %3568 = vmatpush1.msra.mxu0 %v842
    %3569 = vmatprep.subr.mxu0 %v851
    %3570 = vmatpush1.msra.mxu0 %v850
    %3571 = vmatprep.subr.mxu0 %v859
    %3572 = vmatpush1.msra.mxu0 %v858
    %3573 = vmatprep.subr.mxu0 %v867
    %3574 = vmatpush1.msra.mxu0 %v866
    %3575 = vmatprep.subr.mxu0 %v875
    %3576 = vmatpush1.msra.mxu0 %v874
    %3577 = vmatprep.subr.mxu0 %v883
    %3578 = vmatpush1.msra.mxu0 %v882
    %3579 = vmatprep.subr.mxu0 %v891
    %3580 = vmatpush1.msra.mxu0 %v890
    %3581 = vmatprep.subr.mxu0 %v899
    %3582 = vmatpush1.msra.mxu0 %v898
    %3583 = vmatprep.subr.mxu0 %v907
    %3584 = vmatpush1.msra.mxu0 %v906
    %3585 = vmatprep.subr.mxu0 %v915
    %3586 = vmatpush1.msra.mxu0 %v914
    %3587 = vmatprep.subr.mxu0 %v923
    %3588 = vmatpush1.msra.mxu0 %v922
    %3589 = vmatprep.mubr.f32.mxu0 %v3371
    %3590 = vmatmul.mubr.f32.gmra.mrb[0].mxu0 %v3370
    %v3591 = vpop.f32.mrb[0].mxu0
    %v3592 = vadd.f32 0.0, %v3591
    %v3593 = vpop.f32.mrb[0].mxu0
    %v3594 = vadd.f32 0.0, %v3593
    %3595 = vdwg.mxu0
    %3596 = vmatprep.subr.mxu0 %v677
    %3597 = vmatpush1.msra.mxu0 %v676
    %3598 = vmatprep.subr.mxu0 %v685
    %3599 = vmatpush1.msra.mxu0 %v684
    %3600 = vmatprep.subr.mxu0 %v693
    %3601 = vmatpush1.msra.mxu0 %v692
    %3602 = vmatprep.subr.mxu0 %v701
    %3603 = vmatpush1.msra.mxu0 %v700
    %3604 = vmatprep.subr.mxu0 %v709
    %3605 = vmatpush1.msra.mxu0 %v708
    %3606 = vmatprep.subr.mxu0 %v717
    %3607 = vmatpush1.msra.mxu0 %v716
    %3608 = vmatprep.subr.mxu0 %v725
    %3609 = vmatpush1.msra.mxu0 %v724
    %3610 = vmatprep.subr.mxu0 %v733
    %3611 = vmatpush1.msra.mxu0 %v732
    %3612 = vmatprep.subr.mxu0 %v741
    %3613 = vmatpush1.msra.mxu0 %v740
    %3614 = vmatprep.subr.mxu0 %v749
    %3615 = vmatpush1.msra.mxu0 %v748
    %3616 = vmatprep.subr.mxu0 %v757
    %3617 = vmatpush1.msra.mxu0 %v756
    %3618 = vmatprep.subr.mxu0 %v765
    %3619 = vmatpush1.msra.mxu0 %v764
    %3620 = vmatprep.subr.mxu0 %v773
    %3621 = vmatpush1.msra.mxu0 %v772
    %3622 = vmatprep.subr.mxu0 %v781
    %3623 = vmatpush1.msra.mxu0 %v780
    %3624 = vmatprep.subr.mxu0 %v789
    %3625 = vmatpush1.msra.mxu0 %v788
    %3626 = vmatprep.subr.mxu0 %v797
    %3627 = vmatpush1.msra.mxu0 %v796
    %3628 = vmatprep.subr.mxu0 %v805
    %3629 = vmatpush1.msra.mxu0 %v804
    %3630 = vmatprep.subr.mxu0 %v813
    %3631 = vmatpush1.msra.mxu0 %v812
    %3632 = vmatprep.subr.mxu0 %v821
    %3633 = vmatpush1.msra.mxu0 %v820
    %3634 = vmatprep.subr.mxu0 %v829
    %3635 = vmatpush1.msra.mxu0 %v828
    %3636 = vmatprep.subr.mxu0 %v837
    %3637 = vmatpush1.msra.mxu0 %v836
    %3638 = vmatprep.subr.mxu0 %v845
    %3639 = vmatpush1.msra.mxu0 %v844
    %3640 = vmatprep.subr.mxu0 %v853
    %3641 = vmatpush1.msra.mxu0 %v852
    %3642 = vmatprep.subr.mxu0 %v861
    %3643 = vmatpush1.msra.mxu0 %v860
    %3644 = vmatprep.subr.mxu0 %v869
    %3645 = vmatpush1.msra.mxu0 %v868
    %3646 = vmatprep.subr.mxu0 %v877
    %3647 = vmatpush1.msra.mxu0 %v876
    %3648 = vmatprep.subr.mxu0 %v885
    %3649 = vmatpush1.msra.mxu0 %v884
    %3650 = vmatprep.subr.mxu0 %v893
    %3651 = vmatpush1.msra.mxu0 %v892
    %3652 = vmatprep.subr.mxu0 %v901
    %3653 = vmatpush1.msra.mxu0 %v900
    %3654 = vmatprep.subr.mxu0 %v909
    %3655 = vmatpush1.msra.mxu0 %v908
    %3656 = vmatprep.subr.mxu0 %v917
    %3657 = vmatpush1.msra.mxu0 %v916
    %3658 = vmatprep.subr.mxu0 %v925
    %3659 = vmatpush1.msra.mxu0 %v924
    %3660 = vmatprep.mubr.f32.mxu0 %v3371
    %3661 = vmatmul.mubr.f32.gmra.mrb[0].mxu0 %v3370
    %v3662 = vpop.f32.mrb[0].mxu0
    %v3663 = vadd.f32 0.0, %v3662
    %v3664 = vpop.f32.mrb[0].mxu0
    %v3665 = vadd.f32 0.0, %v3664
    %3666 = vdwg.mxu0
    %v3667 = vadd.f32 %v3375, %v3450
    %v3668 = vadd.f32 %v3376, %v3452
    %v3669 = vadd.f32 %v3377, %v3521
    %v3670 = vadd.f32 %v3378, %v3523
    %v3671 = vadd.f32 %v3379, %v3592
    %v3672 = vadd.f32 %v3380, %v3594
    %v3673 = vadd.f32 %v3381, %v3663
    %v3674 = vadd.f32 %v3382, %v3665
    %v3675 = vxor.u32 %v3667, 2147483648
    %v3676 = vxor.u32 %v3668, 2147483648
    %v3677 = vmul.f32 %v3675, 1.442695
    %v3678 = vpow.pop %v3677
    %v3679 = vmul.f32 %v3676, 1.442695
    %v3680 = vpow.pop %v3679
    %v3681 = vadd.f32 %v3678, 1.0
    %v3682 = vadd.f32 %v3680, 1.0
    %v3683 = vrcp.pop %v3681
    %v3684 = vmul.f32 1.0, %v3683
    %v3685 = vrcp.pop %v3682
    %v3686 = vmul.f32 1.0, %v3685
    %v3687 = vxor.u32 %v3669, 2147483648
    %v3688 = vxor.u32 %v3670, 2147483648
    %v3689 = vmul.f32 %v3687, 1.442695
    %v3690 = vpow.pop %v3689
    %v3691 = vmul.f32 %v3688, 1.442695
    %v3692 = vpow.pop %v3691
    %v3693 = vadd.f32 %v3690, 1.0
    %v3694 = vadd.f32 %v3692, 1.0
    %v3695 = vrcp.pop %v3693
    %v3696 = vmul.f32 1.0, %v3695
    %v3697 = vrcp.pop %v3694
    %v3698 = vmul.f32 1.0, %v3697
    %v3699 = vtanh.pop %v3671
    %v3700 = vtanh.pop %v3672
    %v3701 = vxor.u32 %v3673, 2147483648
    %v3702 = vxor.u32 %v3674, 2147483648
    %v3703 = vmul.f32 %v3701, 1.442695
    %v3704 = vpow.pop %v3703
    %v3705 = vmul.f32 %v3702, 1.442695
    %v3706 = vpow.pop %v3705
    %v3707 = vadd.f32 %v3704, 1.0
    %v3708 = vadd.f32 %v3706, 1.0
    %v3709 = vrcp.pop %v3707
    %v3710 = vmul.f32 1.0, %v3709
    %v3711 = vrcp.pop %v3708
    %v3712 = vmul.f32 1.0, %v3711
    %v3713 = vmul.f32 %v3696, %v3366
    %v3714 = vmul.f32 %v3698, %v3367
    %v3715 = vmul.f32 %v3684, %v3699
    %v3716 = vmul.f32 %v3686, %v3700
    %v3717 = vadd.f32 %v3713, %v3715
    %v3718 = vadd.f32 %v3714, %v3716
    %v3719 = vtanh.pop %v3717
    %v3720 = vtanh.pop %v3718
    %v3721 = vmul.f32 %v3710, %v3719
    %v3722 = vmul.f32 %v3712, %v3720
    %3723 = vst [vmem:[#allocation3] sm:$0xff] %v3721
    %3724 = vst [vmem:[#allocation3 + $0x8] sm:$0xff] %v3722
    %3725 = vst [vmem:[#allocation4] sm:$0xff] %v3717
    %3726 = vst [vmem:[#allocation4 + $0x8] sm:$0xff] %v3718
    // Predicated region
    $region30: #{lstm_classifier_forward.1} parent=1 // pred_check
      %p3727 = pneg %p647
    $region31: #{lstm_classifier_forward.1} parent=1 // pred_check_branch
      %3729 = sbr.rel (%p3727) target = $region33
    $region32: #{lstm_classifier_forward.1} parent=1 // pred_region
      %v3730 = vld [vmem:[%s4] sm:$0xff]
      %v3731 = vld [vmem:[%s4 + $0x8] sm:$0xff]
      %v3732 = vld [vmem:[%s4 + $0x10] sm:$0xff]
      %v3733 = vld [vmem:[%s4 + $0x18] sm:$0xff]
      %v3734 = vld [vmem:[%s4 + $0x20] sm:$0xff]
      %v3735 = vld [vmem:[%s4 + $0x28] sm:$0xff]
      %v3736 = vld [vmem:[%s4 + $0x30] sm:$0xff]
      %v3737 = vld [vmem:[%s4 + $0x38] sm:$0xff]
      %v3738 = vld [vmem:[%s4 + $0x40] sm:$0xff]
      %v3739 = vld [vmem:[%s4 + $0x48] sm:$0xff]
      %v3740 = vld [vmem:[%s4 + $0x50] sm:$0xff]
      %v3741 = vld [vmem:[%s4 + $0x58] sm:$0xff]
      %v3742 = vld [vmem:[%s4 + $0x60] sm:$0xff]
      %v3743 = vld [vmem:[%s4 + $0x68] sm:$0xff]
      %v3744 = vld [vmem:[%s4 + $0x70] sm:$0xff]
      %v3745 = vld [vmem:[%s4 + $0x78] sm:$0xff]
      %v3746 = vld [vmem:[%s4 + $0x80] sm:$0xff]
      %v3747 = vld [vmem:[%s4 + $0x88] sm:$0xff]
      %v3748 = vld [vmem:[%s4 + $0x90] sm:$0xff]
      %v3749 = vld [vmem:[%s4 + $0x98] sm:$0xff]
      %v3750 = vld [vmem:[%s4 + $0xa0] sm:$0xff]
      %v3751 = vld [vmem:[%s4 + $0xa8] sm:$0xff]
      %v3752 = vld [vmem:[%s4 + $0xb0] sm:$0xff]
      %v3753 = vld [vmem:[%s4 + $0xb8] sm:$0xff]
      %v3754 = vld [vmem:[%s4 + $0xc0] sm:$0xff]
      %v3755 = vld [vmem:[%s4 + $0xc8] sm:$0xff]
      %v3756 = vld [vmem:[%s4 + $0xd0] sm:$0xff]
      %v3757 = vld [vmem:[%s4 + $0xd8] sm:$0xff]
      %v3758 = vld [vmem:[%s4 + $0xe0] sm:$0xff]
      %v3759 = vld [vmem:[%s4 + $0xe8] sm:$0xff]
      %v3760 = vld [vmem:[%s4 + $0xf0] sm:$0xff]
      %v3761 = vld [vmem:[%s4 + $0xf8] sm:$0xff]
      %v3762 = vld [vmem:[%s5] sm:$0x1]
      %v3764 = vlaneseq
      %v3765 = vshrl.u32 %v3764, 7
      %v3766 = vsub.s32 0, %v3765
      %v3767 = vrot.slane %v3762, %v3766
      %3769 = vmatprep.subr.mxu0 0.0
      %3770 = vmatpush1.msra.mxu0 %v3730
      %3771 = vmatprep.subr.mxu0 0.0
      %3772 = vmatpush1.msra.mxu0 %v3731
      %3773 = vmatprep.subr.mxu0 0.0
      %3774 = vmatpush1.msra.mxu0 %v3732
      %3775 = vmatprep.subr.mxu0 0.0
      %3776 = vmatpush1.msra.mxu0 %v3733
      %3777 = vmatprep.subr.mxu0 0.0
      %3778 = vmatpush1.msra.mxu0 %v3734
      %3779 = vmatprep.subr.mxu0 0.0
      %3780 = vmatpush1.msra.mxu0 %v3735
      %3781 = vmatprep.subr.mxu0 0.0
      %3782 = vmatpush1.msra.mxu0 %v3736
      %3783 = vmatprep.subr.mxu0 0.0
      %3784 = vmatpush1.msra.mxu0 %v3737
      %3785 = vmatprep.subr.mxu0 0.0
      %3786 = vmatpush1.msra.mxu0 %v3738
      %3787 = vmatprep.subr.mxu0 0.0
      %3788 = vmatpush1.msra.mxu0 %v3739
      %3789 = vmatprep.subr.mxu0 0.0
      %3790 = vmatpush1.msra.mxu0 %v3740
      %3791 = vmatprep.subr.mxu0 0.0
      %3792 = vmatpush1.msra.mxu0 %v3741
      %3793 = vmatprep.subr.mxu0 0.0
      %3794 = vmatpush1.msra.mxu0 %v3742
      %3795 = vmatprep.subr.mxu0 0.0
      %3796 = vmatpush1.msra.mxu0 %v3743
      %3797 = vmatprep.subr.mxu0 0.0
      %3798 = vmatpush1.msra.mxu0 %v3744
      %3799 = vmatprep.subr.mxu0 0.0
      %3800 = vmatpush1.msra.mxu0 %v3745
      %3801 = vmatprep.subr.mxu0 0.0
      %3802 = vmatpush1.msra.mxu0 %v3746
      %3803 = vmatprep.subr.mxu0 0.0
      %3804 = vmatpush1.msra.mxu0 %v3747
      %3805 = vmatprep.subr.mxu0 0.0
      %3806 = vmatpush1.msra.mxu0 %v3748
      %3807 = vmatprep.subr.mxu0 0.0
      %3808 = vmatpush1.msra.mxu0 %v3749
      %3809 = vmatprep.subr.mxu0 0.0
      %3810 = vmatpush1.msra.mxu0 %v3750
      %3811 = vmatprep.subr.mxu0 0.0
      %3812 = vmatpush1.msra.mxu0 %v3751
      %3813 = vmatprep.subr.mxu0 0.0
      %3814 = vmatpush1.msra.mxu0 %v3752
      %3815 = vmatprep.subr.mxu0 0.0
      %3816 = vmatpush1.msra.mxu0 %v3753
      %3817 = vmatprep.subr.mxu0 0.0
      %3818 = vmatpush1.msra.mxu0 %v3754
      %3819 = vmatprep.subr.mxu0 0.0
      %3820 = vmatpush1.msra.mxu0 %v3755
      %3821 = vmatprep.subr.mxu0 0.0
      %3822 = vmatpush1.msra.mxu0 %v3756
      %3823 = vmatprep.subr.mxu0 0.0
      %3824 = vmatpush1.msra.mxu0 %v3757
      %3825 = vmatprep.subr.mxu0 0.0
      %3826 = vmatpush1.msra.mxu0 %v3758
      %3827 = vmatprep.subr.mxu0 0.0
      %3828 = vmatpush1.msra.mxu0 %v3759
      %3829 = vmatprep.subr.mxu0 0.0
      %3830 = vmatpush1.msra.mxu0 %v3760
      %3831 = vmatprep.subr.mxu0 0.0
      %3832 = vmatpush1.msra.mxu0 %v3761
      %3833 = vmatprep.mubr.f32.mxu0 %v3722
      %3834 = vmatmul.mubr.f32.gmra.mrb[0].mxu0 %v3721
      %v3835 = vpop.f32.mrb[0].mxu0
      %v3836 = vadd.f32 %v3767, %v3835
      %v3837 = vpop.f32.mrb[0].mxu0
      %3838 = vdwg.mxu0
      %3839 = vst [vmem:[#allocation5] sm:$0xff] %v3836
    $region33: #{lstm_classifier_forward.1} parent=1 // pred_fallthru
      _
    // Predicated region
    $region34: #{lstm_classifier_forward.1} parent=1 // pred_check
      _
    $region35: #{lstm_classifier_forward.1} parent=1 // pred_check_branch
      %3841 = sbr.rel (0) target = $region37
    $region36: #{lstm_classifier_forward.1} parent=1 // pred_region
      %s3843 = ssub.s32 128, 128
      %3844 = vsyncadd [#allocation6], %s3843
      %s3846 = sshll.u32 [#allocation5], 4
      %s3847 = int_to_ptr.vmem [resolvable:$true] %s3846
      %3849 = dma.vmem_to_hbm [thread:$0]  %s3847, 128, %s6, [#allocation6]
    $region37: #{lstm_classifier_forward.1} parent=1 // pred_fallthru
      _
    // Predicated region
    $region38: #{lstm_classifier_forward.1} parent=1 // pred_check
      _
    $region39: #{lstm_classifier_forward.1} parent=1 // pred_check_branch
      %3851 = sbr.rel (0) target = $region41
    $region40: #{lstm_classifier_forward.1} parent=1 // pred_region
      %3852 = dma.done [#allocation6], 128
    $region41: #{lstm_classifier_forward.1} parent=1 // pred_fallthru
      _
    %3853 = vsyncpa [#allocation6], 1

</llo_original>
